<compile_context>
chip_gen: v7x
topology: tpu7x:2x2x1
jax: 0.10.0
libtpu: 0.0.40
codegen_flags: <defaults>
</compile_context>

<pallas_src>
import functools

import jax
import jax.numpy as jnp
from jax.experimental import pallas as pl
from jax.experimental.pallas import tpu as pltpu


# ---------------------------------------------------------------------------
# in-kernel helpers
# ---------------------------------------------------------------------------
def _zero_halo(pad_ref):
    """Zero only the 1-pixel halo of a (nb, H+2, W+2, C) padded scratch."""
    nb, hp, wp, c = pad_ref.shape
    z_row = jnp.zeros((nb, 1, wp, c), pad_ref.dtype)
    z_col = jnp.zeros((nb, hp, 1, c), pad_ref.dtype)
    pad_ref[:, 0:1, :, :] = z_row
    pad_ref[:, hp - 1:hp, :, :] = z_row
    pad_ref[:, :, 0:1, :] = z_col
    pad_ref[:, :, wp - 1:wp, :] = z_col


def _conv3x3_taps(pad_ref, w_ref, b_ref, nb, h, w, cin, cdtype):
    """3x3 'same' conv as 9 accumulated per-tap MXU matmuls (K = cin each).

    pad_ref : (nb, h+2, w+2, cin) f32 scratch, halo already zeroed.
    w_ref   : (9, cin, cout) weights in compute dtype, tap-major (dy, dx).
    b_ref   : (1, cout) f32 bias.
    Returns (nb*h*w, cout) float32.  No 9x im2col buffer is materialized.
    """
    m = nb * h * w
    acc = None
    for dy in range(3):
        for dx in range(3):
            tap = pad_ref[:, dy:dy + h, dx:dx + w, :].reshape(m, cin)
            wt = w_ref[dy * 3 + dx, :, :]
            p = jnp.dot(tap.astype(cdtype), wt,
                        preferred_element_type=jnp.float32)
            acc = p if acc is None else acc + p
    return acc + b_ref[...]


def _group_norm(x2d, nb, hw, gmask, gamma, beta, group_size, eps):
    """Per-image GroupNorm on (nb*hw, C) rows.

    Stats: per-channel sums via sublane reductions, then one tiny (C, C)
    block-diagonal mask matmul fusing group-reduce + broadcast-to-channels.
    Affine is folded into a single FMA.  Returns (nb, hw, C) float32.
    """
    c = x2d.shape[-1]
    inv = 1.0 / float(hw * group_size)
    x3 = x2d.reshape(nb, hw, c)
    ch_s = jnp.sum(x3, axis=1)                                   # (nb, C)
    ch_ss = jnp.sum(x3 * x3, axis=1)                             # (nb, C)
    sum_c = jnp.dot(ch_s, gmask, preferred_element_type=jnp.float32)
    ssq_c = jnp.dot(ch_ss, gmask, preferred_element_type=jnp.float32)
    mean_c = sum_c * inv
    var_c = jnp.maximum(ssq_c * inv - mean_c * mean_c, 0.0)      # clamp: E[x^2]-m^2
    rstd_c = jax.lax.rsqrt(var_c + eps)
    scale = rstd_c * gamma                                       # (nb, C)
    shift = beta - mean_c * scale                                # (nb, C)
    return x3 * scale[:, None, :] + shift[:, None, :]            # one FMA


# ---------------------------------------------------------------------------
# kernel
# ---------------------------------------------------------------------------
def _down_kernel(x_ref, w1_ref, b1_ref, g1_ref, be1_ref, m1_ref,
                 w2_ref, b2_ref, g2_ref, be2_ref, m2_ref,
                 o_ref, pad1, pad2, *, num_groups, eps, cdtype):
    nb, h2, w, cin2 = x_ref.shape            # input block is (nb, 2H, W, 2*Cin)
    h = h2 // 2
    cin = cin2 // 2
    cmid = w1_ref.shape[2]
    cout = w2_ref.shape[2]
    hw = h * w

    # zero only the 1-px halo; the interior is fully overwritten below.  Done
    # per step so the kernel stays correct under "parallel" batch sharding.
    _zero_halo(pad1)
    _zero_halo(pad2)

    # --- 2x2 max-pool ---
    # W-pairs live in the two lane halves of the folded channel dim;
    # H-pairs are a vreg-array split + pairwise max.
    xa = x_ref[:, :, :, 0:cin]                                   # (nb, 2h, w, cin)
    xb = x_ref[:, :, :, cin:2 * cin]
    xw = jnp.maximum(xa, xb).reshape(nb, h, 2, w, cin)
    pooled = jnp.maximum(xw[:, :, 0, :, :], xw[:, :, 1, :, :])   # (nb, h, w, cin)

    # --- conv1 (3x3, pad 1) + GroupNorm + ReLU ---
    pad1[:, 1:h + 1, 1:w + 1, :] = pooled
    a1 = _conv3x3_taps(pad1, w1_ref, b1_ref, nb, h, w, cin, cdtype)
    a1 = _group_norm(a1, nb, hw, m1_ref[...], g1_ref[...], be1_ref[...],
                     cmid // num_groups, eps)
    a1 = jnp.maximum(a1, 0.0)                                    # (nb, hw, cmid)

    # --- conv2 (3x3, pad 1) + GroupNorm + ReLU ---
    pad2[:, 1:h + 1, 1:w + 1, :] = a1.reshape(nb, h, w, cmid)
    a2 = _conv3x3_taps(pad2, w2_ref, b2_ref, nb, h, w, cmid, cdtype)
    a2 = _group_norm(a2, nb, hw, m2_ref[...], g2_ref[...], be2_ref[...],
                     cout // num_groups, eps)
    a2 = jnp.maximum(a2, 0.0)                                    # (nb, hw, cout)

    o_ref[...] = a2.astype(o_ref.dtype)


# ---------------------------------------------------------------------------
# host-side helpers + wrappers (layout plumbing + pallas_call)
# ---------------------------------------------------------------------------
def _gn_group_mask(c, g):
    """(C, C) block-diagonal mask: M[i, j] = 1 iff channels i, j share a group."""
    gid = jnp.arange(c) // (c // g)
    return (gid[:, None] == gid[None, :]).astype(jnp.float32)


def _const_spec(shape):
    n = len(shape)
    return pl.BlockSpec(shape, lambda i, _n=n: (0,) * _n)


def down_nhwc(x_nhwc, params, gn, *, block_n=8, compute_dtype=jnp.bfloat16,
              vmem_limit_bytes=64 * 1024 * 1024):
    """MaxPool2d(2) -> (Conv3x3 + GN + ReLU) x 2.  NHWC in, NHWC out."""
    N, H2, W2, Cin = x_nhwc.shape
    assert H2 % 2 == 0 and W2 % 2 == 0, "spatial dims must be even for MaxPool2d(2)"
    H, W = H2 // 2, W2 // 2
    Cmid = params['w1_oihw'].shape[0]
    Cout = params['w2_oihw'].shape[0]
    assert Cmid % gn == 0 and Cout % gn == 0, "num_groups must divide channel counts"

    # batch block: keep >= 2 grid steps when possible (pipelining overlap and
    # v7x megacore sharding of the "parallel" axis).
    nb = min(block_n, N)
    if N >= 2:
        nb = min(nb, N // 2)
    nb = max(nb, 1)
    while N % nb:      # TODO(synk): prefer padding N / masked tail for prime N
        nb -= 1

    # free row-major fold of W-pairs into lanes: (N, 2H, 2W, Cin) -> (N, 2H, W, 2Cin)
    x_fold = x_nhwc.reshape(N, H2, W, 2 * Cin)

    # weights tap-major (9, Cin, Cout) in the MXU compute dtype (f32 accumulation
    # in-kernel).  TODO(synk): pad Cmid/Cout to multiples of 128/256 for real widths.
    w1 = params['w1_oihw'].transpose(2, 3, 1, 0).reshape(9, Cin, Cmid).astype(compute_dtype)
    w2 = params['w2_oihw'].transpose(2, 3, 1, 0).reshape(9, Cmid, Cout).astype(compute_dtype)

    row = lambda v: v.reshape(1, -1).astype(jnp.float32)
    b1, g1, be1 = row(params['b1']), row(params['g1']), row(params['be1'])
    b2, g2, be2 = row(params['b2']), row(params['g2']), row(params['be2'])
    m1 = _gn_group_mask(Cmid, gn)
    m2 = _gn_group_mask(Cout, gn)

    grid_spec = pltpu.PrefetchScalarGridSpec(
        num_scalar_prefetch=0,
        grid=(N // nb,),
        in_specs=[
            pl.BlockSpec((nb, H2, W, 2 * Cin), lambda i: (i, 0, 0, 0)),   # input
            _const_spec((9, Cin, Cmid)),                                  # w1
            _const_spec((1, Cmid)), _const_spec((1, Cmid)), _const_spec((1, Cmid)),
            _const_spec((Cmid, Cmid)),                                    # m1
            _const_spec((9, Cmid, Cout)),                                 # w2
            _const_spec((1, Cout)), _const_spec((1, Cout)), _const_spec((1, Cout)),
            _const_spec((Cout, Cout)),                                    # m2
        ],
        # (nb, H*W, Cout) output slab: no in-kernel 4-D reshape of the result;
        # the host reshape to (N, H, W, Cout) is free.
        out_specs=pl.BlockSpec((nb, H * W, Cout), lambda i: (i, 0, 0)),
        scratch_shapes=[
            pltpu.VMEM((nb, H + 2, W + 2, Cin), jnp.float32),
            pltpu.VMEM((nb, H + 2, W + 2, Cmid), jnp.float32),
        ],
    )

    out3 = pl.pallas_call(
        functools.partial(_down_kernel, num_groups=gn, eps=1e-5,
                          cdtype=compute_dtype),
        out_shape=jax.ShapeDtypeStruct((N, H * W, Cout), jnp.float32),
        grid_spec=grid_spec,
        compiler_params=pltpu.CompilerParams(
            dimension_semantics=("parallel",),
            vmem_limit_bytes=vmem_limit_bytes),
    )(x_fold, w1, b1, g1, be1, m1, w2, b2, g2, be2, m2)

    return out3.reshape(N, H, W, Cout)


def down(x_nchw, params, gn, **kw):
    """NCHW wrapper matching the PyTorch module API (layout plumbing only).
    TODO(synk): keep the surrounding model NHWC to drop these two HBM passes."""
    x_nhwc = x_nchw.transpose(0, 2, 3, 1)
    out_nhwc = down_nhwc(x_nhwc, params, gn, **kw)
    return out_nhwc.transpose(0, 3, 1, 2)


# ---------------------------------------------------------------------------
# deterministic parameter init (matches the PyTorch module's shapes)
# ---------------------------------------------------------------------------
def init_params(key, cin, cout, cmid=None):
    if cmid is None:
        cmid = cout          # DoubleConv default: mid_channels = out_channels
    ks = jax.random.split(key, 8)
    n = lambda k, s: jax.random.normal(k, s, jnp.float32)
    return {
        'w1_oihw': 0.2 * n(ks[0], (cmid, cin, 3, 3)),
        'b1': 0.1 * n(ks[1], (cmid,)),
        'g1': 1.0 + 0.1 * n(ks[2], (cmid,)),
        'be1': 0.1 * n(ks[3], (cmid,)),
        'w2_oihw': 0.2 * n(ks[4], (cout, cmid, 3, 3)),
        'b2': 0.1 * n(ks[5], (cout,)),
        'g2': 1.0 + 0.1 * n(ks[6], (cout,)),
        'be2': 0.1 * n(ks[7], (cout,)),
    }


# ---------------------------------------------------------------------------
# pure-JAX reference (mirrors the PyTorch Down forward, NCHW)
# ---------------------------------------------------------------------------
def reference(x, p, gn, eps=1e-5):
    xp = jax.lax.reduce_window(x, -jnp.inf, jax.lax.max,
                               (1, 1, 2, 2), (1, 1, 2, 2), 'VALID')

    def conv(xi, w, b):
        y = jax.lax.conv_general_dilated(
            xi, w, (1, 1), ((1, 1), (1, 1)),
            dimension_numbers=('NCHW', 'OIHW', 'NCHW'))
        return y + b[None, :, None, None]

    def gnorm(xi, gamma, beta):
        N, C, Hh, Ww = xi.shape
        xg = xi.reshape(N, gn, C // gn, Hh, Ww)
        mu = xg.mean(axis=(2, 3, 4), keepdims=True)
        var = ((xg - mu) ** 2).mean(axis=(2, 3, 4), keepdims=True)
        xn = ((xg - mu) / jnp.sqrt(var + eps)).reshape(N, C, Hh, Ww)
        return xn * gamma[None, :, None, None] + beta[None, :, None, None]

    h = jax.nn.relu(gnorm(conv(xp, p['w1_oihw'], p['b1']), p['g1'], p['be1']))
    h = jax.nn.relu(gnorm(conv(h, p['w2_oihw'], p['b2']), p['g2'], p['be2']))
    return h


if __name__ == "__main__":
    key = jax.random.PRNGKey(0)
    kx, kp = jax.random.split(key)

    N, Cin, Cout, GN = 2, 4, 8, 4
    x = jax.random.normal(kx, (N, Cin, 16, 16), jnp.float32)   # NCHW like PyTorch
    params = init_params(kp, Cin, Cout)

    ref = reference(x, params, GN)

    # f32 MXU path: tight numerical check of the kernel structure.
    out_f32 = jax.block_until_ready(down(x, params, GN, compute_dtype=jnp.float32))
    assert out_f32.shape == (N, Cout, 8, 8), out_f32.shape
    err_f32 = float(jnp.max(jnp.abs(out_f32 - ref)))
    assert err_f32 < 5e-3, f"f32 path max abs error vs reference: {err_f32}"

    # bf16 MXU-operand path (v6e/v7x recommendation): f32 accumulation and
    # f32 GroupNorm, looser tolerance from the bf16 operand rounding.
    out_bf16 = jax.block_until_ready(down(x, params, GN, compute_dtype=jnp.bfloat16))
    assert out_bf16.shape == (N, Cout, 8, 8), out_bf16.shape
    err_bf16 = float(jnp.max(jnp.abs(out_bf16 - ref)))
    assert err_bf16 < 1.5e-1, f"bf16 path max abs error vs reference: {err_bf16}"

    print("KERNEL_OK")
</pallas_src>

<mosaic_0001>
module attributes {stable_mosaic.version = 11 : i64} {
  func.func @_down_kernel(%arg0: i32, %arg1: memref<1x16x8x8xf32, #tpu.memory_space<vmem>>, %arg2: memref<9x4x8xf32, #tpu.memory_space<vmem>>, %arg3: memref<1x8xf32, #tpu.memory_space<vmem>>, %arg4: memref<1x8xf32, #tpu.memory_space<vmem>>, %arg5: memref<1x8xf32, #tpu.memory_space<vmem>>, %arg6: memref<8x8xf32, #tpu.memory_space<vmem>>, %arg7: memref<9x8x8xf32, #tpu.memory_space<vmem>>, %arg8: memref<1x8xf32, #tpu.memory_space<vmem>>, %arg9: memref<1x8xf32, #tpu.memory_space<vmem>>, %arg10: memref<1x8xf32, #tpu.memory_space<vmem>>, %arg11: memref<8x8xf32, #tpu.memory_space<vmem>>, %arg12: memref<1x64x8xf32, #tpu.memory_space<vmem>>, %arg13: memref<1x10x10x4xf32, #tpu.memory_space<vmem>>, %arg14: memref<1x10x10x8xf32, #tpu.memory_space<vmem>>) attributes {dimension_semantics = [#tpu.dimension_semantics<parallel>], iteration_bounds = array<i64: 2>, scalar_prefetch = 0 : i64, scratch_operands = 2 : i64, tpu.core_type = #tpu.core_type<tc>, window_params = [{transform_indices = @transform_0, window_bounds = array<i64: 1, 16, 8, 8>}, {pipeline_mode = #tpu.pipeline_mode<synchronous>, transform_indices = @transform_1, window_bounds = array<i64: 9, 4, 8>}, {pipeline_mode = #tpu.pipeline_mode<synchronous>, transform_indices = @transform_2, window_bounds = array<i64: 1, 8>}, {pipeline_mode = #tpu.pipeline_mode<synchronous>, transform_indices = @transform_3, window_bounds = array<i64: 1, 8>}, {pipeline_mode = #tpu.pipeline_mode<synchronous>, transform_indices = @transform_4, window_bounds = array<i64: 1, 8>}, {pipeline_mode = #tpu.pipeline_mode<synchronous>, transform_indices = @transform_5, window_bounds = array<i64: 8, 8>}, {pipeline_mode = #tpu.pipeline_mode<synchronous>, transform_indices = @transform_6, window_bounds = array<i64: 9, 8, 8>}, {pipeline_mode = #tpu.pipeline_mode<synchronous>, transform_indices = @transform_7, window_bounds = array<i64: 1, 8>}, {pipeline_mode = #tpu.pipeline_mode<synchronous>, transform_indices = @transform_8, window_bounds = array<i64: 1, 8>}, {pipeline_mode = #tpu.pipeline_mode<synchronous>, transform_indices = @transform_9, window_bounds = array<i64: 1, 8>}, {pipeline_mode = #tpu.pipeline_mode<synchronous>, transform_indices = @transform_10, window_bounds = array<i64: 8, 8>}, {transform_indices = @transform_11, window_bounds = array<i64: 1, 64, 8>}]} {
    %cst = arith.constant 0.000000e+00 : f32
    %0 = vector.broadcast %cst : f32 to vector<1x1x10x4xf32>
    %cst_0 = arith.constant 0.000000e+00 : f32
    %1 = vector.broadcast %cst_0 : f32 to vector<1x10x1x4xf32>
    %c0 = arith.constant 0 : index
    %c0_1 = arith.constant 0 : index
    %c0_2 = arith.constant 0 : index
    %c0_3 = arith.constant 0 : index
    %2 = vector.load %arg13[%c0, %c0_1, %c0_2, %c0_3] : memref<1x10x10x4xf32, #tpu.memory_space<vmem>>, vector<1x1x10x4xf32>
    tpu.vector_store %arg13[%c0, %c0_1, %c0_2, %c0_3], %0 {strides = array<i32>} : memref<1x10x10x4xf32, #tpu.memory_space<vmem>>, vector<1x1x10x4xf32>,
    %c0_4 = arith.constant 0 : index
    %c9 = arith.constant 9 : index
    %c0_5 = arith.constant 0 : index
    %c0_6 = arith.constant 0 : index
    %3 = vector.load %arg13[%c0_4, %c9, %c0_5, %c0_6] : memref<1x10x10x4xf32, #tpu.memory_space<vmem>>, vector<1x1x10x4xf32>
    tpu.vector_store %arg13[%c0_4, %c9, %c0_5, %c0_6], %0 {strides = array<i32>} : memref<1x10x10x4xf32, #tpu.memory_space<vmem>>, vector<1x1x10x4xf32>,
    %c0_7 = arith.constant 0 : index
    %c0_8 = arith.constant 0 : index
    %c0_9 = arith.constant 0 : index
    %c0_10 = arith.constant 0 : index
    %4 = vector.load %arg13[%c0_7, %c0_8, %c0_9, %c0_10] : memref<1x10x10x4xf32, #tpu.memory_space<vmem>>, vector<1x10x1x4xf32>
    tpu.vector_store %arg13[%c0_7, %c0_8, %c0_9, %c0_10], %1 {strides = array<i32>} : memref<1x10x10x4xf32, #tpu.memory_space<vmem>>, vector<1x10x1x4xf32>,
    %c0_11 = arith.constant 0 : index
    %c0_12 = arith.constant 0 : index
    %c9_13 = arith.constant 9 : index
    %c0_14 = arith.constant 0 : index
    %5 = vector.load %arg13[%c0_11, %c0_12, %c9_13, %c0_14] : memref<1x10x10x4xf32, #tpu.memory_space<vmem>>, vector<1x10x1x4xf32>
    tpu.vector_store %arg13[%c0_11, %c0_12, %c9_13, %c0_14], %1 {strides = array<i32>} : memref<1x10x10x4xf32, #tpu.memory_space<vmem>>, vector<1x10x1x4xf32>,
    %cst_15 = arith.constant 0.000000e+00 : f32
    %6 = vector.broadcast %cst_15 : f32 to vector<1x1x10x8xf32>
    %cst_16 = arith.constant 0.000000e+00 : f32
    %7 = vector.broadcast %cst_16 : f32 to vector<1x10x1x8xf32>
    %c0_17 = arith.constant 0 : index
    %c0_18 = arith.constant 0 : index
    %c0_19 = arith.constant 0 : index
    %c0_20 = arith.constant 0 : index
    %8 = vector.load %arg14[%c0_17, %c0_18, %c0_19, %c0_20] : memref<1x10x10x8xf32, #tpu.memory_space<vmem>>, vector<1x1x10x8xf32>
    tpu.vector_store %arg14[%c0_17, %c0_18, %c0_19, %c0_20], %6 {strides = array<i32>} : memref<1x10x10x8xf32, #tpu.memory_space<vmem>>, vector<1x1x10x8xf32>,
    %c0_21 = arith.constant 0 : index
    %c9_22 = arith.constant 9 : index
    %c0_23 = arith.constant 0 : index
    %c0_24 = arith.constant 0 : index
    %9 = vector.load %arg14[%c0_21, %c9_22, %c0_23, %c0_24] : memref<1x10x10x8xf32, #tpu.memory_space<vmem>>, vector<1x1x10x8xf32>
    tpu.vector_store %arg14[%c0_21, %c9_22, %c0_23, %c0_24], %6 {strides = array<i32>} : memref<1x10x10x8xf32, #tpu.memory_space<vmem>>, vector<1x1x10x8xf32>,
    %c0_25 = arith.constant 0 : index
    %c0_26 = arith.constant 0 : index
    %c0_27 = arith.constant 0 : index
    %c0_28 = arith.constant 0 : index
    %10 = vector.load %arg14[%c0_25, %c0_26, %c0_27, %c0_28] : memref<1x10x10x8xf32, #tpu.memory_space<vmem>>, vector<1x10x1x8xf32>
    tpu.vector_store %arg14[%c0_25, %c0_26, %c0_27, %c0_28], %7 {strides = array<i32>} : memref<1x10x10x8xf32, #tpu.memory_space<vmem>>, vector<1x10x1x8xf32>,
    %c0_29 = arith.constant 0 : index
    %c0_30 = arith.constant 0 : index
    %c9_31 = arith.constant 9 : index
    %c0_32 = arith.constant 0 : index
    %11 = vector.load %arg14[%c0_29, %c0_30, %c9_31, %c0_32] : memref<1x10x10x8xf32, #tpu.memory_space<vmem>>, vector<1x10x1x8xf32>
    tpu.vector_store %arg14[%c0_29, %c0_30, %c9_31, %c0_32], %7 {strides = array<i32>} : memref<1x10x10x8xf32, #tpu.memory_space<vmem>>, vector<1x10x1x8xf32>,
    %c0_33 = arith.constant 0 : index
    %c0_34 = arith.constant 0 : index
    %c0_35 = arith.constant 0 : index
    %c0_36 = arith.constant 0 : index
    %12 = vector.load %arg1[%c0_33, %c0_34, %c0_35, %c0_36] : memref<1x16x8x8xf32, #tpu.memory_space<vmem>>, vector<1x16x8x4xf32>
    %c0_37 = arith.constant 0 : index
    %c0_38 = arith.constant 0 : index
    %c0_39 = arith.constant 0 : index
    %c4 = arith.constant 4 : index
    %13 = vector.load %arg1[%c0_37, %c0_38, %c0_39, %c4] : memref<1x16x8x8xf32, #tpu.memory_space<vmem>>, vector<1x16x8x4xf32>
    %14 = arith.maximumf %12, %13 : vector<1x16x8x4xf32>
    %15 = vector.shape_cast %14 : vector<1x16x8x4xf32> to vector<1x8x2x8x4xf32>
    %16 = vector.extract_strided_slice %15 {offsets = [0, 0, 0, 0, 0], sizes = [1, 8, 1, 8, 4], strides = [1, 1, 1, 1, 1]} : vector<1x8x2x8x4xf32> to vector<1x8x1x8x4xf32>
    %17 = vector.shape_cast %16 : vector<1x8x1x8x4xf32> to vector<1x8x8x4xf32>
    %18 = vector.extract_strided_slice %15 {offsets = [0, 0, 1, 0, 0], sizes = [1, 8, 1, 8, 4], strides = [1, 1, 1, 1, 1]} : vector<1x8x2x8x4xf32> to vector<1x8x1x8x4xf32>
    %19 = vector.shape_cast %18 : vector<1x8x1x8x4xf32> to vector<1x8x8x4xf32>
    %20 = arith.maximumf %17, %19 : vector<1x8x8x4xf32>
    %c0_40 = arith.constant 0 : index
    %c1 = arith.constant 1 : index
    %c1_41 = arith.constant 1 : index
    %c0_42 = arith.constant 0 : index
    %21 = vector.load %arg13[%c0_40, %c1, %c1_41, %c0_42] : memref<1x10x10x4xf32, #tpu.memory_space<vmem>>, vector<1x8x8x4xf32>
    tpu.vector_store %arg13[%c0_40, %c1, %c1_41, %c0_42], %20 {strides = array<i32>} : memref<1x10x10x4xf32, #tpu.memory_space<vmem>>, vector<1x8x8x4xf32>,
    %c0_43 = arith.constant 0 : index
    %c0_44 = arith.constant 0 : index
    %c0_45 = arith.constant 0 : index
    %c0_46 = arith.constant 0 : index
    %22 = vector.load %arg13[%c0_43, %c0_44, %c0_45, %c0_46] : memref<1x10x10x4xf32, #tpu.memory_space<vmem>>, vector<1x8x8x4xf32>
    %23 = vector.shape_cast %22 : vector<1x8x8x4xf32> to vector<64x4xf32>
    %c0_47 = arith.constant 0 : index
    %c0_48 = arith.constant 0 : index
    %c0_49 = arith.constant 0 : index
    %24 = vector.load %arg2[%c0_47, %c0_48, %c0_49] : memref<9x4x8xf32, #tpu.memory_space<vmem>>, vector<1x4x8xf32>
    %25 = vector.shape_cast %24 : vector<1x4x8xf32> to vector<4x8xf32>
    %cst_50 = arith.constant dense<0.000000e+00> : vector<64x8xf32>
    %26 = tpu.matmul %23, %25, %cst_50 {dimension_numbers = #tpu.dot_dimension_numbers<[1], [0], [0], [1], [0, 0, 1, 1], [], []>} : vector<64x4xf32>, vector<4x8xf32>, vector<64x8xf32> -> vector<64x8xf32>
    %c0_51 = arith.constant 0 : index
    %c0_52 = arith.constant 0 : index
    %c1_53 = arith.constant 1 : index
    %c0_54 = arith.constant 0 : index
    %27 = vector.load %arg13[%c0_51, %c0_52, %c1_53, %c0_54] : memref<1x10x10x4xf32, #tpu.memory_space<vmem>>, vector<1x8x8x4xf32>
    %28 = vector.shape_cast %27 : vector<1x8x8x4xf32> to vector<64x4xf32>
    %c1_55 = arith.constant 1 : index
    %c0_56 = arith.constant 0 : index
    %c0_57 = arith.constant 0 : index
    %29 = vector.load %arg2[%c1_55, %c0_56, %c0_57] : memref<9x4x8xf32, #tpu.memory_space<vmem>>, vector<1x4x8xf32>
    %30 = vector.shape_cast %29 : vector<1x4x8xf32> to vector<4x8xf32>
    %cst_58 = arith.constant dense<0.000000e+00> : vector<64x8xf32>
    %31 = tpu.matmul %28, %30, %cst_58 {dimension_numbers = #tpu.dot_dimension_numbers<[1], [0], [0], [1], [0, 0, 1, 1], [], []>} : vector<64x4xf32>, vector<4x8xf32>, vector<64x8xf32> -> vector<64x8xf32>
    %32 = arith.addf %26, %31 : vector<64x8xf32>
    %c0_59 = arith.constant 0 : index
    %c0_60 = arith.constant 0 : index
    %c2 = arith.constant 2 : index
    %c0_61 = arith.constant 0 : index
    %33 = vector.load %arg13[%c0_59, %c0_60, %c2, %c0_61] : memref<1x10x10x4xf32, #tpu.memory_space<vmem>>, vector<1x8x8x4xf32>
    %34 = vector.shape_cast %33 : vector<1x8x8x4xf32> to vector<64x4xf32>
    %c2_62 = arith.constant 2 : index
    %c0_63 = arith.constant 0 : index
    %c0_64 = arith.constant 0 : index
    %35 = vector.load %arg2[%c2_62, %c0_63, %c0_64] : memref<9x4x8xf32, #tpu.memory_space<vmem>>, vector<1x4x8xf32>
    %36 = vector.shape_cast %35 : vector<1x4x8xf32> to vector<4x8xf32>
    %cst_65 = arith.constant dense<0.000000e+00> : vector<64x8xf32>
    %37 = tpu.matmul %34, %36, %cst_65 {dimension_numbers = #tpu.dot_dimension_numbers<[1], [0], [0], [1], [0, 0, 1, 1], [], []>} : vector<64x4xf32>, vector<4x8xf32>, vector<64x8xf32> -> vector<64x8xf32>
    %38 = arith.addf %32, %37 : vector<64x8xf32>
    %c0_66 = arith.constant 0 : index
    %c1_67 = arith.constant 1 : index
    %c0_68 = arith.constant 0 : index
    %c0_69 = arith.constant 0 : index
    %39 = vector.load %arg13[%c0_66, %c1_67, %c0_68, %c0_69] : memref<1x10x10x4xf32, #tpu.memory_space<vmem>>, vector<1x8x8x4xf32>
    %40 = vector.shape_cast %39 : vector<1x8x8x4xf32> to vector<64x4xf32>
    %c3 = arith.constant 3 : index
    %c0_70 = arith.constant 0 : index
    %c0_71 = arith.constant 0 : index
    %41 = vector.load %arg2[%c3, %c0_70, %c0_71] : memref<9x4x8xf32, #tpu.memory_space<vmem>>, vector<1x4x8xf32>
    %42 = vector.shape_cast %41 : vector<1x4x8xf32> to vector<4x8xf32>
    %cst_72 = arith.constant dense<0.000000e+00> : vector<64x8xf32>
    %43 = tpu.matmul %40, %42, %cst_72 {dimension_numbers = #tpu.dot_dimension_numbers<[1], [0], [0], [1], [0, 0, 1, 1], [], []>} : vector<64x4xf32>, vector<4x8xf32>, vector<64x8xf32> -> vector<64x8xf32>
    %44 = arith.addf %38, %43 : vector<64x8xf32>
    %c0_73 = arith.constant 0 : index
    %c1_74 = arith.constant 1 : index
    %c1_75 = arith.constant 1 : index
    %c0_76 = arith.constant 0 : index
    %45 = vector.load %arg13[%c0_73, %c1_74, %c1_75, %c0_76] : memref<1x10x10x4xf32, #tpu.memory_space<vmem>>, vector<1x8x8x4xf32>
    %46 = vector.shape_cast %45 : vector<1x8x8x4xf32> to vector<64x4xf32>
    %c4_77 = arith.constant 4 : index
    %c0_78 = arith.constant 0 : index
    %c0_79 = arith.constant 0 : index
    %47 = vector.load %arg2[%c4_77, %c0_78, %c0_79] : memref<9x4x8xf32, #tpu.memory_space<vmem>>, vector<1x4x8xf32>
    %48 = vector.shape_cast %47 : vector<1x4x8xf32> to vector<4x8xf32>
    %cst_80 = arith.constant dense<0.000000e+00> : vector<64x8xf32>
    %49 = tpu.matmul %46, %48, %cst_80 {dimension_numbers = #tpu.dot_dimension_numbers<[1], [0], [0], [1], [0, 0, 1, 1], [], []>} : vector<64x4xf32>, vector<4x8xf32>, vector<64x8xf32> -> vector<64x8xf32>
    %50 = arith.addf %44, %49 : vector<64x8xf32>
    %c0_81 = arith.constant 0 : index
    %c1_82 = arith.constant 1 : index
    %c2_83 = arith.constant 2 : index
    %c0_84 = arith.constant 0 : index
    %51 = vector.load %arg13[%c0_81, %c1_82, %c2_83, %c0_84] : memref<1x10x10x4xf32, #tpu.memory_space<vmem>>, vector<1x8x8x4xf32>
    %52 = vector.shape_cast %51 : vector<1x8x8x4xf32> to vector<64x4xf32>
    %c5 = arith.constant 5 : index
    %c0_85 = arith.constant 0 : index
    %c0_86 = arith.constant 0 : index
    %53 = vector.load %arg2[%c5, %c0_85, %c0_86] : memref<9x4x8xf32, #tpu.memory_space<vmem>>, vector<1x4x8xf32>
    %54 = vector.shape_cast %53 : vector<1x4x8xf32> to vector<4x8xf32>
    %cst_87 = arith.constant dense<0.000000e+00> : vector<64x8xf32>
    %55 = tpu.matmul %52, %54, %cst_87 {dimension_numbers = #tpu.dot_dimension_numbers<[1], [0], [0], [1], [0, 0, 1, 1], [], []>} : vector<64x4xf32>, vector<4x8xf32>, vector<64x8xf32> -> vector<64x8xf32>
    %56 = arith.addf %50, %55 : vector<64x8xf32>
    %c0_88 = arith.constant 0 : index
    %c2_89 = arith.constant 2 : index
    %c0_90 = arith.constant 0 : index
    %c0_91 = arith.constant 0 : index
    %57 = vector.load %arg13[%c0_88, %c2_89, %c0_90, %c0_91] : memref<1x10x10x4xf32, #tpu.memory_space<vmem>>, vector<1x8x8x4xf32>
    %58 = vector.shape_cast %57 : vector<1x8x8x4xf32> to vector<64x4xf32>
    %c6 = arith.constant 6 : index
    %c0_92 = arith.constant 0 : index
    %c0_93 = arith.constant 0 : index
    %59 = vector.load %arg2[%c6, %c0_92, %c0_93] : memref<9x4x8xf32, #tpu.memory_space<vmem>>, vector<1x4x8xf32>
    %60 = vector.shape_cast %59 : vector<1x4x8xf32> to vector<4x8xf32>
    %cst_94 = arith.constant dense<0.000000e+00> : vector<64x8xf32>
    %61 = tpu.matmul %58, %60, %cst_94 {dimension_numbers = #tpu.dot_dimension_numbers<[1], [0], [0], [1], [0, 0, 1, 1], [], []>} : vector<64x4xf32>, vector<4x8xf32>, vector<64x8xf32> -> vector<64x8xf32>
    %62 = arith.addf %56, %61 : vector<64x8xf32>
    %c0_95 = arith.constant 0 : index
    %c2_96 = arith.constant 2 : index
    %c1_97 = arith.constant 1 : index
    %c0_98 = arith.constant 0 : index
    %63 = vector.load %arg13[%c0_95, %c2_96, %c1_97, %c0_98] : memref<1x10x10x4xf32, #tpu.memory_space<vmem>>, vector<1x8x8x4xf32>
    %64 = vector.shape_cast %63 : vector<1x8x8x4xf32> to vector<64x4xf32>
    %c7 = arith.constant 7 : index
    %c0_99 = arith.constant 0 : index
    %c0_100 = arith.constant 0 : index
    %65 = vector.load %arg2[%c7, %c0_99, %c0_100] : memref<9x4x8xf32, #tpu.memory_space<vmem>>, vector<1x4x8xf32>
    %66 = vector.shape_cast %65 : vector<1x4x8xf32> to vector<4x8xf32>
    %cst_101 = arith.constant dense<0.000000e+00> : vector<64x8xf32>
    %67 = tpu.matmul %64, %66, %cst_101 {dimension_numbers = #tpu.dot_dimension_numbers<[1], [0], [0], [1], [0, 0, 1, 1], [], []>} : vector<64x4xf32>, vector<4x8xf32>, vector<64x8xf32> -> vector<64x8xf32>
    %68 = arith.addf %62, %67 : vector<64x8xf32>
    %c0_102 = arith.constant 0 : index
    %c2_103 = arith.constant 2 : index
    %c2_104 = arith.constant 2 : index
    %c0_105 = arith.constant 0 : index
    %69 = vector.load %arg13[%c0_102, %c2_103, %c2_104, %c0_105] : memref<1x10x10x4xf32, #tpu.memory_space<vmem>>, vector<1x8x8x4xf32>
    %70 = vector.shape_cast %69 : vector<1x8x8x4xf32> to vector<64x4xf32>
    %c8 = arith.constant 8 : index
    %c0_106 = arith.constant 0 : index
    %c0_107 = arith.constant 0 : index
    %71 = vector.load %arg2[%c8, %c0_106, %c0_107] : memref<9x4x8xf32, #tpu.memory_space<vmem>>, vector<1x4x8xf32>
    %72 = vector.shape_cast %71 : vector<1x4x8xf32> to vector<4x8xf32>
    %cst_108 = arith.constant dense<0.000000e+00> : vector<64x8xf32>
    %73 = tpu.matmul %70, %72, %cst_108 {dimension_numbers = #tpu.dot_dimension_numbers<[1], [0], [0], [1], [0, 0, 1, 1], [], []>} : vector<64x4xf32>, vector<4x8xf32>, vector<64x8xf32> -> vector<64x8xf32>
    %74 = arith.addf %68, %73 : vector<64x8xf32>
    %c0_109 = arith.constant 0 : index
    %c0_110 = arith.constant 0 : index
    %75 = vector.load %arg3[%c0_109, %c0_110] : memref<1x8xf32, #tpu.memory_space<vmem>>, vector<1x8xf32>
    %76 = vector.broadcast %75 : vector<1x8xf32> to vector<64x8xf32>
    %77 = arith.addf %74, %76 : vector<64x8xf32>
    %c0_111 = arith.constant 0 : index
    %c0_112 = arith.constant 0 : index
    %78 = vector.load %arg6[%c0_111, %c0_112] : memref<8x8xf32, #tpu.memory_space<vmem>>, vector<8x8xf32>
    %c0_113 = arith.constant 0 : index
    %c0_114 = arith.constant 0 : index
    %79 = vector.load %arg4[%c0_113, %c0_114] : memref<1x8xf32, #tpu.memory_space<vmem>>, vector<1x8xf32>
    %c0_115 = arith.constant 0 : index
    %c0_116 = arith.constant 0 : index
    %80 = vector.load %arg5[%c0_115, %c0_116] : memref<1x8xf32, #tpu.memory_space<vmem>>, vector<1x8xf32>
    %81 = vector.shape_cast %77 : vector<64x8xf32> to vector<1x64x8xf32>
    %cst_117 = arith.constant dense<0.000000e+00> : vector<1x8xf32>
    %82 = vector.multi_reduction <add>, %81, %cst_117 [1] : vector<1x64x8xf32> to vector<1x8xf32>
    %83 = arith.mulf %81, %81 : vector<1x64x8xf32>
    %cst_118 = arith.constant dense<0.000000e+00> : vector<1x8xf32>
    %84 = vector.multi_reduction <add>, %83, %cst_118 [1] : vector<1x64x8xf32> to vector<1x8xf32>
    %cst_119 = arith.constant dense<0.000000e+00> : vector<1x8xf32>
    %85 = tpu.matmul %82, %78, %cst_119 {dimension_numbers = #tpu.dot_dimension_numbers<[1], [0], [0], [1], [0, 0, 1, 1], [], []>} : vector<1x8xf32>, vector<8x8xf32>, vector<1x8xf32> -> vector<1x8xf32>
    %cst_120 = arith.constant dense<0.000000e+00> : vector<1x8xf32>
    %86 = tpu.matmul %84, %78, %cst_120 {dimension_numbers = #tpu.dot_dimension_numbers<[1], [0], [0], [1], [0, 0, 1, 1], [], []>} : vector<1x8xf32>, vector<8x8xf32>, vector<1x8xf32> -> vector<1x8xf32>
    %cst_121 = arith.constant 7.812500e-03 : f32
    %87 = vector.broadcast %cst_121 : f32 to vector<1x8xf32>
    %88 = arith.mulf %85, %87 : vector<1x8xf32>
    %cst_122 = arith.constant 7.812500e-03 : f32
    %89 = vector.broadcast %cst_122 : f32 to vector<1x8xf32>
    %90 = arith.mulf %86, %89 : vector<1x8xf32>
    %91 = arith.mulf %88, %88 : vector<1x8xf32>
    %92 = arith.subf %90, %91 : vector<1x8xf32>
    %cst_123 = arith.constant 0.000000e+00 : f32
    %93 = vector.broadcast %cst_123 : f32 to vector<1x8xf32>
    %94 = arith.maximumf %92, %93 : vector<1x8xf32>
    %cst_124 = arith.constant 9.99999974E-6 : f32
    %95 = vector.broadcast %cst_124 : f32 to vector<1x8xf32>
    %96 = arith.addf %94, %95 : vector<1x8xf32>
    %97 = math.rsqrt %96 : vector<1x8xf32>
    %98 = arith.mulf %97, %79 : vector<1x8xf32>
    %99 = arith.mulf %88, %98 : vector<1x8xf32>
    %100 = arith.subf %80, %99 : vector<1x8xf32>
    %101 = vector.shape_cast %98 : vector<1x8xf32> to vector<1x1x8xf32>
    %102 = vector.broadcast %101 : vector<1x1x8xf32> to vector<1x64x8xf32>
    %103 = arith.mulf %81, %102 : vector<1x64x8xf32>
    %104 = vector.shape_cast %100 : vector<1x8xf32> to vector<1x1x8xf32>
    %105 = vector.broadcast %104 : vector<1x1x8xf32> to vector<1x64x8xf32>
    %106 = arith.addf %103, %105 : vector<1x64x8xf32>
    %cst_125 = arith.constant 0.000000e+00 : f32
    %107 = vector.broadcast %cst_125 : f32 to vector<1x64x8xf32>
    %108 = arith.maximumf %106, %107 : vector<1x64x8xf32>
    %109 = vector.shape_cast %108 : vector<1x64x8xf32> to vector<1x8x8x8xf32>
    %c0_126 = arith.constant 0 : index
    %c1_127 = arith.constant 1 : index
    %c1_128 = arith.constant 1 : index
    %c0_129 = arith.constant 0 : index
    %110 = vector.load %arg14[%c0_126, %c1_127, %c1_128, %c0_129] : memref<1x10x10x8xf32, #tpu.memory_space<vmem>>, vector<1x8x8x8xf32>
    tpu.vector_store %arg14[%c0_126, %c1_127, %c1_128, %c0_129], %109 {strides = array<i32>} : memref<1x10x10x8xf32, #tpu.memory_space<vmem>>, vector<1x8x8x8xf32>,
    %c0_130 = arith.constant 0 : index
    %c0_131 = arith.constant 0 : index
    %c0_132 = arith.constant 0 : index
    %c0_133 = arith.constant 0 : index
    %111 = vector.load %arg14[%c0_130, %c0_131, %c0_132, %c0_133] : memref<1x10x10x8xf32, #tpu.memory_space<vmem>>, vector<1x8x8x8xf32>
    %112 = vector.shape_cast %111 : vector<1x8x8x8xf32> to vector<64x8xf32>
    %c0_134 = arith.constant 0 : index
    %c0_135 = arith.constant 0 : index
    %c0_136 = arith.constant 0 : index
    %113 = vector.load %arg7[%c0_134, %c0_135, %c0_136] : memref<9x8x8xf32, #tpu.memory_space<vmem>>, vector<1x8x8xf32>
    %114 = vector.shape_cast %113 : vector<1x8x8xf32> to vector<8x8xf32>
    %cst_137 = arith.constant dense<0.000000e+00> : vector<64x8xf32>
    %115 = tpu.matmul %112, %114, %cst_137 {dimension_numbers = #tpu.dot_dimension_numbers<[1], [0], [0], [1], [0, 0, 1, 1], [], []>} : vector<64x8xf32>, vector<8x8xf32>, vector<64x8xf32> -> vector<64x8xf32>
    %c0_138 = arith.constant 0 : index
    %c0_139 = arith.constant 0 : index
    %c1_140 = arith.constant 1 : index
    %c0_141 = arith.constant 0 : index
    %116 = vector.load %arg14[%c0_138, %c0_139, %c1_140, %c0_141] : memref<1x10x10x8xf32, #tpu.memory_space<vmem>>, vector<1x8x8x8xf32>
    %117 = vector.shape_cast %116 : vector<1x8x8x8xf32> to vector<64x8xf32>
    %c1_142 = arith.constant 1 : index
    %c0_143 = arith.constant 0 : index
    %c0_144 = arith.constant 0 : index
    %118 = vector.load %arg7[%c1_142, %c0_143, %c0_144] : memref<9x8x8xf32, #tpu.memory_space<vmem>>, vector<1x8x8xf32>
    %119 = vector.shape_cast %118 : vector<1x8x8xf32> to vector<8x8xf32>
    %cst_145 = arith.constant dense<0.000000e+00> : vector<64x8xf32>
    %120 = tpu.matmul %117, %119, %cst_145 {dimension_numbers = #tpu.dot_dimension_numbers<[1], [0], [0], [1], [0, 0, 1, 1], [], []>} : vector<64x8xf32>, vector<8x8xf32>, vector<64x8xf32> -> vector<64x8xf32>
    %121 = arith.addf %115, %120 : vector<64x8xf32>
    %c0_146 = arith.constant 0 : index
    %c0_147 = arith.constant 0 : index
    %c2_148 = arith.constant 2 : index
    %c0_149 = arith.constant 0 : index
    %122 = vector.load %arg14[%c0_146, %c0_147, %c2_148, %c0_149] : memref<1x10x10x8xf32, #tpu.memory_space<vmem>>, vector<1x8x8x8xf32>
    %123 = vector.shape_cast %122 : vector<1x8x8x8xf32> to vector<64x8xf32>
    %c2_150 = arith.constant 2 : index
    %c0_151 = arith.constant 0 : index
    %c0_152 = arith.constant 0 : index
    %124 = vector.load %arg7[%c2_150, %c0_151, %c0_152] : memref<9x8x8xf32, #tpu.memory_space<vmem>>, vector<1x8x8xf32>
    %125 = vector.shape_cast %124 : vector<1x8x8xf32> to vector<8x8xf32>
    %cst_153 = arith.constant dense<0.000000e+00> : vector<64x8xf32>
    %126 = tpu.matmul %123, %125, %cst_153 {dimension_numbers = #tpu.dot_dimension_numbers<[1], [0], [0], [1], [0, 0, 1, 1], [], []>} : vector<64x8xf32>, vector<8x8xf32>, vector<64x8xf32> -> vector<64x8xf32>
    %127 = arith.addf %121, %126 : vector<64x8xf32>
    %c0_154 = arith.constant 0 : index
    %c1_155 = arith.constant 1 : index
    %c0_156 = arith.constant 0 : index
    %c0_157 = arith.constant 0 : index
    %128 = vector.load %arg14[%c0_154, %c1_155, %c0_156, %c0_157] : memref<1x10x10x8xf32, #tpu.memory_space<vmem>>, vector<1x8x8x8xf32>
    %129 = vector.shape_cast %128 : vector<1x8x8x8xf32> to vector<64x8xf32>
    %c3_158 = arith.constant 3 : index
    %c0_159 = arith.constant 0 : index
    %c0_160 = arith.constant 0 : index
    %130 = vector.load %arg7[%c3_158, %c0_159, %c0_160] : memref<9x8x8xf32, #tpu.memory_space<vmem>>, vector<1x8x8xf32>
    %131 = vector.shape_cast %130 : vector<1x8x8xf32> to vector<8x8xf32>
    %cst_161 = arith.constant dense<0.000000e+00> : vector<64x8xf32>
    %132 = tpu.matmul %129, %131, %cst_161 {dimension_numbers = #tpu.dot_dimension_numbers<[1], [0], [0], [1], [0, 0, 1, 1], [], []>} : vector<64x8xf32>, vector<8x8xf32>, vector<64x8xf32> -> vector<64x8xf32>
    %133 = arith.addf %127, %132 : vector<64x8xf32>
    %c0_162 = arith.constant 0 : index
    %c1_163 = arith.constant 1 : index
    %c1_164 = arith.constant 1 : index
    %c0_165 = arith.constant 0 : index
    %134 = vector.load %arg14[%c0_162, %c1_163, %c1_164, %c0_165] : memref<1x10x10x8xf32, #tpu.memory_space<vmem>>, vector<1x8x8x8xf32>
    %135 = vector.shape_cast %134 : vector<1x8x8x8xf32> to vector<64x8xf32>
    %c4_166 = arith.constant 4 : index
    %c0_167 = arith.constant 0 : index
    %c0_168 = arith.constant 0 : index
    %136 = vector.load %arg7[%c4_166, %c0_167, %c0_168] : memref<9x8x8xf32, #tpu.memory_space<vmem>>, vector<1x8x8xf32>
    %137 = vector.shape_cast %136 : vector<1x8x8xf32> to vector<8x8xf32>
    %cst_169 = arith.constant dense<0.000000e+00> : vector<64x8xf32>
    %138 = tpu.matmul %135, %137, %cst_169 {dimension_numbers = #tpu.dot_dimension_numbers<[1], [0], [0], [1], [0, 0, 1, 1], [], []>} : vector<64x8xf32>, vector<8x8xf32>, vector<64x8xf32> -> vector<64x8xf32>
    %139 = arith.addf %133, %138 : vector<64x8xf32>
    %c0_170 = arith.constant 0 : index
    %c1_171 = arith.constant 1 : index
    %c2_172 = arith.constant 2 : index
    %c0_173 = arith.constant 0 : index
    %140 = vector.load %arg14[%c0_170, %c1_171, %c2_172, %c0_173] : memref<1x10x10x8xf32, #tpu.memory_space<vmem>>, vector<1x8x8x8xf32>
    %141 = vector.shape_cast %140 : vector<1x8x8x8xf32> to vector<64x8xf32>
    %c5_174 = arith.constant 5 : index
    %c0_175 = arith.constant 0 : index
    %c0_176 = arith.constant 0 : index
    %142 = vector.load %arg7[%c5_174, %c0_175, %c0_176] : memref<9x8x8xf32, #tpu.memory_space<vmem>>, vector<1x8x8xf32>
    %143 = vector.shape_cast %142 : vector<1x8x8xf32> to vector<8x8xf32>
    %cst_177 = arith.constant dense<0.000000e+00> : vector<64x8xf32>
    %144 = tpu.matmul %141, %143, %cst_177 {dimension_numbers = #tpu.dot_dimension_numbers<[1], [0], [0], [1], [0, 0, 1, 1], [], []>} : vector<64x8xf32>, vector<8x8xf32>, vector<64x8xf32> -> vector<64x8xf32>
    %145 = arith.addf %139, %144 : vector<64x8xf32>
    %c0_178 = arith.constant 0 : index
    %c2_179 = arith.constant 2 : index
    %c0_180 = arith.constant 0 : index
    %c0_181 = arith.constant 0 : index
    %146 = vector.load %arg14[%c0_178, %c2_179, %c0_180, %c0_181] : memref<1x10x10x8xf32, #tpu.memory_space<vmem>>, vector<1x8x8x8xf32>
    %147 = vector.shape_cast %146 : vector<1x8x8x8xf32> to vector<64x8xf32>
    %c6_182 = arith.constant 6 : index
    %c0_183 = arith.constant 0 : index
    %c0_184 = arith.constant 0 : index
    %148 = vector.load %arg7[%c6_182, %c0_183, %c0_184] : memref<9x8x8xf32, #tpu.memory_space<vmem>>, vector<1x8x8xf32>
    %149 = vector.shape_cast %148 : vector<1x8x8xf32> to vector<8x8xf32>
    %cst_185 = arith.constant dense<0.000000e+00> : vector<64x8xf32>
    %150 = tpu.matmul %147, %149, %cst_185 {dimension_numbers = #tpu.dot_dimension_numbers<[1], [0], [0], [1], [0, 0, 1, 1], [], []>} : vector<64x8xf32>, vector<8x8xf32>, vector<64x8xf32> -> vector<64x8xf32>
    %151 = arith.addf %145, %150 : vector<64x8xf32>
    %c0_186 = arith.constant 0 : index
    %c2_187 = arith.constant 2 : index
    %c1_188 = arith.constant 1 : index
    %c0_189 = arith.constant 0 : index
    %152 = vector.load %arg14[%c0_186, %c2_187, %c1_188, %c0_189] : memref<1x10x10x8xf32, #tpu.memory_space<vmem>>, vector<1x8x8x8xf32>
    %153 = vector.shape_cast %152 : vector<1x8x8x8xf32> to vector<64x8xf32>
    %c7_190 = arith.constant 7 : index
    %c0_191 = arith.constant 0 : index
    %c0_192 = arith.constant 0 : index
    %154 = vector.load %arg7[%c7_190, %c0_191, %c0_192] : memref<9x8x8xf32, #tpu.memory_space<vmem>>, vector<1x8x8xf32>
    %155 = vector.shape_cast %154 : vector<1x8x8xf32> to vector<8x8xf32>
    %cst_193 = arith.constant dense<0.000000e+00> : vector<64x8xf32>
    %156 = tpu.matmul %153, %155, %cst_193 {dimension_numbers = #tpu.dot_dimension_numbers<[1], [0], [0], [1], [0, 0, 1, 1], [], []>} : vector<64x8xf32>, vector<8x8xf32>, vector<64x8xf32> -> vector<64x8xf32>
    %157 = arith.addf %151, %156 : vector<64x8xf32>
    %c0_194 = arith.constant 0 : index
    %c2_195 = arith.constant 2 : index
    %c2_196 = arith.constant 2 : index
    %c0_197 = arith.constant 0 : index
    %158 = vector.load %arg14[%c0_194, %c2_195, %c2_196, %c0_197] : memref<1x10x10x8xf32, #tpu.memory_space<vmem>>, vector<1x8x8x8xf32>
    %159 = vector.shape_cast %158 : vector<1x8x8x8xf32> to vector<64x8xf32>
    %c8_198 = arith.constant 8 : index
    %c0_199 = arith.constant 0 : index
    %c0_200 = arith.constant 0 : index
    %160 = vector.load %arg7[%c8_198, %c0_199, %c0_200] : memref<9x8x8xf32, #tpu.memory_space<vmem>>, vector<1x8x8xf32>
    %161 = vector.shape_cast %160 : vector<1x8x8xf32> to vector<8x8xf32>
    %cst_201 = arith.constant dense<0.000000e+00> : vector<64x8xf32>
    %162 = tpu.matmul %159, %161, %cst_201 {dimension_numbers = #tpu.dot_dimension_numbers<[1], [0], [0], [1], [0, 0, 1, 1], [], []>} : vector<64x8xf32>, vector<8x8xf32>, vector<64x8xf32> -> vector<64x8xf32>
    %163 = arith.addf %157, %162 : vector<64x8xf32>
    %c0_202 = arith.constant 0 : index
    %c0_203 = arith.constant 0 : index
    %164 = vector.load %arg8[%c0_202, %c0_203] : memref<1x8xf32, #tpu.memory_space<vmem>>, vector<1x8xf32>
    %165 = vector.broadcast %164 : vector<1x8xf32> to vector<64x8xf32>
    %166 = arith.addf %163, %165 : vector<64x8xf32>
    %c0_204 = arith.constant 0 : index
    %c0_205 = arith.constant 0 : index
    %167 = vector.load %arg11[%c0_204, %c0_205] : memref<8x8xf32, #tpu.memory_space<vmem>>, vector<8x8xf32>
    %c0_206 = arith.constant 0 : index
    %c0_207 = arith.constant 0 : index
    %168 = vector.load %arg9[%c0_206, %c0_207] : memref<1x8xf32, #tpu.memory_space<vmem>>, vector<1x8xf32>
    %c0_208 = arith.constant 0 : index
    %c0_209 = arith.constant 0 : index
    %169 = vector.load %arg10[%c0_208, %c0_209] : memref<1x8xf32, #tpu.memory_space<vmem>>, vector<1x8xf32>
    %170 = vector.shape_cast %166 : vector<64x8xf32> to vector<1x64x8xf32>
    %cst_210 = arith.constant dense<0.000000e+00> : vector<1x8xf32>
    %171 = vector.multi_reduction <add>, %170, %cst_210 [1] : vector<1x64x8xf32> to vector<1x8xf32>
    %172 = arith.mulf %170, %170 : vector<1x64x8xf32>
    %cst_211 = arith.constant dense<0.000000e+00> : vector<1x8xf32>
    %173 = vector.multi_reduction <add>, %172, %cst_211 [1] : vector<1x64x8xf32> to vector<1x8xf32>
    %cst_212 = arith.constant dense<0.000000e+00> : vector<1x8xf32>
    %174 = tpu.matmul %171, %167, %cst_212 {dimension_numbers = #tpu.dot_dimension_numbers<[1], [0], [0], [1], [0, 0, 1, 1], [], []>} : vector<1x8xf32>, vector<8x8xf32>, vector<1x8xf32> -> vector<1x8xf32>
    %cst_213 = arith.constant dense<0.000000e+00> : vector<1x8xf32>
    %175 = tpu.matmul %173, %167, %cst_213 {dimension_numbers = #tpu.dot_dimension_numbers<[1], [0], [0], [1], [0, 0, 1, 1], [], []>} : vector<1x8xf32>, vector<8x8xf32>, vector<1x8xf32> -> vector<1x8xf32>
    %cst_214 = arith.constant 7.812500e-03 : f32
    %176 = vector.broadcast %cst_214 : f32 to vector<1x8xf32>
    %177 = arith.mulf %174, %176 : vector<1x8xf32>
    %cst_215 = arith.constant 7.812500e-03 : f32
    %178 = vector.broadcast %cst_215 : f32 to vector<1x8xf32>
    %179 = arith.mulf %175, %178 : vector<1x8xf32>
    %180 = arith.mulf %177, %177 : vector<1x8xf32>
    %181 = arith.subf %179, %180 : vector<1x8xf32>
    %cst_216 = arith.constant 0.000000e+00 : f32
    %182 = vector.broadcast %cst_216 : f32 to vector<1x8xf32>
    %183 = arith.maximumf %181, %182 : vector<1x8xf32>
    %cst_217 = arith.constant 9.99999974E-6 : f32
    %184 = vector.broadcast %cst_217 : f32 to vector<1x8xf32>
    %185 = arith.addf %183, %184 : vector<1x8xf32>
    %186 = math.rsqrt %185 : vector<1x8xf32>
    %187 = arith.mulf %186, %168 : vector<1x8xf32>
    %188 = arith.mulf %177, %187 : vector<1x8xf32>
    %189 = arith.subf %169, %188 : vector<1x8xf32>
    %190 = vector.shape_cast %187 : vector<1x8xf32> to vector<1x1x8xf32>
    %191 = vector.broadcast %190 : vector<1x1x8xf32> to vector<1x64x8xf32>
    %192 = arith.mulf %170, %191 : vector<1x64x8xf32>
    %193 = vector.shape_cast %189 : vector<1x8xf32> to vector<1x1x8xf32>
    %194 = vector.broadcast %193 : vector<1x1x8xf32> to vector<1x64x8xf32>
    %195 = arith.addf %192, %194 : vector<1x64x8xf32>
    %cst_218 = arith.constant 0.000000e+00 : f32
    %196 = vector.broadcast %cst_218 : f32 to vector<1x64x8xf32>
    %197 = arith.maximumf %195, %196 : vector<1x64x8xf32>
    %c0_219 = arith.constant 0 : index
    %c0_220 = arith.constant 0 : index
    %c0_221 = arith.constant 0 : index
    %198 = vector.load %arg12[%c0_219, %c0_220, %c0_221] : memref<1x64x8xf32, #tpu.memory_space<vmem>>, vector<1x64x8xf32>
    tpu.vector_store %arg12[%c0_219, %c0_220, %c0_221], %197 {strides = array<i32>} : memref<1x64x8xf32, #tpu.memory_space<vmem>>, vector<1x64x8xf32>,
    return
  }
  func.func @transform_0(%arg0: i32) -> (i32, i32, i32, i32) {
    %c0_i32 = arith.constant 0 : i32
    %c0_i32_0 = arith.constant 0 : i32
    %c0_i32_1 = arith.constant 0 : i32
    %c0_i32_2 = arith.constant 0 : i32
    return %arg0, %c0_i32, %c0_i32_0, %c0_i32_1 : i32, i32, i32, i32
  }
  func.func @transform_1(%arg0: i32) -> (i32, i32, i32) {
    %c0_i32 = arith.constant 0 : i32
    %c0_i32_0 = arith.constant 0 : i32
    %c0_i32_1 = arith.constant 0 : i32
    %c0_i32_2 = arith.constant 0 : i32
    return %c0_i32, %c0_i32_0, %c0_i32_1 : i32, i32, i32
  }
  func.func @transform_2(%arg0: i32) -> (i32, i32) {
    %c0_i32 = arith.constant 0 : i32
    %c0_i32_0 = arith.constant 0 : i32
    %c0_i32_1 = arith.constant 0 : i32
    return %c0_i32, %c0_i32_0 : i32, i32
  }
  func.func @transform_3(%arg0: i32) -> (i32, i32) {
    %c0_i32 = arith.constant 0 : i32
    %c0_i32_0 = arith.constant 0 : i32
    %c0_i32_1 = arith.constant 0 : i32
    return %c0_i32, %c0_i32_0 : i32, i32
  }
  func.func @transform_4(%arg0: i32) -> (i32, i32) {
    %c0_i32 = arith.constant 0 : i32
    %c0_i32_0 = arith.constant 0 : i32
    %c0_i32_1 = arith.constant 0 : i32
    return %c0_i32, %c0_i32_0 : i32, i32
  }
  func.func @transform_5(%arg0: i32) -> (i32, i32) {
    %c0_i32 = arith.constant 0 : i32
    %c0_i32_0 = arith.constant 0 : i32
    %c0_i32_1 = arith.constant 0 : i32
    return %c0_i32, %c0_i32_0 : i32, i32
  }
  func.func @transform_6(%arg0: i32) -> (i32, i32, i32) {
    %c0_i32 = arith.constant 0 : i32
    %c0_i32_0 = arith.constant 0 : i32
    %c0_i32_1 = arith.constant 0 : i32
    %c0_i32_2 = arith.constant 0 : i32
    return %c0_i32, %c0_i32_0, %c0_i32_1 : i32, i32, i32
  }
  func.func @transform_7(%arg0: i32) -> (i32, i32) {
    %c0_i32 = arith.constant 0 : i32
    %c0_i32_0 = arith.constant 0 : i32
    %c0_i32_1 = arith.constant 0 : i32
    return %c0_i32, %c0_i32_0 : i32, i32
  }
  func.func @transform_8(%arg0: i32) -> (i32, i32) {
    %c0_i32 = arith.constant 0 : i32
    %c0_i32_0 = arith.constant 0 : i32
    %c0_i32_1 = arith.constant 0 : i32
    return %c0_i32, %c0_i32_0 : i32, i32
  }
  func.func @transform_9(%arg0: i32) -> (i32, i32) {
    %c0_i32 = arith.constant 0 : i32
    %c0_i32_0 = arith.constant 0 : i32
    %c0_i32_1 = arith.constant 0 : i32
    return %c0_i32, %c0_i32_0 : i32, i32
  }
  func.func @transform_10(%arg0: i32) -> (i32, i32) {
    %c0_i32 = arith.constant 0 : i32
    %c0_i32_0 = arith.constant 0 : i32
    %c0_i32_1 = arith.constant 0 : i32
    return %c0_i32, %c0_i32_0 : i32, i32
  }
  func.func @transform_11(%arg0: i32) -> (i32, i32, i32) {
    %c0_i32 = arith.constant 0 : i32
    %c0_i32_0 = arith.constant 0 : i32
    %c0_i32_1 = arith.constant 0 : i32
    return %arg0, %c0_i32, %c0_i32_0 : i32, i32, i32
  }
}

</mosaic_0001>

<llo_original>
// kernel: tpu_custom_call.1
$region0: #{tpu_custom_call.1}
  #allocation0 [shape = 'u32[]', space=smem, size = 0x4, offset = 0x4, fixed_abs, tag = 'smem constant byte address 0x4 - core index']
  #allocation1 [shape = 'u32[144,128]{1,0:T(1,128)}', space=vmem, size = 0x12000, scoped, tag = 'internal scratch']
  #allocation2 [shape = 'f32[1,10,10,4]{3,2,1,0:T(8,128)}', space=vmem, size = 0x14000, scoped, tag = 'scratch operand']
  #allocation3 [shape = 'f32[1,10,10,8]{3,2,1,0:T(8,128)}', space=vmem, size = 0x14000, scoped, tag = 'scratch operand']
  %s0 = inlined_call_operand.hbm [shape: f32[2,16,8,8], index: 0, kind: input, shape index: {}]
  %s1 = inlined_call_operand.hbm [shape: f32[9,4,8], index: 1, kind: input, shape index: {}]
  %s2 = inlined_call_operand.hbm [shape: f32[1,8], index: 2, kind: input, shape index: {}]
  %s3 = inlined_call_operand.hbm [shape: f32[1,8], index: 3, kind: input, shape index: {}]
  %s4 = inlined_call_operand.hbm [shape: f32[1,8], index: 4, kind: input, shape index: {}]
  %s5 = inlined_call_operand.hbm [shape: f32[8,8], index: 5, kind: input, shape index: {}]
  %s6 = inlined_call_operand.hbm [shape: f32[9,8,8], index: 6, kind: input, shape index: {}]
  %s7 = inlined_call_operand.hbm [shape: f32[1,8], index: 7, kind: input, shape index: {}]
  %s8 = inlined_call_operand.hbm [shape: f32[1,8], index: 8, kind: input, shape index: {}]
  %s9 = inlined_call_operand.hbm [shape: f32[1,8], index: 9, kind: input, shape index: {}]
  %s10 = inlined_call_operand.hbm [shape: f32[8,8], index: 10, kind: input, shape index: {}]
  %s11 = inlined_call_operand.hbm [shape: f32[2,64,8], index: 11, kind: output, shape index: {}]
  %s12 = sld [smem:[#allocation0]]
  $region121: #{tpu_custom_call.1} parent=0
    _
  %s14 = ssub.s32 1, %s12
  %s15 = scalar_select 0, %s14, %s12
  $region1: #{tpu_custom_call.1} parent=0
    #allocation4 [shape = 'u8[131072]{0}', space=vmem, size = 0x20000, scoped, tag = 'input window, operand 0']
    #allocation5 [shape = 's32[2]{0}', space=sflag, size = 0x8, scoped, tag = 'scoped memory for tpu_custom_call.1']
    #allocation6 [shape = 's32[2]{0}', space=sflag, size = 0x8, scoped, tag = 'scoped memory for tpu_custom_call.1']
    #allocation7 [shape = 'u8[18432]{0}', space=vmem, size = 0x4800, scoped, tag = 'input window, operand 1, single buffered']
    #allocation8 [shape = 's32[1]{0}', space=sflag, size = 0x4, scoped, tag = 'scoped memory for tpu_custom_call.1']
    #allocation9 [shape = 'u8[512]{0}', space=vmem, size = 0x400, scoped, tag = 'input window, operand 2, single buffered']
    #allocation10 [shape = 'u8[512]{0}', space=vmem, size = 0x400, scoped, tag = 'input window, operand 3, single buffered']
    #allocation11 [shape = 's32[1]{0}', space=sflag, size = 0x4, scoped, tag = 'scoped memory for tpu_custom_call.1']
    #allocation12 [shape = 'u8[512]{0}', space=vmem, size = 0x400, scoped, tag = 'input window, operand 4, single buffered']
    #allocation13 [shape = 'u8[4096]{0}', space=vmem, size = 0x1000, scoped, tag = 'input window, operand 5, single buffered']
    #allocation14 [shape = 's32[1]{0}', space=sflag, size = 0x4, scoped, tag = 'scoped memory for tpu_custom_call.1']
    #allocation15 [shape = 'u8[36864]{0}', space=vmem, size = 0x9000, scoped, tag = 'input window, operand 6, single buffered']
    #allocation16 [shape = 'u8[512]{0}', space=vmem, size = 0x400, scoped, tag = 'input window, operand 7, single buffered']
    #allocation17 [shape = 's32[1]{0}', space=sflag, size = 0x4, scoped, tag = 'scoped memory for tpu_custom_call.1']
    #allocation18 [shape = 'u8[512]{0}', space=vmem, size = 0x400, scoped, tag = 'input window, operand 8, single buffered']
    #allocation19 [shape = 'u8[512]{0}', space=vmem, size = 0x400, scoped, tag = 'input window, operand 9, single buffered']
    #allocation20 [shape = 's32[1]{0}', space=sflag, size = 0x4, scoped, tag = 'scoped memory for tpu_custom_call.1']
    #allocation21 [shape = 'u8[4096]{0}', space=vmem, size = 0x1000, scoped, tag = 'input window, operand 10, single buffered']
    #allocation22 [shape = 'u8[65536]{0}', space=vmem, size = 0x10000, scoped, tag = 'output window, operand 0']
    %16 = vsyncpa [#allocation5], 0
    %s17 = scalar_lea.sflag [#allocation5], 1
    %18 = vsyncpa %s17, 0
    %19 = vsyncpa [#allocation8], 0
    %20 = vsyncpa [#allocation11], 0
    %21 = vsyncpa [#allocation14], 0
    %22 = vsyncpa [#allocation17], 0
    %23 = vsyncpa [#allocation20], 0
    %24 = vsyncpa [#allocation6], 0
    %s25 = scalar_lea.sflag [#allocation6], 1
    %26 = vsyncpa %s25, 0
    loop: start=0, step=1, limit=4
    $region2: #{tpu_custom_call.1} parent=1 // loop_pre_header
      _
    $region3: #{tpu_custom_call.1} parent=1 // loop_header
      %s28 = sphi 0, %s32
      %p29 = scmp.ge.s32.totalorder %s28, 4
      %s38 = sphi 0, %s40
      %s41 = sphi 0, %s38
      %s42 = sphi 0, %s41
      %s58 = sphi 0, %s42
      %s62 = sphi 0, %s62
      %s64 = sphi 0, %s62
      %s65 = sphi 0, %s64
      %s79 = sphi 0, %s65
      %s83 = sphi 0, %s83
      %s85 = sphi 0, %s83
      %s86 = sphi 0, %s85
      %s100 = sphi 0, %s86
      %s104 = sphi 0, %s104
      %s106 = sphi 0, %s104
      %s107 = sphi 0, %s106
      %s121 = sphi 0, %s107
      %s125 = sphi 0, %s125
      %s127 = sphi 0, %s125
      %s128 = sphi 0, %s127
      %s142 = sphi 0, %s128
      %s146 = sphi 0, %s146
      %s148 = sphi 0, %s146
      %s149 = sphi 0, %s148
      %s163 = sphi 0, %s149
      %s167 = sphi 0, %s167
      %s169 = sphi 0, %s167
      %s170 = sphi 0, %s169
      %s184 = sphi 0, %s170
      %s188 = sphi 0, %s188
      %s190 = sphi 0, %s188
      %s191 = sphi 0, %s190
      %s205 = sphi 0, %s191
      %s209 = sphi 0, %s209
      %s211 = sphi 0, %s209
      %s212 = sphi 0, %s211
      %s226 = sphi 0, %s212
      %s230 = sphi 0, %s230
      %s232 = sphi 0, %s230
      %s233 = sphi 0, %s232
      %s247 = sphi 0, %s233
      %s251 = sphi 0, %s251
      %s253 = sphi 0, %s251
      %s254 = sphi 0, %s253
      %s268 = sphi 0, %s254
      %s274 = sphi 0, %s276
      %s277 = sphi 0, %s274
      %s278 = sphi 0, %s277
      %s294 = sphi 0, %s278
    $region4: #{tpu_custom_call.1} parent=1 // loop_header_branch
      %31 = sbr.rel (%p29) target = $region8
    $region5: #{tpu_custom_call.1} parent=1 // loop_body
      %s33 = ssub.s32 %s28, 1
      %s34 = ssub.s32 %s28, 2
      %s35 = sadd.s32 %s28, 1
      %s36 = ssub.s32 %s28, %s35
      %p37 = scmp.eq.s32.totalorder %s36, 0
      %s39 = sadd.s32 %s38, 1
      %s40 = scalar_select %p37, %s38, %s39
      %p43 = pneg %p37
      %p44 = scmp.eq.s32.totalorder %s28, 1
      %p45 = por %p43, %p44
      %p46 = scmp.ne.s32.totalorder %s38, %s41
      %p47 = scmp.eq.s32.totalorder %s28, 0
      %p48 = por %p46, %p47
      %p49 = scmp.ne.s32.totalorder %s38, %s41
      %p50 = scmp.eq.s32.totalorder %s33, 1
      %p51 = por %p49, %p50
      %p52 = scmp.ne.s32.totalorder %s41, %s42
      %p53 = scmp.eq.s32.totalorder %s33, 0
      %p54 = por %p52, %p53
      %p55 = scmp.ne.s32.totalorder %s41, %s42
      %p56 = scmp.eq.s32.totalorder %s34, 1
      %p57 = por %p55, %p56
      %p59 = scmp.ne.s32.totalorder %s42, %s58
      %p60 = scmp.eq.s32.totalorder %s34, 0
      %p61 = por %p59, %p60
      %s63 = sadd.s32 %s62, 1
      %p66 = scmp.eq.s32.totalorder %s28, 1
      %p67 = scmp.ne.s32.totalorder %s62, %s64
      %p68 = scmp.eq.s32.totalorder %s28, 0
      %p69 = por %p67, %p68
      %p70 = scmp.ne.s32.totalorder %s62, %s64
      %p71 = scmp.eq.s32.totalorder %s33, 1
      %p72 = por %p70, %p71
      %p73 = scmp.ne.s32.totalorder %s64, %s65
      %p74 = scmp.eq.s32.totalorder %s33, 0
      %p75 = por %p73, %p74
      %p76 = scmp.ne.s32.totalorder %s64, %s65
      %p77 = scmp.eq.s32.totalorder %s34, 1
      %p78 = por %p76, %p77
      %p80 = scmp.ne.s32.totalorder %s65, %s79
      %p81 = scmp.eq.s32.totalorder %s34, 0
      %p82 = por %p80, %p81
      %s84 = sadd.s32 %s83, 1
      %p87 = scmp.eq.s32.totalorder %s28, 1
      %p88 = scmp.ne.s32.totalorder %s83, %s85
      %p89 = scmp.eq.s32.totalorder %s28, 0
      %p90 = por %p88, %p89
      %p91 = scmp.ne.s32.totalorder %s83, %s85
      %p92 = scmp.eq.s32.totalorder %s33, 1
      %p93 = por %p91, %p92
      %p94 = scmp.ne.s32.totalorder %s85, %s86
      %p95 = scmp.eq.s32.totalorder %s33, 0
      %p96 = por %p94, %p95
      %p97 = scmp.ne.s32.totalorder %s85, %s86
      %p98 = scmp.eq.s32.totalorder %s34, 1
      %p99 = por %p97, %p98
      %p101 = scmp.ne.s32.totalorder %s86, %s100
      %p102 = scmp.eq.s32.totalorder %s34, 0
      %p103 = por %p101, %p102
      %s105 = sadd.s32 %s104, 1
      %p108 = scmp.eq.s32.totalorder %s28, 1
      %p109 = scmp.ne.s32.totalorder %s104, %s106
      %p110 = scmp.eq.s32.totalorder %s28, 0
      %p111 = por %p109, %p110
      %p112 = scmp.ne.s32.totalorder %s104, %s106
      %p113 = scmp.eq.s32.totalorder %s33, 1
      %p114 = por %p112, %p113
      %p115 = scmp.ne.s32.totalorder %s106, %s107
      %p116 = scmp.eq.s32.totalorder %s33, 0
      %p117 = por %p115, %p116
      %p118 = scmp.ne.s32.totalorder %s106, %s107
      %p119 = scmp.eq.s32.totalorder %s34, 1
      %p120 = por %p118, %p119
      %p122 = scmp.ne.s32.totalorder %s107, %s121
      %p123 = scmp.eq.s32.totalorder %s34, 0
      %p124 = por %p122, %p123
      %s126 = sadd.s32 %s125, 1
      %p129 = scmp.eq.s32.totalorder %s28, 1
      %p130 = scmp.ne.s32.totalorder %s125, %s127
      %p131 = scmp.eq.s32.totalorder %s28, 0
      %p132 = por %p130, %p131
      %p133 = scmp.ne.s32.totalorder %s125, %s127
      %p134 = scmp.eq.s32.totalorder %s33, 1
      %p135 = por %p133, %p134
      %p136 = scmp.ne.s32.totalorder %s127, %s128
      %p137 = scmp.eq.s32.totalorder %s33, 0
      %p138 = por %p136, %p137
      %p139 = scmp.ne.s32.totalorder %s127, %s128
      %p140 = scmp.eq.s32.totalorder %s34, 1
      %p141 = por %p139, %p140
      %p143 = scmp.ne.s32.totalorder %s128, %s142
      %p144 = scmp.eq.s32.totalorder %s34, 0
      %p145 = por %p143, %p144
      %s147 = sadd.s32 %s146, 1
      %p150 = scmp.eq.s32.totalorder %s28, 1
      %p151 = scmp.ne.s32.totalorder %s146, %s148
      %p152 = scmp.eq.s32.totalorder %s28, 0
      %p153 = por %p151, %p152
      %p154 = scmp.ne.s32.totalorder %s146, %s148
      %p155 = scmp.eq.s32.totalorder %s33, 1
      %p156 = por %p154, %p155
      %p157 = scmp.ne.s32.totalorder %s148, %s149
      %p158 = scmp.eq.s32.totalorder %s33, 0
      %p159 = por %p157, %p158
      %p160 = scmp.ne.s32.totalorder %s148, %s149
      %p161 = scmp.eq.s32.totalorder %s34, 1
      %p162 = por %p160, %p161
      %p164 = scmp.ne.s32.totalorder %s149, %s163
      %p165 = scmp.eq.s32.totalorder %s34, 0
      %p166 = por %p164, %p165
      %s168 = sadd.s32 %s167, 1
      %p171 = scmp.eq.s32.totalorder %s28, 1
      %p172 = scmp.ne.s32.totalorder %s167, %s169
      %p173 = scmp.eq.s32.totalorder %s28, 0
      %p174 = por %p172, %p173
      %p175 = scmp.ne.s32.totalorder %s167, %s169
      %p176 = scmp.eq.s32.totalorder %s33, 1
      %p177 = por %p175, %p176
      %p178 = scmp.ne.s32.totalorder %s169, %s170
      %p179 = scmp.eq.s32.totalorder %s33, 0
      %p180 = por %p178, %p179
      %p181 = scmp.ne.s32.totalorder %s169, %s170
      %p182 = scmp.eq.s32.totalorder %s34, 1
      %p183 = por %p181, %p182
      %p185 = scmp.ne.s32.totalorder %s170, %s184
      %p186 = scmp.eq.s32.totalorder %s34, 0
      %p187 = por %p185, %p186
      %s189 = sadd.s32 %s188, 1
      %p192 = scmp.eq.s32.totalorder %s28, 1
      %p193 = scmp.ne.s32.totalorder %s188, %s190
      %p194 = scmp.eq.s32.totalorder %s28, 0
      %p195 = por %p193, %p194
      %p196 = scmp.ne.s32.totalorder %s188, %s190
      %p197 = scmp.eq.s32.totalorder %s33, 1
      %p198 = por %p196, %p197
      %p199 = scmp.ne.s32.totalorder %s190, %s191
      %p200 = scmp.eq.s32.totalorder %s33, 0
      %p201 = por %p199, %p200
      %p202 = scmp.ne.s32.totalorder %s190, %s191
      %p203 = scmp.eq.s32.totalorder %s34, 1
      %p204 = por %p202, %p203
      %p206 = scmp.ne.s32.totalorder %s191, %s205
      %p207 = scmp.eq.s32.totalorder %s34, 0
      %p208 = por %p206, %p207
      %s210 = sadd.s32 %s209, 1
      %p213 = scmp.eq.s32.totalorder %s28, 1
      %p214 = scmp.ne.s32.totalorder %s209, %s211
      %p215 = scmp.eq.s32.totalorder %s28, 0
      %p216 = por %p214, %p215
      %p217 = scmp.ne.s32.totalorder %s209, %s211
      %p218 = scmp.eq.s32.totalorder %s33, 1
      %p219 = por %p217, %p218
      %p220 = scmp.ne.s32.totalorder %s211, %s212
      %p221 = scmp.eq.s32.totalorder %s33, 0
      %p222 = por %p220, %p221
      %p223 = scmp.ne.s32.totalorder %s211, %s212
      %p224 = scmp.eq.s32.totalorder %s34, 1
      %p225 = por %p223, %p224
      %p227 = scmp.ne.s32.totalorder %s212, %s226
      %p228 = scmp.eq.s32.totalorder %s34, 0
      %p229 = por %p227, %p228
      %s231 = sadd.s32 %s230, 1
      %p234 = scmp.eq.s32.totalorder %s28, 1
      %p235 = scmp.ne.s32.totalorder %s230, %s232
      %p236 = scmp.eq.s32.totalorder %s28, 0
      %p237 = por %p235, %p236
      %p238 = scmp.ne.s32.totalorder %s230, %s232
      %p239 = scmp.eq.s32.totalorder %s33, 1
      %p240 = por %p238, %p239
      %p241 = scmp.ne.s32.totalorder %s232, %s233
      %p242 = scmp.eq.s32.totalorder %s33, 0
      %p243 = por %p241, %p242
      %p244 = scmp.ne.s32.totalorder %s232, %s233
      %p245 = scmp.eq.s32.totalorder %s34, 1
      %p246 = por %p244, %p245
      %p248 = scmp.ne.s32.totalorder %s233, %s247
      %p249 = scmp.eq.s32.totalorder %s34, 0
      %p250 = por %p248, %p249
      %s252 = sadd.s32 %s251, 1
      %p255 = scmp.eq.s32.totalorder %s28, 1
      %p256 = scmp.ne.s32.totalorder %s251, %s253
      %p257 = scmp.eq.s32.totalorder %s28, 0
      %p258 = por %p256, %p257
      %p259 = scmp.ne.s32.totalorder %s251, %s253
      %p260 = scmp.eq.s32.totalorder %s33, 1
      %p261 = por %p259, %p260
      %p262 = scmp.ne.s32.totalorder %s253, %s254
      %p263 = scmp.eq.s32.totalorder %s33, 0
      %p264 = por %p262, %p263
      %p265 = scmp.ne.s32.totalorder %s253, %s254
      %p266 = scmp.eq.s32.totalorder %s34, 1
      %p267 = por %p265, %p266
      %p269 = scmp.ne.s32.totalorder %s254, %s268
      %p270 = scmp.eq.s32.totalorder %s34, 0
      %p271 = por %p269, %p270
      %s272 = ssub.s32 %s28, %s35
      %p273 = scmp.eq.s32.totalorder %s272, 0
      %s275 = sadd.s32 %s274, 1
      %s276 = scalar_select %p273, %s274, %s275
      %p279 = pneg %p273
      %p280 = scmp.eq.s32.totalorder %s28, 1
      %p281 = por %p279, %p280
      %p282 = scmp.ne.s32.totalorder %s274, %s277
      %p283 = scmp.eq.s32.totalorder %s28, 0
      %p284 = por %p282, %p283
      %p285 = scmp.ne.s32.totalorder %s274, %s277
      %p286 = scmp.eq.s32.totalorder %s33, 1
      %p287 = por %p285, %p286
      %p288 = scmp.ne.s32.totalorder %s277, %s278
      %p289 = scmp.eq.s32.totalorder %s33, 0
      %p290 = por %p288, %p289
      %p291 = scmp.ne.s32.totalorder %s277, %s278
      %p292 = scmp.eq.s32.totalorder %s34, 1
      %p293 = por %p291, %p292
      %p295 = scmp.ne.s32.totalorder %s278, %s294
      %p296 = scmp.eq.s32.totalorder %s34, 0
      %p297 = por %p295, %p296
      %p298 = scmp.le.s32.totalorder 1, %s28
      %p299 = scmp.lt.s32.totalorder %s28, 3
      %p300 = pnand %p298, %p299
      %p301 = pneg %p300
      // Predicated region
      $region9: #{tpu_custom_call.1} parent=5 // pred_check
        _
      $region10: #{tpu_custom_call.1} parent=5 // pred_check_branch
        %303 = sbr.rel (%p300) target = $region12
      $region11: #{tpu_custom_call.1} parent=5 // pred_region
        %s304 = ssub.s32 %s28, 1
        // Predicated region
        $region13: #{tpu_custom_call.1} parent=11 // pred_check
          %p305 = pneg %p75
        $region14: #{tpu_custom_call.1} parent=11 // pred_check_branch
          %307 = sbr.rel (%p305) target = $region16
        $region15: #{tpu_custom_call.1} parent=11 // pred_region
          %s309 = ssub.s32 576, 576
          %310 = vsyncadd [#allocation8], %s309
          %s311 = sshll.u32 [#allocation7], 4
          %s312 = int_to_ptr.vmem [resolvable:$true] %s311
          %317 = dma.hbm_to_vmem [thread:$0]  %s1, 576, %s312, [#allocation8], 64, 64, 4
        $region16: #{tpu_custom_call.1} parent=11 // pred_fallthru
          _
        // Predicated region
        $region17: #{tpu_custom_call.1} parent=11 // pred_check
          %p318 = pneg %p96
        $region18: #{tpu_custom_call.1} parent=11 // pred_check_branch
          %320 = sbr.rel (%p318) target = $region20
        $region19: #{tpu_custom_call.1} parent=11 // pred_region
          %s322 = ssub.s32 16, 16
          %323 = vsyncadd [#allocation8], %s322
          %s325 = sshll.u32 [#allocation9], 4
          %s326 = int_to_ptr.vmem [resolvable:$true] %s325
          %328 = dma.hbm_to_vmem [thread:$0]  %s2, 16, %s326, [#allocation8]
        $region20: #{tpu_custom_call.1} parent=11 // pred_fallthru
          _
        // Predicated region
        $region21: #{tpu_custom_call.1} parent=11 // pred_check
          %p329 = pneg %p117
        $region22: #{tpu_custom_call.1} parent=11 // pred_check_branch
          %331 = sbr.rel (%p329) target = $region24
        $region23: #{tpu_custom_call.1} parent=11 // pred_region
          %s333 = ssub.s32 16, 16
          %334 = vsyncadd [#allocation11], %s333
          %s336 = sshll.u32 [#allocation10], 4
          %s337 = int_to_ptr.vmem [resolvable:$true] %s336
          %339 = dma.hbm_to_vmem [thread:$0]  %s3, 16, %s337, [#allocation11]
        $region24: #{tpu_custom_call.1} parent=11 // pred_fallthru
          _
        // Predicated region
        $region25: #{tpu_custom_call.1} parent=11 // pred_check
          %p340 = pneg %p138
        $region26: #{tpu_custom_call.1} parent=11 // pred_check_branch
          %342 = sbr.rel (%p340) target = $region28
        $region27: #{tpu_custom_call.1} parent=11 // pred_region
          %s344 = ssub.s32 16, 16
          %345 = vsyncadd [#allocation11], %s344
          %s347 = sshll.u32 [#allocation12], 4
          %s348 = int_to_ptr.vmem [resolvable:$true] %s347
          %350 = dma.hbm_to_vmem [thread:$0]  %s4, 16, %s348, [#allocation11]
        $region28: #{tpu_custom_call.1} parent=11 // pred_fallthru
          _
        // Predicated region
        $region29: #{tpu_custom_call.1} parent=11 // pred_check
          %p351 = pneg %p159
        $region30: #{tpu_custom_call.1} parent=11 // pred_check_branch
          %353 = sbr.rel (%p351) target = $region32
        $region31: #{tpu_custom_call.1} parent=11 // pred_region
          %s355 = ssub.s32 128, 128
          %356 = vsyncadd [#allocation14], %s355
          %s358 = sshll.u32 [#allocation13], 4
          %s359 = int_to_ptr.vmem [resolvable:$true] %s358
          %361 = dma.hbm_to_vmem [thread:$0]  %s5, 128, %s359, [#allocation14]
        $region32: #{tpu_custom_call.1} parent=11 // pred_fallthru
          _
        // Predicated region
        $region33: #{tpu_custom_call.1} parent=11 // pred_check
          %p362 = pneg %p180
        $region34: #{tpu_custom_call.1} parent=11 // pred_check_branch
          %364 = sbr.rel (%p362) target = $region36
        $region35: #{tpu_custom_call.1} parent=11 // pred_region
          %s366 = ssub.s32 1152, 1152
          %367 = vsyncadd [#allocation14], %s366
          %s368 = sshll.u32 [#allocation15], 4
          %s369 = int_to_ptr.vmem [resolvable:$true] %s368
          %374 = dma.hbm_to_vmem [thread:$0]  %s6, 1152, %s369, [#allocation14], 128, 128, 8
        $region36: #{tpu_custom_call.1} parent=11 // pred_fallthru
          _
        // Predicated region
        $region37: #{tpu_custom_call.1} parent=11 // pred_check
          %p375 = pneg %p201
        $region38: #{tpu_custom_call.1} parent=11 // pred_check_branch
          %377 = sbr.rel (%p375) target = $region40
        $region39: #{tpu_custom_call.1} parent=11 // pred_region
          %s379 = ssub.s32 16, 16
          %380 = vsyncadd [#allocation17], %s379
          %s382 = sshll.u32 [#allocation16], 4
          %s383 = int_to_ptr.vmem [resolvable:$true] %s382
          %385 = dma.hbm_to_vmem [thread:$0]  %s7, 16, %s383, [#allocation17]
        $region40: #{tpu_custom_call.1} parent=11 // pred_fallthru
          _
        // Predicated region
        $region41: #{tpu_custom_call.1} parent=11 // pred_check
          %p386 = pneg %p222
        $region42: #{tpu_custom_call.1} parent=11 // pred_check_branch
          %388 = sbr.rel (%p386) target = $region44
        $region43: #{tpu_custom_call.1} parent=11 // pred_region
          %s390 = ssub.s32 16, 16
          %391 = vsyncadd [#allocation17], %s390
          %s393 = sshll.u32 [#allocation18], 4
          %s394 = int_to_ptr.vmem [resolvable:$true] %s393
          %396 = dma.hbm_to_vmem [thread:$0]  %s8, 16, %s394, [#allocation17]
        $region44: #{tpu_custom_call.1} parent=11 // pred_fallthru
          _
        // Predicated region
        $region45: #{tpu_custom_call.1} parent=11 // pred_check
          %p397 = pneg %p243
        $region46: #{tpu_custom_call.1} parent=11 // pred_check_branch
          %399 = sbr.rel (%p397) target = $region48
        $region47: #{tpu_custom_call.1} parent=11 // pred_region
          %s401 = ssub.s32 16, 16
          %402 = vsyncadd [#allocation20], %s401
          %s404 = sshll.u32 [#allocation19], 4
          %s405 = int_to_ptr.vmem [resolvable:$true] %s404
          %407 = dma.hbm_to_vmem [thread:$0]  %s9, 16, %s405, [#allocation20]
        $region48: #{tpu_custom_call.1} parent=11 // pred_fallthru
          _
        // Predicated region
        $region49: #{tpu_custom_call.1} parent=11 // pred_check
          %p408 = pneg %p264
        $region50: #{tpu_custom_call.1} parent=11 // pred_check_branch
          %410 = sbr.rel (%p408) target = $region52
        $region51: #{tpu_custom_call.1} parent=11 // pred_region
          %s412 = ssub.s32 128, 128
          %413 = vsyncadd [#allocation20], %s412
          %s415 = sshll.u32 [#allocation21], 4
          %s416 = int_to_ptr.vmem [resolvable:$true] %s415
          %418 = dma.hbm_to_vmem [thread:$0]  %s10, 128, %s416, [#allocation20]
        $region52: #{tpu_custom_call.1} parent=11 // pred_fallthru
          _
      $region12: #{tpu_custom_call.1} parent=5 // pred_fallthru
        _
      %p419 = scmp.lt.s32.totalorder %s28, 2
      // Predicated region
      $region53: #{tpu_custom_call.1} parent=5 // pred_check
        %p420 = pneg %p419
      $region54: #{tpu_custom_call.1} parent=5 // pred_check_branch
        %422 = sbr.rel (%p420) target = $region56
      $region55: #{tpu_custom_call.1} parent=5 // pred_region
        // Predicated region
        $region57: #{tpu_custom_call.1} parent=55 // pred_check
          %p423 = pneg %p48
        $region58: #{tpu_custom_call.1} parent=55 // pred_check_branch
          %425 = sbr.rel (%p423) target = $region60
        $region59: #{tpu_custom_call.1} parent=55 // pred_region
          %s426 = sand.u32 %s38, 1
          %s427 = scalar_lea.sflag [#allocation5], %s426
          %s428 = sand.u32 %s38, 1
          %s429 = smul.addr %s428, 128
          %s430 = scalar_lea.vmem [#allocation4], %s429
          %s432 = ssub.s32 2048, 2048
          %433 = vsyncadd %s427, %s432
          %s434 = smul.addr %s28, 16
          %s435 = smul.addr %s434, 128
          %s436 = scalar_lea.hbm %s0, %s435
          %s437 = sshll.u32 %s430, 4
          %s438 = int_to_ptr.vmem [resolvable:$true] %s437
          %443 = dma.hbm_to_vmem [thread:$0]  %s436, 2048, %s438, %s427, 128, 128, 8
        $region60: #{tpu_custom_call.1} parent=55 // pred_fallthru
          _
      $region56: #{tpu_custom_call.1} parent=5 // pred_fallthru
        _
      %p444 = scmp.le.s32.totalorder 1, %s28
      %p445 = scmp.lt.s32.totalorder %s28, 3
      %p446 = pnand %p444, %p445
      %p447 = pneg %p446
      // Predicated region
      $region61: #{tpu_custom_call.1} parent=5 // pred_check
        _
      $region62: #{tpu_custom_call.1} parent=5 // pred_check_branch
        %449 = sbr.rel (%p446) target = $region64
      $region63: #{tpu_custom_call.1} parent=5 // pred_region
        %s450 = ssub.s32 %s28, 1
        %s451 = sand.u32 %s41, 1
        %s452 = scalar_lea.sflag [#allocation5], %s451
        %s453 = sand.u32 %s41, 1
        %s454 = smul.addr %s453, 128
        %s455 = scalar_lea.vmem [#allocation4], %s454
        // Predicated region
        $region65: #{tpu_custom_call.1} parent=63 // pred_check
          %p456 = pneg %p54
        $region66: #{tpu_custom_call.1} parent=63 // pred_check_branch
          %458 = sbr.rel (%p456) target = $region68
        $region67: #{tpu_custom_call.1} parent=63 // pred_region
          %459 = dma.done %s452, 2048
        $region68: #{tpu_custom_call.1} parent=63 // pred_fallthru
          _
        // Predicated region
        $region69: #{tpu_custom_call.1} parent=63 // pred_check
          %p460 = pneg %p75
        $region70: #{tpu_custom_call.1} parent=63 // pred_check_branch
          %462 = sbr.rel (%p460) target = $region72
        $region71: #{tpu_custom_call.1} parent=63 // pred_region
          %463 = dma.done [#allocation8], 576
        $region72: #{tpu_custom_call.1} parent=63 // pred_fallthru
          _
        // Predicated region
        $region73: #{tpu_custom_call.1} parent=63 // pred_check
          %p464 = pneg %p96
        $region74: #{tpu_custom_call.1} parent=63 // pred_check_branch
          %466 = sbr.rel (%p464) target = $region76
        $region75: #{tpu_custom_call.1} parent=63 // pred_region
          %467 = dma.done [#allocation8], 16
        $region76: #{tpu_custom_call.1} parent=63 // pred_fallthru
          _
        // Predicated region
        $region77: #{tpu_custom_call.1} parent=63 // pred_check
          %p468 = pneg %p117
        $region78: #{tpu_custom_call.1} parent=63 // pred_check_branch
          %470 = sbr.rel (%p468) target = $region80
        $region79: #{tpu_custom_call.1} parent=63 // pred_region
          %471 = dma.done [#allocation11], 16
        $region80: #{tpu_custom_call.1} parent=63 // pred_fallthru
          _
        // Predicated region
        $region81: #{tpu_custom_call.1} parent=63 // pred_check
          %p472 = pneg %p138
        $region82: #{tpu_custom_call.1} parent=63 // pred_check_branch
          %474 = sbr.rel (%p472) target = $region84
        $region83: #{tpu_custom_call.1} parent=63 // pred_region
          %475 = dma.done [#allocation11], 16
        $region84: #{tpu_custom_call.1} parent=63 // pred_fallthru
          _
        // Predicated region
        $region85: #{tpu_custom_call.1} parent=63 // pred_check
          %p476 = pneg %p159
        $region86: #{tpu_custom_call.1} parent=63 // pred_check_branch
          %478 = sbr.rel (%p476) target = $region88
        $region87: #{tpu_custom_call.1} parent=63 // pred_region
          %479 = dma.done [#allocation14], 128
        $region88: #{tpu_custom_call.1} parent=63 // pred_fallthru
          _
        // Predicated region
        $region89: #{tpu_custom_call.1} parent=63 // pred_check
          %p480 = pneg %p180
        $region90: #{tpu_custom_call.1} parent=63 // pred_check_branch
          %482 = sbr.rel (%p480) target = $region92
        $region91: #{tpu_custom_call.1} parent=63 // pred_region
          %483 = dma.done [#allocation14], 1152
        $region92: #{tpu_custom_call.1} parent=63 // pred_fallthru
          _
        // Predicated region
        $region93: #{tpu_custom_call.1} parent=63 // pred_check
          %p484 = pneg %p201
        $region94: #{tpu_custom_call.1} parent=63 // pred_check_branch
          %486 = sbr.rel (%p484) target = $region96
        $region95: #{tpu_custom_call.1} parent=63 // pred_region
          %487 = dma.done [#allocation17], 16
        $region96: #{tpu_custom_call.1} parent=63 // pred_fallthru
          _
        // Predicated region
        $region97: #{tpu_custom_call.1} parent=63 // pred_check
          %p488 = pneg %p222
        $region98: #{tpu_custom_call.1} parent=63 // pred_check_branch
          %490 = sbr.rel (%p488) target = $region100
        $region99: #{tpu_custom_call.1} parent=63 // pred_region
          %491 = dma.done [#allocation17], 16
        $region100: #{tpu_custom_call.1} parent=63 // pred_fallthru
          _
        // Predicated region
        $region101: #{tpu_custom_call.1} parent=63 // pred_check
          %p492 = pneg %p243
        $region102: #{tpu_custom_call.1} parent=63 // pred_check_branch
          %494 = sbr.rel (%p492) target = $region104
        $region103: #{tpu_custom_call.1} parent=63 // pred_region
          %495 = dma.done [#allocation20], 16
        $region104: #{tpu_custom_call.1} parent=63 // pred_fallthru
          _
        // Predicated region
        $region105: #{tpu_custom_call.1} parent=63 // pred_check
          %p496 = pneg %p264
        $region106: #{tpu_custom_call.1} parent=63 // pred_check_branch
          %498 = sbr.rel (%p496) target = $region108
        $region107: #{tpu_custom_call.1} parent=63 // pred_region
          %499 = dma.done [#allocation20], 128
        $region108: #{tpu_custom_call.1} parent=63 // pred_fallthru
          _
        %s500 = sand.u32 %s41, 1
        %s501 = scalar_lea.sflag [#allocation5], %s500
        %s502 = sand.u32 %s41, 1
        %s503 = smul.addr %s502, 128
        %s504 = scalar_lea.vmem [#allocation4], %s503
        %p505 = pneg %p54
        %p506 = pneg %p51
        %p507 = pneg %p75
        %p508 = pneg %p72
        %p509 = pneg %p96
        %p510 = pneg %p93
        %p511 = pneg %p117
        %p512 = pneg %p114
        %p513 = pneg %p138
        %p514 = pneg %p135
        %p515 = pneg %p159
        %p516 = pneg %p156
        %p517 = pneg %p180
        %p518 = pneg %p177
        %p519 = pneg %p201
        %p520 = pneg %p198
        %p521 = pneg %p222
        %p522 = pneg %p219
        %p523 = pneg %p243
        %p524 = pneg %p240
        %p525 = pneg %p264
        %p526 = pneg %p261
        %p527 = pneg %p290
        %p528 = pneg %p287
        %s529 = sand.u32 %s277, 1
        %s530 = scalar_lea.sflag [#allocation6], %s529
        %s531 = sand.u32 %s277, 1
        %s532 = smul.addr %s531, 64
        %s533 = scalar_lea.vmem [#allocation22], %s532
        %vm534 = vcmask 31744
        %535 = vst.msk [vmem:[#allocation2] sm:$0xff] %vm534, 0.0
        %vm536 = vcmask 25600
        %537 = vst.msk [vmem:[#allocation2 + $0x8] sm:$0x3] %vm536, 0.0
        %s538 = scalar_lea.vmem [#allocation2], 144
        %539 = vst.msk [vmem:[%s538] sm:$0xff] %vm534, 0.0
        %540 = vst.msk [vmem:[%s538 + $0x8] sm:$0x3] %vm536, 0.0
        %vm541 = vcmask 24576
        %542 = vst.msk [vmem:[#allocation2] sm:$0x1] %vm541, 0.0
        %543 = vst.msk [vmem:[#allocation2 + $0x10] sm:$0x1] %vm541, 0.0
        %544 = vst.msk [vmem:[#allocation2 + $0x20] sm:$0x1] %vm541, 0.0
        %545 = vst.msk [vmem:[#allocation2 + $0x30] sm:$0x1] %vm541, 0.0
        %546 = vst.msk [vmem:[#allocation2 + $0x40] sm:$0x1] %vm541, 0.0
        %547 = vst.msk [vmem:[#allocation2 + $0x50] sm:$0x1] %vm541, 0.0
        %548 = vst.msk [vmem:[#allocation2 + $0x60] sm:$0x1] %vm541, 0.0
        %549 = vst.msk [vmem:[#allocation2 + $0x70] sm:$0x1] %vm541, 0.0
        %550 = vst.msk [vmem:[#allocation2 + $0x80] sm:$0x1] %vm541, 0.0
        %551 = vst.msk [vmem:[#allocation2 + $0x90] sm:$0x1] %vm541, 0.0
        %552 = vst.msk [vmem:[#allocation2 + $0x9] sm:$0x1] %vm541, 0.0
        %553 = vst.msk [vmem:[#allocation2 + $0x19] sm:$0x1] %vm541, 0.0
        %554 = vst.msk [vmem:[#allocation2 + $0x29] sm:$0x1] %vm541, 0.0
        %555 = vst.msk [vmem:[#allocation2 + $0x39] sm:$0x1] %vm541, 0.0
        %556 = vst.msk [vmem:[#allocation2 + $0x49] sm:$0x1] %vm541, 0.0
        %557 = vst.msk [vmem:[#allocation2 + $0x59] sm:$0x1] %vm541, 0.0
        %558 = vst.msk [vmem:[#allocation2 + $0x69] sm:$0x1] %vm541, 0.0
        %559 = vst.msk [vmem:[#allocation2 + $0x79] sm:$0x1] %vm541, 0.0
        %560 = vst.msk [vmem:[#allocation2 + $0x89] sm:$0x1] %vm541, 0.0
        %561 = vst.msk [vmem:[#allocation2 + $0x99] sm:$0x1] %vm541, 0.0
        %vm562 = vcmask 64512
        %563 = vst.msk [vmem:[#allocation3] sm:$0xff] %vm562, 0.0
        %vm564 = vcmask 58368
        %565 = vst.msk [vmem:[#allocation3 + $0x8] sm:$0x3] %vm564, 0.0
        %s566 = scalar_lea.vmem [#allocation3], 144
        %567 = vst.msk [vmem:[%s566] sm:$0xff] %vm562, 0.0
        %568 = vst.msk [vmem:[%s566 + $0x8] sm:$0x3] %vm564, 0.0
        %vm569 = vcmask 57344
        %570 = vst.msk [vmem:[#allocation3] sm:$0x1] %vm569, 0.0
        %571 = vst.msk [vmem:[#allocation3 + $0x10] sm:$0x1] %vm569, 0.0
        %572 = vst.msk [vmem:[#allocation3 + $0x20] sm:$0x1] %vm569, 0.0
        %573 = vst.msk [vmem:[#allocation3 + $0x30] sm:$0x1] %vm569, 0.0
        %574 = vst.msk [vmem:[#allocation3 + $0x40] sm:$0x1] %vm569, 0.0
        %575 = vst.msk [vmem:[#allocation3 + $0x50] sm:$0x1] %vm569, 0.0
        %576 = vst.msk [vmem:[#allocation3 + $0x60] sm:$0x1] %vm569, 0.0
        %577 = vst.msk [vmem:[#allocation3 + $0x70] sm:$0x1] %vm569, 0.0
        %578 = vst.msk [vmem:[#allocation3 + $0x80] sm:$0x1] %vm569, 0.0
        %579 = vst.msk [vmem:[#allocation3 + $0x90] sm:$0x1] %vm569, 0.0
        %580 = vst.msk [vmem:[#allocation3 + $0x9] sm:$0x1] %vm569, 0.0
        %581 = vst.msk [vmem:[#allocation3 + $0x19] sm:$0x1] %vm569, 0.0
        %582 = vst.msk [vmem:[#allocation3 + $0x29] sm:$0x1] %vm569, 0.0
        %583 = vst.msk [vmem:[#allocation3 + $0x39] sm:$0x1] %vm569, 0.0
        %584 = vst.msk [vmem:[#allocation3 + $0x49] sm:$0x1] %vm569, 0.0
        %585 = vst.msk [vmem:[#allocation3 + $0x59] sm:$0x1] %vm569, 0.0
        %586 = vst.msk [vmem:[#allocation3 + $0x69] sm:$0x1] %vm569, 0.0
        %587 = vst.msk [vmem:[#allocation3 + $0x79] sm:$0x1] %vm569, 0.0
        %588 = vst.msk [vmem:[#allocation3 + $0x89] sm:$0x1] %vm569, 0.0
        %589 = vst.msk [vmem:[#allocation3 + $0x99] sm:$0x1] %vm569, 0.0
        %v590 = vld [vmem:[%s455] sm:$0xff]
        %v591 = vld [vmem:[%s455 + $0x8] sm:$0xff]
        %v592 = vld [vmem:[%s455 + $0x10] sm:$0xff]
        %v593 = vld [vmem:[%s455 + $0x18] sm:$0xff]
        %v594 = vld [vmem:[%s455 + $0x20] sm:$0xff]
        %v595 = vld [vmem:[%s455 + $0x28] sm:$0xff]
        %v596 = vld [vmem:[%s455 + $0x30] sm:$0xff]
        %v597 = vld [vmem:[%s455 + $0x38] sm:$0xff]
        %v598 = vld [vmem:[%s455 + $0x40] sm:$0xff]
        %v599 = vld [vmem:[%s455 + $0x48] sm:$0xff]
        %v600 = vld [vmem:[%s455 + $0x50] sm:$0xff]
        %v601 = vld [vmem:[%s455 + $0x58] sm:$0xff]
        %v602 = vld [vmem:[%s455 + $0x60] sm:$0xff]
        %v603 = vld [vmem:[%s455 + $0x68] sm:$0xff]
        %v604 = vld [vmem:[%s455 + $0x70] sm:$0xff]
        %v605 = vld [vmem:[%s455 + $0x78] sm:$0xff]
        %622 = vrot.lane.b32.xlu0 %v590, 124
        %v623 = vpop.permute.xlu0 %622
        %624 = vrot.lane.b32.xlu0 %v591, 124
        %v625 = vpop.permute.xlu0 %624
        %626 = vrot.lane.b32.xlu0 %v592, 124
        %v627 = vpop.permute.xlu0 %626
        %628 = vrot.lane.b32.xlu0 %v593, 124
        %v629 = vpop.permute.xlu0 %628
        %630 = vrot.lane.b32.xlu0 %v594, 124
        %v631 = vpop.permute.xlu0 %630
        %632 = vrot.lane.b32.xlu0 %v595, 124
        %v633 = vpop.permute.xlu0 %632
        %634 = vrot.lane.b32.xlu0 %v596, 124
        %v635 = vpop.permute.xlu0 %634
        %636 = vrot.lane.b32.xlu0 %v597, 124
        %v637 = vpop.permute.xlu0 %636
        %638 = vrot.lane.b32.xlu0 %v598, 124
        %v639 = vpop.permute.xlu0 %638
        %640 = vrot.lane.b32.xlu0 %v599, 124
        %v641 = vpop.permute.xlu0 %640
        %642 = vrot.lane.b32.xlu0 %v600, 124
        %v643 = vpop.permute.xlu0 %642
        %644 = vrot.lane.b32.xlu0 %v601, 124
        %v645 = vpop.permute.xlu0 %644
        %646 = vrot.lane.b32.xlu0 %v602, 124
        %v647 = vpop.permute.xlu0 %646
        %648 = vrot.lane.b32.xlu0 %v603, 124
        %v649 = vpop.permute.xlu0 %648
        %650 = vrot.lane.b32.xlu0 %v604, 124
        %v651 = vpop.permute.xlu0 %650
        %652 = vrot.lane.b32.xlu0 %v605, 124
        %v653 = vpop.permute.xlu0 %652
        %v670 = vmax.f32 %v590, %v623
        %v671 = vmax.f32 %v591, %v625
        %v672 = vmax.f32 %v592, %v627
        %v673 = vmax.f32 %v593, %v629
        %v674 = vmax.f32 %v594, %v631
        %v675 = vmax.f32 %v595, %v633
        %v676 = vmax.f32 %v596, %v635
        %v677 = vmax.f32 %v597, %v637
        %v678 = vmax.f32 %v598, %v639
        %v679 = vmax.f32 %v599, %v641
        %v680 = vmax.f32 %v600, %v643
        %v681 = vmax.f32 %v601, %v645
        %v682 = vmax.f32 %v602, %v647
        %v683 = vmax.f32 %v603, %v649
        %v684 = vmax.f32 %v604, %v651
        %v685 = vmax.f32 %v605, %v653
        %v686 = vmax.f32 %v670, %v671
        %v687 = vmax.f32 %v672, %v673
        %v688 = vmax.f32 %v674, %v675
        %v689 = vmax.f32 %v676, %v677
        %v690 = vmax.f32 %v678, %v679
        %v691 = vmax.f32 %v680, %v681
        %v692 = vmax.f32 %v682, %v683
        %v693 = vmax.f32 %v684, %v685
        %s694 = scalar_lea.vmem [#allocation2], 16
        %695 = vst.msk [vmem:[%s694 + $0x1] sm:$0xff] %vm534, %v686
        %696 = vst.msk [vmem:[%s694 + $0x11] sm:$0xff] %vm534, %v687
        %697 = vst.msk [vmem:[%s694 + $0x21] sm:$0xff] %vm534, %v688
        %698 = vst.msk [vmem:[%s694 + $0x31] sm:$0xff] %vm534, %v689
        %699 = vst.msk [vmem:[%s694 + $0x41] sm:$0xff] %vm534, %v690
        %700 = vst.msk [vmem:[%s694 + $0x51] sm:$0xff] %vm534, %v691
        %701 = vst.msk [vmem:[%s694 + $0x61] sm:$0xff] %vm534, %v692
        %702 = vst.msk [vmem:[%s694 + $0x71] sm:$0xff] %vm534, %v693
        %v703 = vld [vmem:[#allocation2] sm:$0xff]
        %v704 = vld [vmem:[#allocation2 + $0x10] sm:$0xff]
        %v705 = vld [vmem:[#allocation2 + $0x20] sm:$0xff]
        %v706 = vld [vmem:[#allocation2 + $0x30] sm:$0xff]
        %v707 = vld [vmem:[#allocation2 + $0x40] sm:$0xff]
        %v708 = vld [vmem:[#allocation2 + $0x50] sm:$0xff]
        %v709 = vld [vmem:[#allocation2 + $0x60] sm:$0xff]
        %v710 = vld [vmem:[#allocation2 + $0x70] sm:$0xff]
        %v711 = vld [vmem:[#allocation7] sm:$0xf]
        %v712 = vld [vmem:[#allocation2 + $0x1] sm:$0xff]
        %v713 = vld [vmem:[#allocation2 + $0x11] sm:$0xff]
        %v714 = vld [vmem:[#allocation2 + $0x21] sm:$0xff]
        %v715 = vld [vmem:[#allocation2 + $0x31] sm:$0xff]
        %v716 = vld [vmem:[#allocation2 + $0x41] sm:$0xff]
        %v717 = vld [vmem:[#allocation2 + $0x51] sm:$0xff]
        %v718 = vld [vmem:[#allocation2 + $0x61] sm:$0xff]
        %v719 = vld [vmem:[#allocation2 + $0x71] sm:$0xff]
        %s720 = scalar_lea.vmem [#allocation7], 4
        %v721 = vld [vmem:[%s720] sm:$0xf]
        %v723 = vsel %vm534, %v712, 0
        %v726 = vsel %vm534, %v713, 0
        %v729 = vsel %vm534, %v714, 0
        %v732 = vsel %vm534, %v715, 0
        %v735 = vsel %vm534, %v716, 0
        %v738 = vsel %vm534, %v717, 0
        %v741 = vsel %vm534, %v718, 0
        %v744 = vsel %vm534, %v719, 0
        %vm746 = vcmask 1043456
        %v748 = vsel %vm746, %v721, 0
        %750 = vmatprep.subr.mxu0 0.0
        %751 = vmatpush1.msra.mxu0 %v748
        %752 = vmatprep.subr.mxu0 0.0
        %753 = vmatpush1.msra.mxu0 0.0
        %754 = vmatprep.subr.mxu0 0.0
        %755 = vmatpush1.msra.mxu0 0.0
        %756 = vmatprep.subr.mxu0 0.0
        %757 = vmatpush1.msra.mxu0 0.0
        %758 = vmatprep.subr.mxu0 0.0
        %759 = vmatpush1.msra.mxu0 0.0
        %760 = vmatprep.subr.mxu0 0.0
        %761 = vmatpush1.msra.mxu0 0.0
        %762 = vmatprep.subr.mxu0 0.0
        %763 = vmatpush1.msra.mxu0 0.0
        %764 = vmatprep.subr.mxu0 0.0
        %765 = vmatpush1.msra.mxu0 0.0
        %766 = vmatprep.subr.mxu0 0.0
        %767 = vmatpush1.msra.mxu0 0.0
        %768 = vmatprep.subr.mxu0 0.0
        %769 = vmatpush1.msra.mxu0 0.0
        %770 = vmatprep.subr.mxu0 0.0
        %771 = vmatpush1.msra.mxu0 0.0
        %772 = vmatprep.subr.mxu0 0.0
        %773 = vmatpush1.msra.mxu0 0.0
        %774 = vmatprep.subr.mxu0 0.0
        %775 = vmatpush1.msra.mxu0 0.0
        %776 = vmatprep.subr.mxu0 0.0
        %777 = vmatpush1.msra.mxu0 0.0
        %778 = vmatprep.subr.mxu0 0.0
        %779 = vmatpush1.msra.mxu0 0.0
        %780 = vmatprep.subr.mxu0 0.0
        %781 = vmatpush1.msra.mxu0 0.0
        %782 = vmatprep.subr.mxu0 0.0
        %783 = vmatpush1.msra.mxu0 0.0
        %784 = vmatprep.subr.mxu0 0.0
        %785 = vmatpush1.msra.mxu0 0.0
        %786 = vmatprep.subr.mxu0 0.0
        %787 = vmatpush1.msra.mxu0 0.0
        %788 = vmatprep.subr.mxu0 0.0
        %789 = vmatpush1.msra.mxu0 0.0
        %790 = vmatprep.subr.mxu0 0.0
        %791 = vmatpush1.msra.mxu0 0.0
        %792 = vmatprep.subr.mxu0 0.0
        %793 = vmatpush1.msra.mxu0 0.0
        %794 = vmatprep.subr.mxu0 0.0
        %795 = vmatpush1.msra.mxu0 0.0
        %796 = vmatprep.subr.mxu0 0.0
        %797 = vmatpush1.msra.mxu0 0.0
        %798 = vmatprep.subr.mxu0 0.0
        %799 = vmatpush1.msra.mxu0 0.0
        %800 = vmatprep.subr.mxu0 0.0
        %801 = vmatpush1.msra.mxu0 0.0
        %802 = vmatprep.subr.mxu0 0.0
        %803 = vmatpush1.msra.mxu0 0.0
        %804 = vmatprep.subr.mxu0 0.0
        %805 = vmatpush1.msra.mxu0 0.0
        %806 = vmatprep.subr.mxu0 0.0
        %807 = vmatpush1.msra.mxu0 0.0
        %808 = vmatprep.subr.mxu0 0.0
        %809 = vmatpush1.msra.mxu0 0.0
        %810 = vmatprep.subr.mxu0 0.0
        %811 = vmatpush1.msra.mxu0 0.0
        %812 = vmatprep.subr.mxu0 0.0
        %813 = vmatpush1.msra.mxu0 0.0
        %814 = vmatprep.mubr.f32.mxu0 0.0
        %815 = vmatmul.mubr.f32.gmra.mrb[0].mxu0 %v723
        %v816 = vpop.f32.mrb[0].mxu0
        %v817 = vadd.f32 0.0, %v816
        %v818 = vpop.f32.mrb[0].mxu0
        %819 = vmatprep.mubr.f32.mxu0 0.0
        %820 = vmatmul.mubr.f32.gmra.mrb[0].mxu0 %v726
        %v821 = vpop.f32.mrb[0].mxu0
        %v822 = vadd.f32 0.0, %v821
        %v823 = vpop.f32.mrb[0].mxu0
        %824 = vmatprep.mubr.f32.mxu0 0.0
        %825 = vmatmul.mubr.f32.gmra.mrb[0].mxu0 %v729
        %v826 = vpop.f32.mrb[0].mxu0
        %v827 = vadd.f32 0.0, %v826
        %v828 = vpop.f32.mrb[0].mxu0
        %829 = vmatprep.mubr.f32.mxu0 0.0
        %830 = vmatmul.mubr.f32.gmra.mrb[0].mxu0 %v732
        %v831 = vpop.f32.mrb[0].mxu0
        %v832 = vadd.f32 0.0, %v831
        %v833 = vpop.f32.mrb[0].mxu0
        %834 = vmatprep.mubr.f32.mxu0 0.0
        %835 = vmatmul.mubr.f32.gmra.mrb[0].mxu0 %v735
        %v836 = vpop.f32.mrb[0].mxu0
        %v837 = vadd.f32 0.0, %v836
        %v838 = vpop.f32.mrb[0].mxu0
        %839 = vmatprep.mubr.f32.mxu0 0.0
        %840 = vmatmul.mubr.f32.gmra.mrb[0].mxu0 %v738
        %v841 = vpop.f32.mrb[0].mxu0
        %v842 = vadd.f32 0.0, %v841
        %v843 = vpop.f32.mrb[0].mxu0
        %844 = vmatprep.mubr.f32.mxu0 0.0
        %845 = vmatmul.mubr.f32.gmra.mrb[0].mxu0 %v741
        %v846 = vpop.f32.mrb[0].mxu0
        %v847 = vadd.f32 0.0, %v846
        %v848 = vpop.f32.mrb[0].mxu0
        %849 = vmatprep.mubr.f32.mxu0 0.0
        %850 = vmatmul.mubr.f32.gmra.mrb[0].mxu0 %v744
        %v851 = vpop.f32.mrb[0].mxu0
        %v852 = vadd.f32 0.0, %v851
        %v853 = vpop.f32.mrb[0].mxu0
        %854 = vdwg.mxu0
        %v856 = vsel %vm534, %v703, 0
        %v859 = vsel %vm534, %v704, 0
        %v862 = vsel %vm534, %v705, 0
        %v865 = vsel %vm534, %v706, 0
        %v868 = vsel %vm534, %v707, 0
        %v871 = vsel %vm534, %v708, 0
        %v874 = vsel %vm534, %v709, 0
        %v877 = vsel %vm534, %v710, 0
        %v880 = vsel %vm746, %v711, 0
        %882 = vmatprep.subr.mxu0 0.0
        %883 = vmatpush1.msra.mxu0 %v880
        %884 = vmatprep.subr.mxu0 0.0
        %885 = vmatpush1.msra.mxu0 0.0
        %886 = vmatprep.subr.mxu0 0.0
        %887 = vmatpush1.msra.mxu0 0.0
        %888 = vmatprep.subr.mxu0 0.0
        %889 = vmatpush1.msra.mxu0 0.0
        %890 = vmatprep.subr.mxu0 0.0
        %891 = vmatpush1.msra.mxu0 0.0
        %892 = vmatprep.subr.mxu0 0.0
        %893 = vmatpush1.msra.mxu0 0.0
        %894 = vmatprep.subr.mxu0 0.0
        %895 = vmatpush1.msra.mxu0 0.0
        %896 = vmatprep.subr.mxu0 0.0
        %897 = vmatpush1.msra.mxu0 0.0
        %898 = vmatprep.subr.mxu0 0.0
        %899 = vmatpush1.msra.mxu0 0.0
        %900 = vmatprep.subr.mxu0 0.0
        %901 = vmatpush1.msra.mxu0 0.0
        %902 = vmatprep.subr.mxu0 0.0
        %903 = vmatpush1.msra.mxu0 0.0
        %904 = vmatprep.subr.mxu0 0.0
        %905 = vmatpush1.msra.mxu0 0.0
        %906 = vmatprep.subr.mxu0 0.0
        %907 = vmatpush1.msra.mxu0 0.0
        %908 = vmatprep.subr.mxu0 0.0
        %909 = vmatpush1.msra.mxu0 0.0
        %910 = vmatprep.subr.mxu0 0.0
        %911 = vmatpush1.msra.mxu0 0.0
        %912 = vmatprep.subr.mxu0 0.0
        %913 = vmatpush1.msra.mxu0 0.0
        %914 = vmatprep.subr.mxu0 0.0
        %915 = vmatpush1.msra.mxu0 0.0
        %916 = vmatprep.subr.mxu0 0.0
        %917 = vmatpush1.msra.mxu0 0.0
        %918 = vmatprep.subr.mxu0 0.0
        %919 = vmatpush1.msra.mxu0 0.0
        %920 = vmatprep.subr.mxu0 0.0
        %921 = vmatpush1.msra.mxu0 0.0
        %922 = vmatprep.subr.mxu0 0.0
        %923 = vmatpush1.msra.mxu0 0.0
        %924 = vmatprep.subr.mxu0 0.0
        %925 = vmatpush1.msra.mxu0 0.0
        %926 = vmatprep.subr.mxu0 0.0
        %927 = vmatpush1.msra.mxu0 0.0
        %928 = vmatprep.subr.mxu0 0.0
        %929 = vmatpush1.msra.mxu0 0.0
        %930 = vmatprep.subr.mxu0 0.0
        %931 = vmatpush1.msra.mxu0 0.0
        %932 = vmatprep.subr.mxu0 0.0
        %933 = vmatpush1.msra.mxu0 0.0
        %934 = vmatprep.subr.mxu0 0.0
        %935 = vmatpush1.msra.mxu0 0.0
        %936 = vmatprep.subr.mxu0 0.0
        %937 = vmatpush1.msra.mxu0 0.0
        %938 = vmatprep.subr.mxu0 0.0
        %939 = vmatpush1.msra.mxu0 0.0
        %940 = vmatprep.subr.mxu0 0.0
        %941 = vmatpush1.msra.mxu0 0.0
        %942 = vmatprep.subr.mxu0 0.0
        %943 = vmatpush1.msra.mxu0 0.0
        %944 = vmatprep.subr.mxu0 0.0
        %945 = vmatpush1.msra.mxu0 0.0
        %946 = vmatprep.mubr.f32.mxu0 0.0
        %947 = vmatmul.mubr.f32.gmra.mrb[0].mxu0 %v856
        %v948 = vpop.f32.mrb[0].mxu0
        %v949 = vadd.f32 %v817, %v948
        %v950 = vpop.f32.mrb[0].mxu0
        %951 = vmatprep.mubr.f32.mxu0 0.0
        %952 = vmatmul.mubr.f32.gmra.mrb[0].mxu0 %v859
        %v953 = vpop.f32.mrb[0].mxu0
        %v954 = vadd.f32 %v822, %v953
        %v955 = vpop.f32.mrb[0].mxu0
        %956 = vmatprep.mubr.f32.mxu0 0.0
        %957 = vmatmul.mubr.f32.gmra.mrb[0].mxu0 %v862
        %v958 = vpop.f32.mrb[0].mxu0
        %v959 = vadd.f32 %v827, %v958
        %v960 = vpop.f32.mrb[0].mxu0
        %961 = vmatprep.mubr.f32.mxu0 0.0
        %962 = vmatmul.mubr.f32.gmra.mrb[0].mxu0 %v865
        %v963 = vpop.f32.mrb[0].mxu0
        %v964 = vadd.f32 %v832, %v963
        %v965 = vpop.f32.mrb[0].mxu0
        %966 = vmatprep.mubr.f32.mxu0 0.0
        %967 = vmatmul.mubr.f32.gmra.mrb[0].mxu0 %v868
        %v968 = vpop.f32.mrb[0].mxu0
        %v969 = vadd.f32 %v837, %v968
        %v970 = vpop.f32.mrb[0].mxu0
        %971 = vmatprep.mubr.f32.mxu0 0.0
        %972 = vmatmul.mubr.f32.gmra.mrb[0].mxu0 %v871
        %v973 = vpop.f32.mrb[0].mxu0
        %v974 = vadd.f32 %v842, %v973
        %v975 = vpop.f32.mrb[0].mxu0
        %976 = vmatprep.mubr.f32.mxu0 0.0
        %977 = vmatmul.mubr.f32.gmra.mrb[0].mxu0 %v874
        %v978 = vpop.f32.mrb[0].mxu0
        %v979 = vadd.f32 %v847, %v978
        %v980 = vpop.f32.mrb[0].mxu0
        %981 = vmatprep.mubr.f32.mxu0 0.0
        %982 = vmatmul.mubr.f32.gmra.mrb[0].mxu0 %v877
        %v983 = vpop.f32.mrb[0].mxu0
        %v984 = vadd.f32 %v852, %v983
        %v985 = vpop.f32.mrb[0].mxu0
        %986 = vdwg.mxu0
        %v987 = vld [vmem:[#allocation2 + $0x2] sm:$0xff]
        %v988 = vld [vmem:[#allocation2 + $0x12] sm:$0xff]
        %v989 = vld [vmem:[#allocation2 + $0x22] sm:$0xff]
        %v990 = vld [vmem:[#allocation2 + $0x32] sm:$0xff]
        %v991 = vld [vmem:[#allocation2 + $0x42] sm:$0xff]
        %v992 = vld [vmem:[#allocation2 + $0x52] sm:$0xff]
        %v993 = vld [vmem:[#allocation2 + $0x62] sm:$0xff]
        %v994 = vld [vmem:[#allocation2 + $0x72] sm:$0xff]
        %s995 = scalar_lea.vmem [#allocation7], 8
        %v996 = vld [vmem:[%s995] sm:$0xf]
        %v998 = vsel %vm534, %v987, 0
        %v1001 = vsel %vm534, %v988, 0
        %v1004 = vsel %vm534, %v989, 0
        %v1007 = vsel %vm534, %v990, 0
        %v1010 = vsel %vm534, %v991, 0
        %v1013 = vsel %vm534, %v992, 0
        %v1016 = vsel %vm534, %v993, 0
        %v1019 = vsel %vm534, %v994, 0
        %v1022 = vsel %vm746, %v996, 0
        %1024 = vmatprep.subr.mxu0 0.0
        %1025 = vmatpush1.msra.mxu0 %v1022
        %1026 = vmatprep.subr.mxu0 0.0
        %1027 = vmatpush1.msra.mxu0 0.0
        %1028 = vmatprep.subr.mxu0 0.0
        %1029 = vmatpush1.msra.mxu0 0.0
        %1030 = vmatprep.subr.mxu0 0.0
        %1031 = vmatpush1.msra.mxu0 0.0
        %1032 = vmatprep.subr.mxu0 0.0
        %1033 = vmatpush1.msra.mxu0 0.0
        %1034 = vmatprep.subr.mxu0 0.0
        %1035 = vmatpush1.msra.mxu0 0.0
        %1036 = vmatprep.subr.mxu0 0.0
        %1037 = vmatpush1.msra.mxu0 0.0
        %1038 = vmatprep.subr.mxu0 0.0
        %1039 = vmatpush1.msra.mxu0 0.0
        %1040 = vmatprep.subr.mxu0 0.0
        %1041 = vmatpush1.msra.mxu0 0.0
        %1042 = vmatprep.subr.mxu0 0.0
        %1043 = vmatpush1.msra.mxu0 0.0
        %1044 = vmatprep.subr.mxu0 0.0
        %1045 = vmatpush1.msra.mxu0 0.0
        %1046 = vmatprep.subr.mxu0 0.0
        %1047 = vmatpush1.msra.mxu0 0.0
        %1048 = vmatprep.subr.mxu0 0.0
        %1049 = vmatpush1.msra.mxu0 0.0
        %1050 = vmatprep.subr.mxu0 0.0
        %1051 = vmatpush1.msra.mxu0 0.0
        %1052 = vmatprep.subr.mxu0 0.0
        %1053 = vmatpush1.msra.mxu0 0.0
        %1054 = vmatprep.subr.mxu0 0.0
        %1055 = vmatpush1.msra.mxu0 0.0
        %1056 = vmatprep.subr.mxu0 0.0
        %1057 = vmatpush1.msra.mxu0 0.0
        %1058 = vmatprep.subr.mxu0 0.0
        %1059 = vmatpush1.msra.mxu0 0.0
        %1060 = vmatprep.subr.mxu0 0.0
        %1061 = vmatpush1.msra.mxu0 0.0
        %1062 = vmatprep.subr.mxu0 0.0
        %1063 = vmatpush1.msra.mxu0 0.0
        %1064 = vmatprep.subr.mxu0 0.0
        %1065 = vmatpush1.msra.mxu0 0.0
        %1066 = vmatprep.subr.mxu0 0.0
        %1067 = vmatpush1.msra.mxu0 0.0
        %1068 = vmatprep.subr.mxu0 0.0
        %1069 = vmatpush1.msra.mxu0 0.0
        %1070 = vmatprep.subr.mxu0 0.0
        %1071 = vmatpush1.msra.mxu0 0.0
        %1072 = vmatprep.subr.mxu0 0.0
        %1073 = vmatpush1.msra.mxu0 0.0
        %1074 = vmatprep.subr.mxu0 0.0
        %1075 = vmatpush1.msra.mxu0 0.0
        %1076 = vmatprep.subr.mxu0 0.0
        %1077 = vmatpush1.msra.mxu0 0.0
        %1078 = vmatprep.subr.mxu0 0.0
        %1079 = vmatpush1.msra.mxu0 0.0
        %1080 = vmatprep.subr.mxu0 0.0
        %1081 = vmatpush1.msra.mxu0 0.0
        %1082 = vmatprep.subr.mxu0 0.0
        %1083 = vmatpush1.msra.mxu0 0.0
        %1084 = vmatprep.subr.mxu0 0.0
        %1085 = vmatpush1.msra.mxu0 0.0
        %1086 = vmatprep.subr.mxu0 0.0
        %1087 = vmatpush1.msra.mxu0 0.0
        %1088 = vmatprep.mubr.f32.mxu0 0.0
        %1089 = vmatmul.mubr.f32.gmra.mrb[0].mxu0 %v998
        %v1090 = vpop.f32.mrb[0].mxu0
        %v1091 = vadd.f32 0.0, %v1090
        %v1092 = vpop.f32.mrb[0].mxu0
        %1093 = vmatprep.mubr.f32.mxu0 0.0
        %1094 = vmatmul.mubr.f32.gmra.mrb[0].mxu0 %v1001
        %v1095 = vpop.f32.mrb[0].mxu0
        %v1096 = vadd.f32 0.0, %v1095
        %v1097 = vpop.f32.mrb[0].mxu0
        %1098 = vmatprep.mubr.f32.mxu0 0.0
        %1099 = vmatmul.mubr.f32.gmra.mrb[0].mxu0 %v1004
        %v1100 = vpop.f32.mrb[0].mxu0
        %v1101 = vadd.f32 0.0, %v1100
        %v1102 = vpop.f32.mrb[0].mxu0
        %1103 = vmatprep.mubr.f32.mxu0 0.0
        %1104 = vmatmul.mubr.f32.gmra.mrb[0].mxu0 %v1007
        %v1105 = vpop.f32.mrb[0].mxu0
        %v1106 = vadd.f32 0.0, %v1105
        %v1107 = vpop.f32.mrb[0].mxu0
        %1108 = vmatprep.mubr.f32.mxu0 0.0
        %1109 = vmatmul.mubr.f32.gmra.mrb[0].mxu0 %v1010
        %v1110 = vpop.f32.mrb[0].mxu0
        %v1111 = vadd.f32 0.0, %v1110
        %v1112 = vpop.f32.mrb[0].mxu0
        %1113 = vmatprep.mubr.f32.mxu0 0.0
        %1114 = vmatmul.mubr.f32.gmra.mrb[0].mxu0 %v1013
        %v1115 = vpop.f32.mrb[0].mxu0
        %v1116 = vadd.f32 0.0, %v1115
        %v1117 = vpop.f32.mrb[0].mxu0
        %1118 = vmatprep.mubr.f32.mxu0 0.0
        %1119 = vmatmul.mubr.f32.gmra.mrb[0].mxu0 %v1016
        %v1120 = vpop.f32.mrb[0].mxu0
        %v1121 = vadd.f32 0.0, %v1120
        %v1122 = vpop.f32.mrb[0].mxu0
        %1123 = vmatprep.mubr.f32.mxu0 0.0
        %1124 = vmatmul.mubr.f32.gmra.mrb[0].mxu0 %v1019
        %v1125 = vpop.f32.mrb[0].mxu0
        %v1126 = vadd.f32 0.0, %v1125
        %v1127 = vpop.f32.mrb[0].mxu0
        %1128 = vdwg.mxu0
        %v1129 = vadd.f32 %v949, %v1091
        %v1130 = vadd.f32 %v954, %v1096
        %v1131 = vadd.f32 %v959, %v1101
        %v1132 = vadd.f32 %v964, %v1106
        %v1133 = vadd.f32 %v969, %v1111
        %v1134 = vadd.f32 %v974, %v1116
        %v1135 = vadd.f32 %v979, %v1121
        %v1136 = vadd.f32 %v984, %v1126
        %v1137 = vld [vmem:[%s694] sm:$0xff]
        %v1138 = vld [vmem:[%s694 + $0x10] sm:$0xff]
        %v1139 = vld [vmem:[%s694 + $0x20] sm:$0xff]
        %v1140 = vld [vmem:[%s694 + $0x30] sm:$0xff]
        %v1141 = vld [vmem:[%s694 + $0x40] sm:$0xff]
        %v1142 = vld [vmem:[%s694 + $0x50] sm:$0xff]
        %v1143 = vld [vmem:[%s694 + $0x60] sm:$0xff]
        %v1144 = vld [vmem:[%s694 + $0x70] sm:$0xff]
        %s1145 = scalar_lea.vmem [#allocation7], 12
        %v1146 = vld [vmem:[%s1145] sm:$0xf]
        %v1148 = vsel %vm534, %v1137, 0
        %v1151 = vsel %vm534, %v1138, 0
        %v1154 = vsel %vm534, %v1139, 0
        %v1157 = vsel %vm534, %v1140, 0
        %v1160 = vsel %vm534, %v1141, 0
        %v1163 = vsel %vm534, %v1142, 0
        %v1166 = vsel %vm534, %v1143, 0
        %v1169 = vsel %vm534, %v1144, 0
        %v1172 = vsel %vm746, %v1146, 0
        %1174 = vmatprep.subr.mxu0 0.0
        %1175 = vmatpush1.msra.mxu0 %v1172
        %1176 = vmatprep.subr.mxu0 0.0
        %1177 = vmatpush1.msra.mxu0 0.0
        %1178 = vmatprep.subr.mxu0 0.0
        %1179 = vmatpush1.msra.mxu0 0.0
        %1180 = vmatprep.subr.mxu0 0.0
        %1181 = vmatpush1.msra.mxu0 0.0
        %1182 = vmatprep.subr.mxu0 0.0
        %1183 = vmatpush1.msra.mxu0 0.0
        %1184 = vmatprep.subr.mxu0 0.0
        %1185 = vmatpush1.msra.mxu0 0.0
        %1186 = vmatprep.subr.mxu0 0.0
        %1187 = vmatpush1.msra.mxu0 0.0
        %1188 = vmatprep.subr.mxu0 0.0
        %1189 = vmatpush1.msra.mxu0 0.0
        %1190 = vmatprep.subr.mxu0 0.0
        %1191 = vmatpush1.msra.mxu0 0.0
        %1192 = vmatprep.subr.mxu0 0.0
        %1193 = vmatpush1.msra.mxu0 0.0
        %1194 = vmatprep.subr.mxu0 0.0
        %1195 = vmatpush1.msra.mxu0 0.0
        %1196 = vmatprep.subr.mxu0 0.0
        %1197 = vmatpush1.msra.mxu0 0.0
        %1198 = vmatprep.subr.mxu0 0.0
        %1199 = vmatpush1.msra.mxu0 0.0
        %1200 = vmatprep.subr.mxu0 0.0
        %1201 = vmatpush1.msra.mxu0 0.0
        %1202 = vmatprep.subr.mxu0 0.0
        %1203 = vmatpush1.msra.mxu0 0.0
        %1204 = vmatprep.subr.mxu0 0.0
        %1205 = vmatpush1.msra.mxu0 0.0
        %1206 = vmatprep.subr.mxu0 0.0
        %1207 = vmatpush1.msra.mxu0 0.0
        %1208 = vmatprep.subr.mxu0 0.0
        %1209 = vmatpush1.msra.mxu0 0.0
        %1210 = vmatprep.subr.mxu0 0.0
        %1211 = vmatpush1.msra.mxu0 0.0
        %1212 = vmatprep.subr.mxu0 0.0
        %1213 = vmatpush1.msra.mxu0 0.0
        %1214 = vmatprep.subr.mxu0 0.0
        %1215 = vmatpush1.msra.mxu0 0.0
        %1216 = vmatprep.subr.mxu0 0.0
        %1217 = vmatpush1.msra.mxu0 0.0
        %1218 = vmatprep.subr.mxu0 0.0
        %1219 = vmatpush1.msra.mxu0 0.0
        %1220 = vmatprep.subr.mxu0 0.0
        %1221 = vmatpush1.msra.mxu0 0.0
        %1222 = vmatprep.subr.mxu0 0.0
        %1223 = vmatpush1.msra.mxu0 0.0
        %1224 = vmatprep.subr.mxu0 0.0
        %1225 = vmatpush1.msra.mxu0 0.0
        %1226 = vmatprep.subr.mxu0 0.0
        %1227 = vmatpush1.msra.mxu0 0.0
        %1228 = vmatprep.subr.mxu0 0.0
        %1229 = vmatpush1.msra.mxu0 0.0
        %1230 = vmatprep.subr.mxu0 0.0
        %1231 = vmatpush1.msra.mxu0 0.0
        %1232 = vmatprep.subr.mxu0 0.0
        %1233 = vmatpush1.msra.mxu0 0.0
        %1234 = vmatprep.subr.mxu0 0.0
        %1235 = vmatpush1.msra.mxu0 0.0
        %1236 = vmatprep.subr.mxu0 0.0
        %1237 = vmatpush1.msra.mxu0 0.0
        %1238 = vmatprep.mubr.f32.mxu0 0.0
        %1239 = vmatmul.mubr.f32.gmra.mrb[0].mxu0 %v1148
        %v1240 = vpop.f32.mrb[0].mxu0
        %v1241 = vadd.f32 0.0, %v1240
        %v1242 = vpop.f32.mrb[0].mxu0
        %1243 = vmatprep.mubr.f32.mxu0 0.0
        %1244 = vmatmul.mubr.f32.gmra.mrb[0].mxu0 %v1151
        %v1245 = vpop.f32.mrb[0].mxu0
        %v1246 = vadd.f32 0.0, %v1245
        %v1247 = vpop.f32.mrb[0].mxu0
        %1248 = vmatprep.mubr.f32.mxu0 0.0
        %1249 = vmatmul.mubr.f32.gmra.mrb[0].mxu0 %v1154
        %v1250 = vpop.f32.mrb[0].mxu0
        %v1251 = vadd.f32 0.0, %v1250
        %v1252 = vpop.f32.mrb[0].mxu0
        %1253 = vmatprep.mubr.f32.mxu0 0.0
        %1254 = vmatmul.mubr.f32.gmra.mrb[0].mxu0 %v1157
        %v1255 = vpop.f32.mrb[0].mxu0
        %v1256 = vadd.f32 0.0, %v1255
        %v1257 = vpop.f32.mrb[0].mxu0
        %1258 = vmatprep.mubr.f32.mxu0 0.0
        %1259 = vmatmul.mubr.f32.gmra.mrb[0].mxu0 %v1160
        %v1260 = vpop.f32.mrb[0].mxu0
        %v1261 = vadd.f32 0.0, %v1260
        %v1262 = vpop.f32.mrb[0].mxu0
        %1263 = vmatprep.mubr.f32.mxu0 0.0
        %1264 = vmatmul.mubr.f32.gmra.mrb[0].mxu0 %v1163
        %v1265 = vpop.f32.mrb[0].mxu0
        %v1266 = vadd.f32 0.0, %v1265
        %v1267 = vpop.f32.mrb[0].mxu0
        %1268 = vmatprep.mubr.f32.mxu0 0.0
        %1269 = vmatmul.mubr.f32.gmra.mrb[0].mxu0 %v1166
        %v1270 = vpop.f32.mrb[0].mxu0
        %v1271 = vadd.f32 0.0, %v1270
        %v1272 = vpop.f32.mrb[0].mxu0
        %1273 = vmatprep.mubr.f32.mxu0 0.0
        %1274 = vmatmul.mubr.f32.gmra.mrb[0].mxu0 %v1169
        %v1275 = vpop.f32.mrb[0].mxu0
        %v1276 = vadd.f32 0.0, %v1275
        %v1277 = vpop.f32.mrb[0].mxu0
        %1278 = vdwg.mxu0
        %v1279 = vadd.f32 %v1129, %v1241
        %v1280 = vadd.f32 %v1130, %v1246
        %v1281 = vadd.f32 %v1131, %v1251
        %v1282 = vadd.f32 %v1132, %v1256
        %v1283 = vadd.f32 %v1133, %v1261
        %v1284 = vadd.f32 %v1134, %v1266
        %v1285 = vadd.f32 %v1135, %v1271
        %v1286 = vadd.f32 %v1136, %v1276
        %v1287 = vld [vmem:[%s694 + $0x1] sm:$0xff]
        %v1288 = vld [vmem:[%s694 + $0x11] sm:$0xff]
        %v1289 = vld [vmem:[%s694 + $0x21] sm:$0xff]
        %v1290 = vld [vmem:[%s694 + $0x31] sm:$0xff]
        %v1291 = vld [vmem:[%s694 + $0x41] sm:$0xff]
        %v1292 = vld [vmem:[%s694 + $0x51] sm:$0xff]
        %v1293 = vld [vmem:[%s694 + $0x61] sm:$0xff]
        %v1294 = vld [vmem:[%s694 + $0x71] sm:$0xff]
        %s1295 = scalar_lea.vmem [#allocation7], 16
        %v1296 = vld [vmem:[%s1295] sm:$0xf]
        %v1298 = vsel %vm534, %v1287, 0
        %v1301 = vsel %vm534, %v1288, 0
        %v1304 = vsel %vm534, %v1289, 0
        %v1307 = vsel %vm534, %v1290, 0
        %v1310 = vsel %vm534, %v1291, 0
        %v1313 = vsel %vm534, %v1292, 0
        %v1316 = vsel %vm534, %v1293, 0
        %v1319 = vsel %vm534, %v1294, 0
        %v1322 = vsel %vm746, %v1296, 0
        %1324 = vmatprep.subr.mxu0 0.0
        %1325 = vmatpush1.msra.mxu0 %v1322
        %1326 = vmatprep.subr.mxu0 0.0
        %1327 = vmatpush1.msra.mxu0 0.0
        %1328 = vmatprep.subr.mxu0 0.0
        %1329 = vmatpush1.msra.mxu0 0.0
        %1330 = vmatprep.subr.mxu0 0.0
        %1331 = vmatpush1.msra.mxu0 0.0
        %1332 = vmatprep.subr.mxu0 0.0
        %1333 = vmatpush1.msra.mxu0 0.0
        %1334 = vmatprep.subr.mxu0 0.0
        %1335 = vmatpush1.msra.mxu0 0.0
        %1336 = vmatprep.subr.mxu0 0.0
        %1337 = vmatpush1.msra.mxu0 0.0
        %1338 = vmatprep.subr.mxu0 0.0
        %1339 = vmatpush1.msra.mxu0 0.0
        %1340 = vmatprep.subr.mxu0 0.0
        %1341 = vmatpush1.msra.mxu0 0.0
        %1342 = vmatprep.subr.mxu0 0.0
        %1343 = vmatpush1.msra.mxu0 0.0
        %1344 = vmatprep.subr.mxu0 0.0
        %1345 = vmatpush1.msra.mxu0 0.0
        %1346 = vmatprep.subr.mxu0 0.0
        %1347 = vmatpush1.msra.mxu0 0.0
        %1348 = vmatprep.subr.mxu0 0.0
        %1349 = vmatpush1.msra.mxu0 0.0
        %1350 = vmatprep.subr.mxu0 0.0
        %1351 = vmatpush1.msra.mxu0 0.0
        %1352 = vmatprep.subr.mxu0 0.0
        %1353 = vmatpush1.msra.mxu0 0.0
        %1354 = vmatprep.subr.mxu0 0.0
        %1355 = vmatpush1.msra.mxu0 0.0
        %1356 = vmatprep.subr.mxu0 0.0
        %1357 = vmatpush1.msra.mxu0 0.0
        %1358 = vmatprep.subr.mxu0 0.0
        %1359 = vmatpush1.msra.mxu0 0.0
        %1360 = vmatprep.subr.mxu0 0.0
        %1361 = vmatpush1.msra.mxu0 0.0
        %1362 = vmatprep.subr.mxu0 0.0
        %1363 = vmatpush1.msra.mxu0 0.0
        %1364 = vmatprep.subr.mxu0 0.0
        %1365 = vmatpush1.msra.mxu0 0.0
        %1366 = vmatprep.subr.mxu0 0.0
        %1367 = vmatpush1.msra.mxu0 0.0
        %1368 = vmatprep.subr.mxu0 0.0
        %1369 = vmatpush1.msra.mxu0 0.0
        %1370 = vmatprep.subr.mxu0 0.0
        %1371 = vmatpush1.msra.mxu0 0.0
        %1372 = vmatprep.subr.mxu0 0.0
        %1373 = vmatpush1.msra.mxu0 0.0
        %1374 = vmatprep.subr.mxu0 0.0
        %1375 = vmatpush1.msra.mxu0 0.0
        %1376 = vmatprep.subr.mxu0 0.0
        %1377 = vmatpush1.msra.mxu0 0.0
        %1378 = vmatprep.subr.mxu0 0.0
        %1379 = vmatpush1.msra.mxu0 0.0
        %1380 = vmatprep.subr.mxu0 0.0
        %1381 = vmatpush1.msra.mxu0 0.0
        %1382 = vmatprep.subr.mxu0 0.0
        %1383 = vmatpush1.msra.mxu0 0.0
        %1384 = vmatprep.subr.mxu0 0.0
        %1385 = vmatpush1.msra.mxu0 0.0
        %1386 = vmatprep.subr.mxu0 0.0
        %1387 = vmatpush1.msra.mxu0 0.0
        %1388 = vmatprep.mubr.f32.mxu0 0.0
        %1389 = vmatmul.mubr.f32.gmra.mrb[0].mxu0 %v1298
        %v1390 = vpop.f32.mrb[0].mxu0
        %v1391 = vadd.f32 0.0, %v1390
        %v1392 = vpop.f32.mrb[0].mxu0
        %1393 = vmatprep.mubr.f32.mxu0 0.0
        %1394 = vmatmul.mubr.f32.gmra.mrb[0].mxu0 %v1301
        %v1395 = vpop.f32.mrb[0].mxu0
        %v1396 = vadd.f32 0.0, %v1395
        %v1397 = vpop.f32.mrb[0].mxu0
        %1398 = vmatprep.mubr.f32.mxu0 0.0
        %1399 = vmatmul.mubr.f32.gmra.mrb[0].mxu0 %v1304
        %v1400 = vpop.f32.mrb[0].mxu0
        %v1401 = vadd.f32 0.0, %v1400
        %v1402 = vpop.f32.mrb[0].mxu0
        %1403 = vmatprep.mubr.f32.mxu0 0.0
        %1404 = vmatmul.mubr.f32.gmra.mrb[0].mxu0 %v1307
        %v1405 = vpop.f32.mrb[0].mxu0
        %v1406 = vadd.f32 0.0, %v1405
        %v1407 = vpop.f32.mrb[0].mxu0
        %1408 = vmatprep.mubr.f32.mxu0 0.0
        %1409 = vmatmul.mubr.f32.gmra.mrb[0].mxu0 %v1310
        %v1410 = vpop.f32.mrb[0].mxu0
        %v1411 = vadd.f32 0.0, %v1410
        %v1412 = vpop.f32.mrb[0].mxu0
        %1413 = vmatprep.mubr.f32.mxu0 0.0
        %1414 = vmatmul.mubr.f32.gmra.mrb[0].mxu0 %v1313
        %v1415 = vpop.f32.mrb[0].mxu0
        %v1416 = vadd.f32 0.0, %v1415
        %v1417 = vpop.f32.mrb[0].mxu0
        %1418 = vmatprep.mubr.f32.mxu0 0.0
        %1419 = vmatmul.mubr.f32.gmra.mrb[0].mxu0 %v1316
        %v1420 = vpop.f32.mrb[0].mxu0
        %v1421 = vadd.f32 0.0, %v1420
        %v1422 = vpop.f32.mrb[0].mxu0
        %1423 = vmatprep.mubr.f32.mxu0 0.0
        %1424 = vmatmul.mubr.f32.gmra.mrb[0].mxu0 %v1319
        %v1425 = vpop.f32.mrb[0].mxu0
        %v1426 = vadd.f32 0.0, %v1425
        %v1427 = vpop.f32.mrb[0].mxu0
        %1428 = vdwg.mxu0
        %v1429 = vadd.f32 %v1279, %v1391
        %v1430 = vadd.f32 %v1280, %v1396
        %v1431 = vadd.f32 %v1281, %v1401
        %v1432 = vadd.f32 %v1282, %v1406
        %v1433 = vadd.f32 %v1283, %v1411
        %v1434 = vadd.f32 %v1284, %v1416
        %v1435 = vadd.f32 %v1285, %v1421
        %v1436 = vadd.f32 %v1286, %v1426
        %v1437 = vld [vmem:[%s694 + $0x2] sm:$0xff]
        %v1438 = vld [vmem:[%s694 + $0x12] sm:$0xff]
        %v1439 = vld [vmem:[%s694 + $0x22] sm:$0xff]
        %v1440 = vld [vmem:[%s694 + $0x32] sm:$0xff]
        %v1441 = vld [vmem:[%s694 + $0x42] sm:$0xff]
        %v1442 = vld [vmem:[%s694 + $0x52] sm:$0xff]
        %v1443 = vld [vmem:[%s694 + $0x62] sm:$0xff]
        %v1444 = vld [vmem:[%s694 + $0x72] sm:$0xff]
        %s1445 = scalar_lea.vmem [#allocation7], 20
        %v1446 = vld [vmem:[%s1445] sm:$0xf]
        %v1448 = vsel %vm534, %v1437, 0
        %v1451 = vsel %vm534, %v1438, 0
        %v1454 = vsel %vm534, %v1439, 0
        %v1457 = vsel %vm534, %v1440, 0
        %v1460 = vsel %vm534, %v1441, 0
        %v1463 = vsel %vm534, %v1442, 0
        %v1466 = vsel %vm534, %v1443, 0
        %v1469 = vsel %vm534, %v1444, 0
        %v1472 = vsel %vm746, %v1446, 0
        %1474 = vmatprep.subr.mxu0 0.0
        %1475 = vmatpush1.msra.mxu0 %v1472
        %1476 = vmatprep.subr.mxu0 0.0
        %1477 = vmatpush1.msra.mxu0 0.0
        %1478 = vmatprep.subr.mxu0 0.0
        %1479 = vmatpush1.msra.mxu0 0.0
        %1480 = vmatprep.subr.mxu0 0.0
        %1481 = vmatpush1.msra.mxu0 0.0
        %1482 = vmatprep.subr.mxu0 0.0
        %1483 = vmatpush1.msra.mxu0 0.0
        %1484 = vmatprep.subr.mxu0 0.0
        %1485 = vmatpush1.msra.mxu0 0.0
        %1486 = vmatprep.subr.mxu0 0.0
        %1487 = vmatpush1.msra.mxu0 0.0
        %1488 = vmatprep.subr.mxu0 0.0
        %1489 = vmatpush1.msra.mxu0 0.0
        %1490 = vmatprep.subr.mxu0 0.0
        %1491 = vmatpush1.msra.mxu0 0.0
        %1492 = vmatprep.subr.mxu0 0.0
        %1493 = vmatpush1.msra.mxu0 0.0
        %1494 = vmatprep.subr.mxu0 0.0
        %1495 = vmatpush1.msra.mxu0 0.0
        %1496 = vmatprep.subr.mxu0 0.0
        %1497 = vmatpush1.msra.mxu0 0.0
        %1498 = vmatprep.subr.mxu0 0.0
        %1499 = vmatpush1.msra.mxu0 0.0
        %1500 = vmatprep.subr.mxu0 0.0
        %1501 = vmatpush1.msra.mxu0 0.0
        %1502 = vmatprep.subr.mxu0 0.0
        %1503 = vmatpush1.msra.mxu0 0.0
        %1504 = vmatprep.subr.mxu0 0.0
        %1505 = vmatpush1.msra.mxu0 0.0
        %1506 = vmatprep.subr.mxu0 0.0
        %1507 = vmatpush1.msra.mxu0 0.0
        %1508 = vmatprep.subr.mxu0 0.0
        %1509 = vmatpush1.msra.mxu0 0.0
        %1510 = vmatprep.subr.mxu0 0.0
        %1511 = vmatpush1.msra.mxu0 0.0
        %1512 = vmatprep.subr.mxu0 0.0
        %1513 = vmatpush1.msra.mxu0 0.0
        %1514 = vmatprep.subr.mxu0 0.0
        %1515 = vmatpush1.msra.mxu0 0.0
        %1516 = vmatprep.subr.mxu0 0.0
        %1517 = vmatpush1.msra.mxu0 0.0
        %1518 = vmatprep.subr.mxu0 0.0
        %1519 = vmatpush1.msra.mxu0 0.0
        %1520 = vmatprep.subr.mxu0 0.0
        %1521 = vmatpush1.msra.mxu0 0.0
        %1522 = vmatprep.subr.mxu0 0.0
        %1523 = vmatpush1.msra.mxu0 0.0
        %1524 = vmatprep.subr.mxu0 0.0
        %1525 = vmatpush1.msra.mxu0 0.0
        %1526 = vmatprep.subr.mxu0 0.0
        %1527 = vmatpush1.msra.mxu0 0.0
        %1528 = vmatprep.subr.mxu0 0.0
        %1529 = vmatpush1.msra.mxu0 0.0
        %1530 = vmatprep.subr.mxu0 0.0
        %1531 = vmatpush1.msra.mxu0 0.0
        %1532 = vmatprep.subr.mxu0 0.0
        %1533 = vmatpush1.msra.mxu0 0.0
        %1534 = vmatprep.subr.mxu0 0.0
        %1535 = vmatpush1.msra.mxu0 0.0
        %1536 = vmatprep.subr.mxu0 0.0
        %1537 = vmatpush1.msra.mxu0 0.0
        %1538 = vmatprep.mubr.f32.mxu0 0.0
        %1539 = vmatmul.mubr.f32.gmra.mrb[0].mxu0 %v1448
        %v1540 = vpop.f32.mrb[0].mxu0
        %v1541 = vadd.f32 0.0, %v1540
        %v1542 = vpop.f32.mrb[0].mxu0
        %1543 = vmatprep.mubr.f32.mxu0 0.0
        %1544 = vmatmul.mubr.f32.gmra.mrb[0].mxu0 %v1451
        %v1545 = vpop.f32.mrb[0].mxu0
        %v1546 = vadd.f32 0.0, %v1545
        %v1547 = vpop.f32.mrb[0].mxu0
        %1548 = vmatprep.mubr.f32.mxu0 0.0
        %1549 = vmatmul.mubr.f32.gmra.mrb[0].mxu0 %v1454
        %v1550 = vpop.f32.mrb[0].mxu0
        %v1551 = vadd.f32 0.0, %v1550
        %v1552 = vpop.f32.mrb[0].mxu0
        %1553 = vmatprep.mubr.f32.mxu0 0.0
        %1554 = vmatmul.mubr.f32.gmra.mrb[0].mxu0 %v1457
        %v1555 = vpop.f32.mrb[0].mxu0
        %v1556 = vadd.f32 0.0, %v1555
        %v1557 = vpop.f32.mrb[0].mxu0
        %1558 = vmatprep.mubr.f32.mxu0 0.0
        %1559 = vmatmul.mubr.f32.gmra.mrb[0].mxu0 %v1460
        %v1560 = vpop.f32.mrb[0].mxu0
        %v1561 = vadd.f32 0.0, %v1560
        %v1562 = vpop.f32.mrb[0].mxu0
        %1563 = vmatprep.mubr.f32.mxu0 0.0
        %1564 = vmatmul.mubr.f32.gmra.mrb[0].mxu0 %v1463
        %v1565 = vpop.f32.mrb[0].mxu0
        %v1566 = vadd.f32 0.0, %v1565
        %v1567 = vpop.f32.mrb[0].mxu0
        %1568 = vmatprep.mubr.f32.mxu0 0.0
        %1569 = vmatmul.mubr.f32.gmra.mrb[0].mxu0 %v1466
        %v1570 = vpop.f32.mrb[0].mxu0
        %v1571 = vadd.f32 0.0, %v1570
        %v1572 = vpop.f32.mrb[0].mxu0
        %1573 = vmatprep.mubr.f32.mxu0 0.0
        %1574 = vmatmul.mubr.f32.gmra.mrb[0].mxu0 %v1469
        %v1575 = vpop.f32.mrb[0].mxu0
        %v1576 = vadd.f32 0.0, %v1575
        %v1577 = vpop.f32.mrb[0].mxu0
        %1578 = vdwg.mxu0
        %v1579 = vadd.f32 %v1429, %v1541
        %v1580 = vadd.f32 %v1430, %v1546
        %v1581 = vadd.f32 %v1431, %v1551
        %v1582 = vadd.f32 %v1432, %v1556
        %v1583 = vadd.f32 %v1433, %v1561
        %v1584 = vadd.f32 %v1434, %v1566
        %v1585 = vadd.f32 %v1435, %v1571
        %v1586 = vadd.f32 %v1436, %v1576
        %s1587 = scalar_lea.vmem [#allocation2], 32
        %v1588 = vld [vmem:[%s1587] sm:$0xff]
        %v1589 = vld [vmem:[%s1587 + $0x10] sm:$0xff]
        %v1590 = vld [vmem:[%s1587 + $0x20] sm:$0xff]
        %v1591 = vld [vmem:[%s1587 + $0x30] sm:$0xff]
        %v1592 = vld [vmem:[%s1587 + $0x40] sm:$0xff]
        %v1593 = vld [vmem:[%s1587 + $0x50] sm:$0xff]
        %v1594 = vld [vmem:[%s1587 + $0x60] sm:$0xff]
        %v1595 = vld [vmem:[%s1587 + $0x70] sm:$0xff]
        %s1596 = scalar_lea.vmem [#allocation7], 24
        %v1597 = vld [vmem:[%s1596] sm:$0xf]
        %v1599 = vsel %vm534, %v1588, 0
        %v1602 = vsel %vm534, %v1589, 0
        %v1605 = vsel %vm534, %v1590, 0
        %v1608 = vsel %vm534, %v1591, 0
        %v1611 = vsel %vm534, %v1592, 0
        %v1614 = vsel %vm534, %v1593, 0
        %v1617 = vsel %vm534, %v1594, 0
        %v1620 = vsel %vm534, %v1595, 0
        %v1623 = vsel %vm746, %v1597, 0
        %1625 = vmatprep.subr.mxu0 0.0
        %1626 = vmatpush1.msra.mxu0 %v1623
        %1627 = vmatprep.subr.mxu0 0.0
        %1628 = vmatpush1.msra.mxu0 0.0
        %1629 = vmatprep.subr.mxu0 0.0
        %1630 = vmatpush1.msra.mxu0 0.0
        %1631 = vmatprep.subr.mxu0 0.0
        %1632 = vmatpush1.msra.mxu0 0.0
        %1633 = vmatprep.subr.mxu0 0.0
        %1634 = vmatpush1.msra.mxu0 0.0
        %1635 = vmatprep.subr.mxu0 0.0
        %1636 = vmatpush1.msra.mxu0 0.0
        %1637 = vmatprep.subr.mxu0 0.0
        %1638 = vmatpush1.msra.mxu0 0.0
        %1639 = vmatprep.subr.mxu0 0.0
        %1640 = vmatpush1.msra.mxu0 0.0
        %1641 = vmatprep.subr.mxu0 0.0
        %1642 = vmatpush1.msra.mxu0 0.0
        %1643 = vmatprep.subr.mxu0 0.0
        %1644 = vmatpush1.msra.mxu0 0.0
        %1645 = vmatprep.subr.mxu0 0.0
        %1646 = vmatpush1.msra.mxu0 0.0
        %1647 = vmatprep.subr.mxu0 0.0
        %1648 = vmatpush1.msra.mxu0 0.0
        %1649 = vmatprep.subr.mxu0 0.0
        %1650 = vmatpush1.msra.mxu0 0.0
        %1651 = vmatprep.subr.mxu0 0.0
        %1652 = vmatpush1.msra.mxu0 0.0
        %1653 = vmatprep.subr.mxu0 0.0
        %1654 = vmatpush1.msra.mxu0 0.0
        %1655 = vmatprep.subr.mxu0 0.0
        %1656 = vmatpush1.msra.mxu0 0.0
        %1657 = vmatprep.subr.mxu0 0.0
        %1658 = vmatpush1.msra.mxu0 0.0
        %1659 = vmatprep.subr.mxu0 0.0
        %1660 = vmatpush1.msra.mxu0 0.0
        %1661 = vmatprep.subr.mxu0 0.0
        %1662 = vmatpush1.msra.mxu0 0.0
        %1663 = vmatprep.subr.mxu0 0.0
        %1664 = vmatpush1.msra.mxu0 0.0
        %1665 = vmatprep.subr.mxu0 0.0
        %1666 = vmatpush1.msra.mxu0 0.0
        %1667 = vmatprep.subr.mxu0 0.0
        %1668 = vmatpush1.msra.mxu0 0.0
        %1669 = vmatprep.subr.mxu0 0.0
        %1670 = vmatpush1.msra.mxu0 0.0
        %1671 = vmatprep.subr.mxu0 0.0
        %1672 = vmatpush1.msra.mxu0 0.0
        %1673 = vmatprep.subr.mxu0 0.0
        %1674 = vmatpush1.msra.mxu0 0.0
        %1675 = vmatprep.subr.mxu0 0.0
        %1676 = vmatpush1.msra.mxu0 0.0
        %1677 = vmatprep.subr.mxu0 0.0
        %1678 = vmatpush1.msra.mxu0 0.0
        %1679 = vmatprep.subr.mxu0 0.0
        %1680 = vmatpush1.msra.mxu0 0.0
        %1681 = vmatprep.subr.mxu0 0.0
        %1682 = vmatpush1.msra.mxu0 0.0
        %1683 = vmatprep.subr.mxu0 0.0
        %1684 = vmatpush1.msra.mxu0 0.0
        %1685 = vmatprep.subr.mxu0 0.0
        %1686 = vmatpush1.msra.mxu0 0.0
        %1687 = vmatprep.subr.mxu0 0.0
        %1688 = vmatpush1.msra.mxu0 0.0
        %1689 = vmatprep.mubr.f32.mxu0 0.0
        %1690 = vmatmul.mubr.f32.gmra.mrb[0].mxu0 %v1599
        %v1691 = vpop.f32.mrb[0].mxu0
        %v1692 = vadd.f32 0.0, %v1691
        %v1693 = vpop.f32.mrb[0].mxu0
        %1694 = vmatprep.mubr.f32.mxu0 0.0
        %1695 = vmatmul.mubr.f32.gmra.mrb[0].mxu0 %v1602
        %v1696 = vpop.f32.mrb[0].mxu0
        %v1697 = vadd.f32 0.0, %v1696
        %v1698 = vpop.f32.mrb[0].mxu0
        %1699 = vmatprep.mubr.f32.mxu0 0.0
        %1700 = vmatmul.mubr.f32.gmra.mrb[0].mxu0 %v1605
        %v1701 = vpop.f32.mrb[0].mxu0
        %v1702 = vadd.f32 0.0, %v1701
        %v1703 = vpop.f32.mrb[0].mxu0
        %1704 = vmatprep.mubr.f32.mxu0 0.0
        %1705 = vmatmul.mubr.f32.gmra.mrb[0].mxu0 %v1608
        %v1706 = vpop.f32.mrb[0].mxu0
        %v1707 = vadd.f32 0.0, %v1706
        %v1708 = vpop.f32.mrb[0].mxu0
        %1709 = vmatprep.mubr.f32.mxu0 0.0
        %1710 = vmatmul.mubr.f32.gmra.mrb[0].mxu0 %v1611
        %v1711 = vpop.f32.mrb[0].mxu0
        %v1712 = vadd.f32 0.0, %v1711
        %v1713 = vpop.f32.mrb[0].mxu0
        %1714 = vmatprep.mubr.f32.mxu0 0.0
        %1715 = vmatmul.mubr.f32.gmra.mrb[0].mxu0 %v1614
        %v1716 = vpop.f32.mrb[0].mxu0
        %v1717 = vadd.f32 0.0, %v1716
        %v1718 = vpop.f32.mrb[0].mxu0
        %1719 = vmatprep.mubr.f32.mxu0 0.0
        %1720 = vmatmul.mubr.f32.gmra.mrb[0].mxu0 %v1617
        %v1721 = vpop.f32.mrb[0].mxu0
        %v1722 = vadd.f32 0.0, %v1721
        %v1723 = vpop.f32.mrb[0].mxu0
        %1724 = vmatprep.mubr.f32.mxu0 0.0
        %1725 = vmatmul.mubr.f32.gmra.mrb[0].mxu0 %v1620
        %v1726 = vpop.f32.mrb[0].mxu0
        %v1727 = vadd.f32 0.0, %v1726
        %v1728 = vpop.f32.mrb[0].mxu0
        %1729 = vdwg.mxu0
        %v1730 = vadd.f32 %v1579, %v1692
        %v1731 = vadd.f32 %v1580, %v1697
        %v1732 = vadd.f32 %v1581, %v1702
        %v1733 = vadd.f32 %v1582, %v1707
        %v1734 = vadd.f32 %v1583, %v1712
        %v1735 = vadd.f32 %v1584, %v1717
        %v1736 = vadd.f32 %v1585, %v1722
        %v1737 = vadd.f32 %v1586, %v1727
        %v1738 = vld [vmem:[%s1587 + $0x1] sm:$0xff]
        %v1739 = vld [vmem:[%s1587 + $0x11] sm:$0xff]
        %v1740 = vld [vmem:[%s1587 + $0x21] sm:$0xff]
        %v1741 = vld [vmem:[%s1587 + $0x31] sm:$0xff]
        %v1742 = vld [vmem:[%s1587 + $0x41] sm:$0xff]
        %v1743 = vld [vmem:[%s1587 + $0x51] sm:$0xff]
        %v1744 = vld [vmem:[%s1587 + $0x61] sm:$0xff]
        %v1745 = vld [vmem:[%s1587 + $0x71] sm:$0xff]
        %s1746 = scalar_lea.vmem [#allocation7], 28
        %v1747 = vld [vmem:[%s1746] sm:$0xf]
        %v1749 = vsel %vm534, %v1738, 0
        %v1752 = vsel %vm534, %v1739, 0
        %v1755 = vsel %vm534, %v1740, 0
        %v1758 = vsel %vm534, %v1741, 0
        %v1761 = vsel %vm534, %v1742, 0
        %v1764 = vsel %vm534, %v1743, 0
        %v1767 = vsel %vm534, %v1744, 0
        %v1770 = vsel %vm534, %v1745, 0
        %v1773 = vsel %vm746, %v1747, 0
        %1775 = vmatprep.subr.mxu0 0.0
        %1776 = vmatpush1.msra.mxu0 %v1773
        %1777 = vmatprep.subr.mxu0 0.0
        %1778 = vmatpush1.msra.mxu0 0.0
        %1779 = vmatprep.subr.mxu0 0.0
        %1780 = vmatpush1.msra.mxu0 0.0
        %1781 = vmatprep.subr.mxu0 0.0
        %1782 = vmatpush1.msra.mxu0 0.0
        %1783 = vmatprep.subr.mxu0 0.0
        %1784 = vmatpush1.msra.mxu0 0.0
        %1785 = vmatprep.subr.mxu0 0.0
        %1786 = vmatpush1.msra.mxu0 0.0
        %1787 = vmatprep.subr.mxu0 0.0
        %1788 = vmatpush1.msra.mxu0 0.0
        %1789 = vmatprep.subr.mxu0 0.0
        %1790 = vmatpush1.msra.mxu0 0.0
        %1791 = vmatprep.subr.mxu0 0.0
        %1792 = vmatpush1.msra.mxu0 0.0
        %1793 = vmatprep.subr.mxu0 0.0
        %1794 = vmatpush1.msra.mxu0 0.0
        %1795 = vmatprep.subr.mxu0 0.0
        %1796 = vmatpush1.msra.mxu0 0.0
        %1797 = vmatprep.subr.mxu0 0.0
        %1798 = vmatpush1.msra.mxu0 0.0
        %1799 = vmatprep.subr.mxu0 0.0
        %1800 = vmatpush1.msra.mxu0 0.0
        %1801 = vmatprep.subr.mxu0 0.0
        %1802 = vmatpush1.msra.mxu0 0.0
        %1803 = vmatprep.subr.mxu0 0.0
        %1804 = vmatpush1.msra.mxu0 0.0
        %1805 = vmatprep.subr.mxu0 0.0
        %1806 = vmatpush1.msra.mxu0 0.0
        %1807 = vmatprep.subr.mxu0 0.0
        %1808 = vmatpush1.msra.mxu0 0.0
        %1809 = vmatprep.subr.mxu0 0.0
        %1810 = vmatpush1.msra.mxu0 0.0
        %1811 = vmatprep.subr.mxu0 0.0
        %1812 = vmatpush1.msra.mxu0 0.0
        %1813 = vmatprep.subr.mxu0 0.0
        %1814 = vmatpush1.msra.mxu0 0.0
        %1815 = vmatprep.subr.mxu0 0.0
        %1816 = vmatpush1.msra.mxu0 0.0
        %1817 = vmatprep.subr.mxu0 0.0
        %1818 = vmatpush1.msra.mxu0 0.0
        %1819 = vmatprep.subr.mxu0 0.0
        %1820 = vmatpush1.msra.mxu0 0.0
        %1821 = vmatprep.subr.mxu0 0.0
        %1822 = vmatpush1.msra.mxu0 0.0
        %1823 = vmatprep.subr.mxu0 0.0
        %1824 = vmatpush1.msra.mxu0 0.0
        %1825 = vmatprep.subr.mxu0 0.0
        %1826 = vmatpush1.msra.mxu0 0.0
        %1827 = vmatprep.subr.mxu0 0.0
        %1828 = vmatpush1.msra.mxu0 0.0
        %1829 = vmatprep.subr.mxu0 0.0
        %1830 = vmatpush1.msra.mxu0 0.0
        %1831 = vmatprep.subr.mxu0 0.0
        %1832 = vmatpush1.msra.mxu0 0.0
        %1833 = vmatprep.subr.mxu0 0.0
        %1834 = vmatpush1.msra.mxu0 0.0
        %1835 = vmatprep.subr.mxu0 0.0
        %1836 = vmatpush1.msra.mxu0 0.0
        %1837 = vmatprep.subr.mxu0 0.0
        %1838 = vmatpush1.msra.mxu0 0.0
        %1839 = vmatprep.mubr.f32.mxu0 0.0
        %1840 = vmatmul.mubr.f32.gmra.mrb[0].mxu0 %v1749
        %v1841 = vpop.f32.mrb[0].mxu0
        %v1842 = vadd.f32 0.0, %v1841
        %v1843 = vpop.f32.mrb[0].mxu0
        %1844 = vmatprep.mubr.f32.mxu0 0.0
        %1845 = vmatmul.mubr.f32.gmra.mrb[0].mxu0 %v1752
        %v1846 = vpop.f32.mrb[0].mxu0
        %v1847 = vadd.f32 0.0, %v1846
        %v1848 = vpop.f32.mrb[0].mxu0
        %1849 = vmatprep.mubr.f32.mxu0 0.0
        %1850 = vmatmul.mubr.f32.gmra.mrb[0].mxu0 %v1755
        %v1851 = vpop.f32.mrb[0].mxu0
        %v1852 = vadd.f32 0.0, %v1851
        %v1853 = vpop.f32.mrb[0].mxu0
        %1854 = vmatprep.mubr.f32.mxu0 0.0
        %1855 = vmatmul.mubr.f32.gmra.mrb[0].mxu0 %v1758
        %v1856 = vpop.f32.mrb[0].mxu0
        %v1857 = vadd.f32 0.0, %v1856
        %v1858 = vpop.f32.mrb[0].mxu0
        %1859 = vmatprep.mubr.f32.mxu0 0.0
        %1860 = vmatmul.mubr.f32.gmra.mrb[0].mxu0 %v1761
        %v1861 = vpop.f32.mrb[0].mxu0
        %v1862 = vadd.f32 0.0, %v1861
        %v1863 = vpop.f32.mrb[0].mxu0
        %1864 = vmatprep.mubr.f32.mxu0 0.0
        %1865 = vmatmul.mubr.f32.gmra.mrb[0].mxu0 %v1764
        %v1866 = vpop.f32.mrb[0].mxu0
        %v1867 = vadd.f32 0.0, %v1866
        %v1868 = vpop.f32.mrb[0].mxu0
        %1869 = vmatprep.mubr.f32.mxu0 0.0
        %1870 = vmatmul.mubr.f32.gmra.mrb[0].mxu0 %v1767
        %v1871 = vpop.f32.mrb[0].mxu0
        %v1872 = vadd.f32 0.0, %v1871
        %v1873 = vpop.f32.mrb[0].mxu0
        %1874 = vmatprep.mubr.f32.mxu0 0.0
        %1875 = vmatmul.mubr.f32.gmra.mrb[0].mxu0 %v1770
        %v1876 = vpop.f32.mrb[0].mxu0
        %v1877 = vadd.f32 0.0, %v1876
        %v1878 = vpop.f32.mrb[0].mxu0
        %1879 = vdwg.mxu0
        %v1880 = vadd.f32 %v1730, %v1842
        %v1881 = vadd.f32 %v1731, %v1847
        %v1882 = vadd.f32 %v1732, %v1852
        %v1883 = vadd.f32 %v1733, %v1857
        %v1884 = vadd.f32 %v1734, %v1862
        %v1885 = vadd.f32 %v1735, %v1867
        %v1886 = vadd.f32 %v1736, %v1872
        %v1887 = vadd.f32 %v1737, %v1877
        %v1888 = vld [vmem:[%s1587 + $0x2] sm:$0xff]
        %v1889 = vld [vmem:[%s1587 + $0x12] sm:$0xff]
        %v1890 = vld [vmem:[%s1587 + $0x22] sm:$0xff]
        %v1891 = vld [vmem:[%s1587 + $0x32] sm:$0xff]
        %v1892 = vld [vmem:[%s1587 + $0x42] sm:$0xff]
        %v1893 = vld [vmem:[%s1587 + $0x52] sm:$0xff]
        %v1894 = vld [vmem:[%s1587 + $0x62] sm:$0xff]
        %v1895 = vld [vmem:[%s1587 + $0x72] sm:$0xff]
        %s1896 = scalar_lea.vmem [#allocation7], 32
        %v1897 = vld [vmem:[%s1896] sm:$0xf]
        %v1899 = vsel %vm534, %v1888, 0
        %v1902 = vsel %vm534, %v1889, 0
        %v1905 = vsel %vm534, %v1890, 0
        %v1908 = vsel %vm534, %v1891, 0
        %v1911 = vsel %vm534, %v1892, 0
        %v1914 = vsel %vm534, %v1893, 0
        %v1917 = vsel %vm534, %v1894, 0
        %v1920 = vsel %vm534, %v1895, 0
        %v1923 = vsel %vm746, %v1897, 0
        %1925 = vmatprep.subr.mxu0 0.0
        %1926 = vmatpush1.msra.mxu0 %v1923
        %1927 = vmatprep.subr.mxu0 0.0
        %1928 = vmatpush1.msra.mxu0 0.0
        %1929 = vmatprep.subr.mxu0 0.0
        %1930 = vmatpush1.msra.mxu0 0.0
        %1931 = vmatprep.subr.mxu0 0.0
        %1932 = vmatpush1.msra.mxu0 0.0
        %1933 = vmatprep.subr.mxu0 0.0
        %1934 = vmatpush1.msra.mxu0 0.0
        %1935 = vmatprep.subr.mxu0 0.0
        %1936 = vmatpush1.msra.mxu0 0.0
        %1937 = vmatprep.subr.mxu0 0.0
        %1938 = vmatpush1.msra.mxu0 0.0
        %1939 = vmatprep.subr.mxu0 0.0
        %1940 = vmatpush1.msra.mxu0 0.0
        %1941 = vmatprep.subr.mxu0 0.0
        %1942 = vmatpush1.msra.mxu0 0.0
        %1943 = vmatprep.subr.mxu0 0.0
        %1944 = vmatpush1.msra.mxu0 0.0
        %1945 = vmatprep.subr.mxu0 0.0
        %1946 = vmatpush1.msra.mxu0 0.0
        %1947 = vmatprep.subr.mxu0 0.0
        %1948 = vmatpush1.msra.mxu0 0.0
        %1949 = vmatprep.subr.mxu0 0.0
        %1950 = vmatpush1.msra.mxu0 0.0
        %1951 = vmatprep.subr.mxu0 0.0
        %1952 = vmatpush1.msra.mxu0 0.0
        %1953 = vmatprep.subr.mxu0 0.0
        %1954 = vmatpush1.msra.mxu0 0.0
        %1955 = vmatprep.subr.mxu0 0.0
        %1956 = vmatpush1.msra.mxu0 0.0
        %1957 = vmatprep.subr.mxu0 0.0
        %1958 = vmatpush1.msra.mxu0 0.0
        %1959 = vmatprep.subr.mxu0 0.0
        %1960 = vmatpush1.msra.mxu0 0.0
        %1961 = vmatprep.subr.mxu0 0.0
        %1962 = vmatpush1.msra.mxu0 0.0
        %1963 = vmatprep.subr.mxu0 0.0
        %1964 = vmatpush1.msra.mxu0 0.0
        %1965 = vmatprep.subr.mxu0 0.0
        %1966 = vmatpush1.msra.mxu0 0.0
        %1967 = vmatprep.subr.mxu0 0.0
        %1968 = vmatpush1.msra.mxu0 0.0
        %1969 = vmatprep.subr.mxu0 0.0
        %1970 = vmatpush1.msra.mxu0 0.0
        %1971 = vmatprep.subr.mxu0 0.0
        %1972 = vmatpush1.msra.mxu0 0.0
        %1973 = vmatprep.subr.mxu0 0.0
        %1974 = vmatpush1.msra.mxu0 0.0
        %1975 = vmatprep.subr.mxu0 0.0
        %1976 = vmatpush1.msra.mxu0 0.0
        %1977 = vmatprep.subr.mxu0 0.0
        %1978 = vmatpush1.msra.mxu0 0.0
        %1979 = vmatprep.subr.mxu0 0.0
        %1980 = vmatpush1.msra.mxu0 0.0
        %1981 = vmatprep.subr.mxu0 0.0
        %1982 = vmatpush1.msra.mxu0 0.0
        %1983 = vmatprep.subr.mxu0 0.0
        %1984 = vmatpush1.msra.mxu0 0.0
        %1985 = vmatprep.subr.mxu0 0.0
        %1986 = vmatpush1.msra.mxu0 0.0
        %1987 = vmatprep.subr.mxu0 0.0
        %1988 = vmatpush1.msra.mxu0 0.0
        %1989 = vmatprep.mubr.f32.mxu0 0.0
        %1990 = vmatmul.mubr.f32.gmra.mrb[0].mxu0 %v1899
        %v1991 = vpop.f32.mrb[0].mxu0
        %v1992 = vadd.f32 0.0, %v1991
        %v1993 = vpop.f32.mrb[0].mxu0
        %1994 = vmatprep.mubr.f32.mxu0 0.0
        %1995 = vmatmul.mubr.f32.gmra.mrb[0].mxu0 %v1902
        %v1996 = vpop.f32.mrb[0].mxu0
        %v1997 = vadd.f32 0.0, %v1996
        %v1998 = vpop.f32.mrb[0].mxu0
        %1999 = vmatprep.mubr.f32.mxu0 0.0
        %2000 = vmatmul.mubr.f32.gmra.mrb[0].mxu0 %v1905
        %v2001 = vpop.f32.mrb[0].mxu0
        %v2002 = vadd.f32 0.0, %v2001
        %v2003 = vpop.f32.mrb[0].mxu0
        %2004 = vmatprep.mubr.f32.mxu0 0.0
        %2005 = vmatmul.mubr.f32.gmra.mrb[0].mxu0 %v1908
        %v2006 = vpop.f32.mrb[0].mxu0
        %v2007 = vadd.f32 0.0, %v2006
        %v2008 = vpop.f32.mrb[0].mxu0
        %2009 = vmatprep.mubr.f32.mxu0 0.0
        %2010 = vmatmul.mubr.f32.gmra.mrb[0].mxu0 %v1911
        %v2011 = vpop.f32.mrb[0].mxu0
        %v2012 = vadd.f32 0.0, %v2011
        %v2013 = vpop.f32.mrb[0].mxu0
        %2014 = vmatprep.mubr.f32.mxu0 0.0
        %2015 = vmatmul.mubr.f32.gmra.mrb[0].mxu0 %v1914
        %v2016 = vpop.f32.mrb[0].mxu0
        %v2017 = vadd.f32 0.0, %v2016
        %v2018 = vpop.f32.mrb[0].mxu0
        %2019 = vmatprep.mubr.f32.mxu0 0.0
        %2020 = vmatmul.mubr.f32.gmra.mrb[0].mxu0 %v1917
        %v2021 = vpop.f32.mrb[0].mxu0
        %v2022 = vadd.f32 0.0, %v2021
        %v2023 = vpop.f32.mrb[0].mxu0
        %2024 = vmatprep.mubr.f32.mxu0 0.0
        %2025 = vmatmul.mubr.f32.gmra.mrb[0].mxu0 %v1920
        %v2026 = vpop.f32.mrb[0].mxu0
        %v2027 = vadd.f32 0.0, %v2026
        %v2028 = vpop.f32.mrb[0].mxu0
        %2029 = vdwg.mxu0
        %v2030 = vadd.f32 %v1880, %v1992
        %v2031 = vadd.f32 %v1881, %v1997
        %v2032 = vadd.f32 %v1882, %v2002
        %v2033 = vadd.f32 %v1883, %v2007
        %v2034 = vadd.f32 %v1884, %v2012
        %v2035 = vadd.f32 %v1885, %v2017
        %v2036 = vadd.f32 %v1886, %v2022
        %v2037 = vadd.f32 %v1887, %v2027
        %v2038 = vld [vmem:[#allocation9] sm:$0x1]
        %v2040 = vlaneseq
        %v2041 = vshrl.u32 %v2040, 7
        %v2042 = vsub.s32 0, %v2041
        %v2043 = vrot.slane %v2038, %v2042
        %v2045 = vadd.f32 %v2030, %v2043
        %v2046 = vadd.f32 %v2031, %v2043
        %v2047 = vadd.f32 %v2032, %v2043
        %v2048 = vadd.f32 %v2033, %v2043
        %v2049 = vadd.f32 %v2034, %v2043
        %v2050 = vadd.f32 %v2035, %v2043
        %v2051 = vadd.f32 %v2036, %v2043
        %v2052 = vadd.f32 %v2037, %v2043
        %v2053 = vld [vmem:[#allocation13] sm:$0xff]
        %v2054 = vld [vmem:[#allocation10] sm:$0x1]
        %v2055 = vld [vmem:[#allocation12] sm:$0x1]
        %v2056 = vsel %vm562, %v2045, 0.0
        %v2057 = vsel %vm562, %v2046, 0.0
        %v2058 = vadd.f32 %v2056, %v2057
        %v2059 = vsel %vm562, %v2047, 0.0
        %v2060 = vadd.f32 %v2058, %v2059
        %v2061 = vsel %vm562, %v2048, 0.0
        %v2062 = vadd.f32 %v2060, %v2061
        %v2063 = vsel %vm562, %v2049, 0.0
        %v2064 = vadd.f32 %v2062, %v2063
        %v2065 = vsel %vm562, %v2050, 0.0
        %v2066 = vadd.f32 %v2064, %v2065
        %v2067 = vsel %vm562, %v2051, 0.0
        %v2068 = vadd.f32 %v2066, %v2067
        %v2069 = vsel %vm562, %v2052, 0.0
        %v2070 = vadd.f32 %v2068, %v2069
        %v2071 = vrot.slane %v2070, 4
        %v2072 = vadd.f32 %v2070, %v2071
        %v2073 = vrot.slane %v2072, 2
        %v2074 = vadd.f32 %v2072, %v2073
        %v2075 = vrot.slane %v2074, 1
        %v2076 = vadd.f32 %v2074, %v2075
        %v2077 = vmul.f32 %v2045, %v2045
        %v2078 = vmul.f32 %v2046, %v2046
        %v2079 = vmul.f32 %v2047, %v2047
        %v2080 = vmul.f32 %v2048, %v2048
        %v2081 = vmul.f32 %v2049, %v2049
        %v2082 = vmul.f32 %v2050, %v2050
        %v2083 = vmul.f32 %v2051, %v2051
        %v2084 = vmul.f32 %v2052, %v2052
        %v2085 = vsel %vm562, %v2077, 0.0
        %v2086 = vsel %vm562, %v2078, 0.0
        %v2087 = vadd.f32 %v2085, %v2086
        %v2088 = vsel %vm562, %v2079, 0.0
        %v2089 = vadd.f32 %v2087, %v2088
        %v2090 = vsel %vm562, %v2080, 0.0
        %v2091 = vadd.f32 %v2089, %v2090
        %v2092 = vsel %vm562, %v2081, 0.0
        %v2093 = vadd.f32 %v2091, %v2092
        %v2094 = vsel %vm562, %v2082, 0.0
        %v2095 = vadd.f32 %v2093, %v2094
        %v2096 = vsel %vm562, %v2083, 0.0
        %v2097 = vadd.f32 %v2095, %v2096
        %v2098 = vsel %vm562, %v2084, 0.0
        %v2099 = vadd.f32 %v2097, %v2098
        %v2100 = vrot.slane %v2099, 4
        %v2101 = vadd.f32 %v2099, %v2100
        %v2102 = vrot.slane %v2101, 2
        %v2103 = vadd.f32 %v2101, %v2102
        %v2104 = vrot.slane %v2103, 1
        %v2105 = vadd.f32 %v2103, %v2104
        %v2107 = vsel %vm562, %v2076, 0
        %2109 = vmatprep.subr.mxu0 0.0
        %2110 = vmatpush1.msra.mxu0 %v2053
        %2111 = vmatprep.subr.mxu0 0.0
        %2112 = vmatpush1.msra.mxu0 0.0
        %2113 = vmatprep.subr.mxu0 0.0
        %2114 = vmatpush1.msra.mxu0 0.0
        %2115 = vmatprep.subr.mxu0 0.0
        %2116 = vmatpush1.msra.mxu0 0.0
        %2117 = vmatprep.subr.mxu0 0.0
        %2118 = vmatpush1.msra.mxu0 0.0
        %2119 = vmatprep.subr.mxu0 0.0
        %2120 = vmatpush1.msra.mxu0 0.0
        %2121 = vmatprep.subr.mxu0 0.0
        %2122 = vmatpush1.msra.mxu0 0.0
        %2123 = vmatprep.subr.mxu0 0.0
        %2124 = vmatpush1.msra.mxu0 0.0
        %2125 = vmatprep.subr.mxu0 0.0
        %2126 = vmatpush1.msra.mxu0 0.0
        %2127 = vmatprep.subr.mxu0 0.0
        %2128 = vmatpush1.msra.mxu0 0.0
        %2129 = vmatprep.subr.mxu0 0.0
        %2130 = vmatpush1.msra.mxu0 0.0
        %2131 = vmatprep.subr.mxu0 0.0
        %2132 = vmatpush1.msra.mxu0 0.0
        %2133 = vmatprep.subr.mxu0 0.0
        %2134 = vmatpush1.msra.mxu0 0.0
        %2135 = vmatprep.subr.mxu0 0.0
        %2136 = vmatpush1.msra.mxu0 0.0
        %2137 = vmatprep.subr.mxu0 0.0
        %2138 = vmatpush1.msra.mxu0 0.0
        %2139 = vmatprep.subr.mxu0 0.0
        %2140 = vmatpush1.msra.mxu0 0.0
        %2141 = vmatprep.subr.mxu0 0.0
        %2142 = vmatpush1.msra.mxu0 0.0
        %2143 = vmatprep.subr.mxu0 0.0
        %2144 = vmatpush1.msra.mxu0 0.0
        %2145 = vmatprep.subr.mxu0 0.0
        %2146 = vmatpush1.msra.mxu0 0.0
        %2147 = vmatprep.subr.mxu0 0.0
        %2148 = vmatpush1.msra.mxu0 0.0
        %2149 = vmatprep.subr.mxu0 0.0
        %2150 = vmatpush1.msra.mxu0 0.0
        %2151 = vmatprep.subr.mxu0 0.0
        %2152 = vmatpush1.msra.mxu0 0.0
        %2153 = vmatprep.subr.mxu0 0.0
        %2154 = vmatpush1.msra.mxu0 0.0
        %2155 = vmatprep.subr.mxu0 0.0
        %2156 = vmatpush1.msra.mxu0 0.0
        %2157 = vmatprep.subr.mxu0 0.0
        %2158 = vmatpush1.msra.mxu0 0.0
        %2159 = vmatprep.subr.mxu0 0.0
        %2160 = vmatpush1.msra.mxu0 0.0
        %2161 = vmatprep.subr.mxu0 0.0
        %2162 = vmatpush1.msra.mxu0 0.0
        %2163 = vmatprep.subr.mxu0 0.0
        %2164 = vmatpush1.msra.mxu0 0.0
        %2165 = vmatprep.subr.mxu0 0.0
        %2166 = vmatpush1.msra.mxu0 0.0
        %2167 = vmatprep.subr.mxu0 0.0
        %2168 = vmatpush1.msra.mxu0 0.0
        %2169 = vmatprep.subr.mxu0 0.0
        %2170 = vmatpush1.msra.mxu0 0.0
        %2171 = vmatprep.subr.mxu0 0.0
        %2172 = vmatpush1.msra.mxu0 0.0
        %2173 = vmatprep.mubr.f32.mxu0 0.0
        %2174 = vmatmul.mubr.f32.gmra.mrb[0].mxu0 %v2107
        %v2175 = vpop.f32.mrb[0].mxu0
        %v2176 = vadd.f32 0.0, %v2175
        %v2177 = vpop.f32.mrb[0].mxu0
        %2178 = vdwg.mxu0
        %v2180 = vsel %vm562, %v2105, 0
        %2182 = vmatprep.subr.mxu0 0.0
        %2183 = vmatpush1.msra.mxu0 %v2053
        %2184 = vmatprep.subr.mxu0 0.0
        %2185 = vmatpush1.msra.mxu0 0.0
        %2186 = vmatprep.subr.mxu0 0.0
        %2187 = vmatpush1.msra.mxu0 0.0
        %2188 = vmatprep.subr.mxu0 0.0
        %2189 = vmatpush1.msra.mxu0 0.0
        %2190 = vmatprep.subr.mxu0 0.0
        %2191 = vmatpush1.msra.mxu0 0.0
        %2192 = vmatprep.subr.mxu0 0.0
        %2193 = vmatpush1.msra.mxu0 0.0
        %2194 = vmatprep.subr.mxu0 0.0
        %2195 = vmatpush1.msra.mxu0 0.0
        %2196 = vmatprep.subr.mxu0 0.0
        %2197 = vmatpush1.msra.mxu0 0.0
        %2198 = vmatprep.subr.mxu0 0.0
        %2199 = vmatpush1.msra.mxu0 0.0
        %2200 = vmatprep.subr.mxu0 0.0
        %2201 = vmatpush1.msra.mxu0 0.0
        %2202 = vmatprep.subr.mxu0 0.0
        %2203 = vmatpush1.msra.mxu0 0.0
        %2204 = vmatprep.subr.mxu0 0.0
        %2205 = vmatpush1.msra.mxu0 0.0
        %2206 = vmatprep.subr.mxu0 0.0
        %2207 = vmatpush1.msra.mxu0 0.0
        %2208 = vmatprep.subr.mxu0 0.0
        %2209 = vmatpush1.msra.mxu0 0.0
        %2210 = vmatprep.subr.mxu0 0.0
        %2211 = vmatpush1.msra.mxu0 0.0
        %2212 = vmatprep.subr.mxu0 0.0
        %2213 = vmatpush1.msra.mxu0 0.0
        %2214 = vmatprep.subr.mxu0 0.0
        %2215 = vmatpush1.msra.mxu0 0.0
        %2216 = vmatprep.subr.mxu0 0.0
        %2217 = vmatpush1.msra.mxu0 0.0
        %2218 = vmatprep.subr.mxu0 0.0
        %2219 = vmatpush1.msra.mxu0 0.0
        %2220 = vmatprep.subr.mxu0 0.0
        %2221 = vmatpush1.msra.mxu0 0.0
        %2222 = vmatprep.subr.mxu0 0.0
        %2223 = vmatpush1.msra.mxu0 0.0
        %2224 = vmatprep.subr.mxu0 0.0
        %2225 = vmatpush1.msra.mxu0 0.0
        %2226 = vmatprep.subr.mxu0 0.0
        %2227 = vmatpush1.msra.mxu0 0.0
        %2228 = vmatprep.subr.mxu0 0.0
        %2229 = vmatpush1.msra.mxu0 0.0
        %2230 = vmatprep.subr.mxu0 0.0
        %2231 = vmatpush1.msra.mxu0 0.0
        %2232 = vmatprep.subr.mxu0 0.0
        %2233 = vmatpush1.msra.mxu0 0.0
        %2234 = vmatprep.subr.mxu0 0.0
        %2235 = vmatpush1.msra.mxu0 0.0
        %2236 = vmatprep.subr.mxu0 0.0
        %2237 = vmatpush1.msra.mxu0 0.0
        %2238 = vmatprep.subr.mxu0 0.0
        %2239 = vmatpush1.msra.mxu0 0.0
        %2240 = vmatprep.subr.mxu0 0.0
        %2241 = vmatpush1.msra.mxu0 0.0
        %2242 = vmatprep.subr.mxu0 0.0
        %2243 = vmatpush1.msra.mxu0 0.0
        %2244 = vmatprep.subr.mxu0 0.0
        %2245 = vmatpush1.msra.mxu0 0.0
        %2246 = vmatprep.mubr.f32.mxu0 0.0
        %2247 = vmatmul.mubr.f32.gmra.mrb[0].mxu0 %v2180
        %v2248 = vpop.f32.mrb[0].mxu0
        %v2249 = vadd.f32 0.0, %v2248
        %v2250 = vpop.f32.mrb[0].mxu0
        %2251 = vdwg.mxu0
        %v2252 = vmul.f32 %v2176, 0.0078125
        %v2253 = vmul.f32 %v2249, 0.0078125
        %v2254 = vmul.f32 %v2252, %v2252
        %v2255 = vsub.f32 %v2253, %v2254
        %v2256 = vmax.f32 %v2255, 0.0
        %v2257 = vadd.f32 %v2256, 1e-05
        %v2258 = vrsqrt.pop %v2257
        %v2259 = vmul.f32 %v2258, %v2054
        %v2260 = vmul.f32 %v2252, %v2259
        %v2261 = vsub.f32 %v2055, %v2260
        %v2262 = vlaneseq
        %v2263 = vshrl.u32 %v2262, 7
        %v2264 = vsub.s32 0, %v2263
        %v2265 = vrot.slane %v2259, %v2264
        %v2266 = vmul.f32 %v2045, %v2265
        %v2267 = vmul.f32 %v2046, %v2265
        %v2268 = vmul.f32 %v2047, %v2265
        %v2269 = vmul.f32 %v2048, %v2265
        %v2270 = vmul.f32 %v2049, %v2265
        %v2271 = vmul.f32 %v2050, %v2265
        %v2272 = vmul.f32 %v2051, %v2265
        %v2273 = vmul.f32 %v2052, %v2265
        %v2275 = vlaneseq
        %v2276 = vshrl.u32 %v2275, 7
        %v2277 = vsub.s32 0, %v2276
        %v2278 = vrot.slane %v2261, %v2277
        %v2280 = vadd.f32 %v2266, %v2278
        %v2281 = vadd.f32 %v2267, %v2278
        %v2282 = vadd.f32 %v2268, %v2278
        %v2283 = vadd.f32 %v2269, %v2278
        %v2284 = vadd.f32 %v2270, %v2278
        %v2285 = vadd.f32 %v2271, %v2278
        %v2286 = vadd.f32 %v2272, %v2278
        %v2287 = vadd.f32 %v2273, %v2278
        %v2288 = vmax.f32 %v2280, 0.0
        %v2289 = vmax.f32 %v2281, 0.0
        %v2290 = vmax.f32 %v2282, 0.0
        %v2291 = vmax.f32 %v2283, 0.0
        %v2292 = vmax.f32 %v2284, 0.0
        %v2293 = vmax.f32 %v2285, 0.0
        %v2294 = vmax.f32 %v2286, 0.0
        %v2295 = vmax.f32 %v2287, 0.0
        %s2296 = scalar_lea.vmem [#allocation3], 16
        %2297 = vst.msk [vmem:[%s2296 + $0x1] sm:$0xff] %vm562, %v2288
        %2298 = vst.msk [vmem:[%s2296 + $0x11] sm:$0xff] %vm562, %v2289
        %2299 = vst.msk [vmem:[%s2296 + $0x21] sm:$0xff] %vm562, %v2290
        %2300 = vst.msk [vmem:[%s2296 + $0x31] sm:$0xff] %vm562, %v2291
        %2301 = vst.msk [vmem:[%s2296 + $0x41] sm:$0xff] %vm562, %v2292
        %2302 = vst.msk [vmem:[%s2296 + $0x51] sm:$0xff] %vm562, %v2293
        %2303 = vst.msk [vmem:[%s2296 + $0x61] sm:$0xff] %vm562, %v2294
        %2304 = vst.msk [vmem:[%s2296 + $0x71] sm:$0xff] %vm562, %v2295
        %v2305 = vld [vmem:[#allocation3] sm:$0xff]
        %v2306 = vld [vmem:[#allocation3 + $0x10] sm:$0xff]
        %v2307 = vld [vmem:[#allocation3 + $0x20] sm:$0xff]
        %v2308 = vld [vmem:[#allocation3 + $0x30] sm:$0xff]
        %v2309 = vld [vmem:[#allocation3 + $0x40] sm:$0xff]
        %v2310 = vld [vmem:[#allocation3 + $0x50] sm:$0xff]
        %v2311 = vld [vmem:[#allocation3 + $0x60] sm:$0xff]
        %v2312 = vld [vmem:[#allocation3 + $0x70] sm:$0xff]
        %v2313 = vld [vmem:[#allocation15] sm:$0xff]
        %v2314 = vld [vmem:[#allocation3 + $0x1] sm:$0xff]
        %v2315 = vld [vmem:[#allocation3 + $0x11] sm:$0xff]
        %v2316 = vld [vmem:[#allocation3 + $0x21] sm:$0xff]
        %v2317 = vld [vmem:[#allocation3 + $0x31] sm:$0xff]
        %v2318 = vld [vmem:[#allocation3 + $0x41] sm:$0xff]
        %v2319 = vld [vmem:[#allocation3 + $0x51] sm:$0xff]
        %v2320 = vld [vmem:[#allocation3 + $0x61] sm:$0xff]
        %v2321 = vld [vmem:[#allocation3 + $0x71] sm:$0xff]
        %s2322 = scalar_lea.vmem [#allocation15], 8
        %v2323 = vld [vmem:[%s2322] sm:$0xff]
        %v2325 = vsel %vm562, %v2314, 0
        %v2328 = vsel %vm562, %v2315, 0
        %v2331 = vsel %vm562, %v2316, 0
        %v2334 = vsel %vm562, %v2317, 0
        %v2337 = vsel %vm562, %v2318, 0
        %v2340 = vsel %vm562, %v2319, 0
        %v2343 = vsel %vm562, %v2320, 0
        %v2346 = vsel %vm562, %v2321, 0
        %2348 = vmatprep.subr.mxu0 0.0
        %2349 = vmatpush1.msra.mxu0 %v2323
        %2350 = vmatprep.subr.mxu0 0.0
        %2351 = vmatpush1.msra.mxu0 0.0
        %2352 = vmatprep.subr.mxu0 0.0
        %2353 = vmatpush1.msra.mxu0 0.0
        %2354 = vmatprep.subr.mxu0 0.0
        %2355 = vmatpush1.msra.mxu0 0.0
        %2356 = vmatprep.subr.mxu0 0.0
        %2357 = vmatpush1.msra.mxu0 0.0
        %2358 = vmatprep.subr.mxu0 0.0
        %2359 = vmatpush1.msra.mxu0 0.0
        %2360 = vmatprep.subr.mxu0 0.0
        %2361 = vmatpush1.msra.mxu0 0.0
        %2362 = vmatprep.subr.mxu0 0.0
        %2363 = vmatpush1.msra.mxu0 0.0
        %2364 = vmatprep.subr.mxu0 0.0
        %2365 = vmatpush1.msra.mxu0 0.0
        %2366 = vmatprep.subr.mxu0 0.0
        %2367 = vmatpush1.msra.mxu0 0.0
        %2368 = vmatprep.subr.mxu0 0.0
        %2369 = vmatpush1.msra.mxu0 0.0
        %2370 = vmatprep.subr.mxu0 0.0
        %2371 = vmatpush1.msra.mxu0 0.0
        %2372 = vmatprep.subr.mxu0 0.0
        %2373 = vmatpush1.msra.mxu0 0.0
        %2374 = vmatprep.subr.mxu0 0.0
        %2375 = vmatpush1.msra.mxu0 0.0
        %2376 = vmatprep.subr.mxu0 0.0
        %2377 = vmatpush1.msra.mxu0 0.0
        %2378 = vmatprep.subr.mxu0 0.0
        %2379 = vmatpush1.msra.mxu0 0.0
        %2380 = vmatprep.subr.mxu0 0.0
        %2381 = vmatpush1.msra.mxu0 0.0
        %2382 = vmatprep.subr.mxu0 0.0
        %2383 = vmatpush1.msra.mxu0 0.0
        %2384 = vmatprep.subr.mxu0 0.0
        %2385 = vmatpush1.msra.mxu0 0.0
        %2386 = vmatprep.subr.mxu0 0.0
        %2387 = vmatpush1.msra.mxu0 0.0
        %2388 = vmatprep.subr.mxu0 0.0
        %2389 = vmatpush1.msra.mxu0 0.0
        %2390 = vmatprep.subr.mxu0 0.0
        %2391 = vmatpush1.msra.mxu0 0.0
        %2392 = vmatprep.subr.mxu0 0.0
        %2393 = vmatpush1.msra.mxu0 0.0
        %2394 = vmatprep.subr.mxu0 0.0
        %2395 = vmatpush1.msra.mxu0 0.0
        %2396 = vmatprep.subr.mxu0 0.0
        %2397 = vmatpush1.msra.mxu0 0.0
        %2398 = vmatprep.subr.mxu0 0.0
        %2399 = vmatpush1.msra.mxu0 0.0
        %2400 = vmatprep.subr.mxu0 0.0
        %2401 = vmatpush1.msra.mxu0 0.0
        %2402 = vmatprep.subr.mxu0 0.0
        %2403 = vmatpush1.msra.mxu0 0.0
        %2404 = vmatprep.subr.mxu0 0.0
        %2405 = vmatpush1.msra.mxu0 0.0
        %2406 = vmatprep.subr.mxu0 0.0
        %2407 = vmatpush1.msra.mxu0 0.0
        %2408 = vmatprep.subr.mxu0 0.0
        %2409 = vmatpush1.msra.mxu0 0.0
        %2410 = vmatprep.subr.mxu0 0.0
        %2411 = vmatpush1.msra.mxu0 0.0
        %2412 = vmatprep.mubr.f32.mxu0 0.0
        %2413 = vmatmul.mubr.f32.gmra.mrb[0].mxu0 %v2325
        %v2414 = vpop.f32.mrb[0].mxu0
        %v2415 = vadd.f32 0.0, %v2414
        %v2416 = vpop.f32.mrb[0].mxu0
        %2417 = vmatprep.mubr.f32.mxu0 0.0
        %2418 = vmatmul.mubr.f32.gmra.mrb[0].mxu0 %v2328
        %v2419 = vpop.f32.mrb[0].mxu0
        %v2420 = vadd.f32 0.0, %v2419
        %v2421 = vpop.f32.mrb[0].mxu0
        %2422 = vmatprep.mubr.f32.mxu0 0.0
        %2423 = vmatmul.mubr.f32.gmra.mrb[0].mxu0 %v2331
        %v2424 = vpop.f32.mrb[0].mxu0
        %v2425 = vadd.f32 0.0, %v2424
        %v2426 = vpop.f32.mrb[0].mxu0
        %2427 = vmatprep.mubr.f32.mxu0 0.0
        %2428 = vmatmul.mubr.f32.gmra.mrb[0].mxu0 %v2334
        %v2429 = vpop.f32.mrb[0].mxu0
        %v2430 = vadd.f32 0.0, %v2429
        %v2431 = vpop.f32.mrb[0].mxu0
        %2432 = vmatprep.mubr.f32.mxu0 0.0
        %2433 = vmatmul.mubr.f32.gmra.mrb[0].mxu0 %v2337
        %v2434 = vpop.f32.mrb[0].mxu0
        %v2435 = vadd.f32 0.0, %v2434
        %v2436 = vpop.f32.mrb[0].mxu0
        %2437 = vmatprep.mubr.f32.mxu0 0.0
        %2438 = vmatmul.mubr.f32.gmra.mrb[0].mxu0 %v2340
        %v2439 = vpop.f32.mrb[0].mxu0
        %v2440 = vadd.f32 0.0, %v2439
        %v2441 = vpop.f32.mrb[0].mxu0
        %2442 = vmatprep.mubr.f32.mxu0 0.0
        %2443 = vmatmul.mubr.f32.gmra.mrb[0].mxu0 %v2343
        %v2444 = vpop.f32.mrb[0].mxu0
        %v2445 = vadd.f32 0.0, %v2444
        %v2446 = vpop.f32.mrb[0].mxu0
        %2447 = vmatprep.mubr.f32.mxu0 0.0
        %2448 = vmatmul.mubr.f32.gmra.mrb[0].mxu0 %v2346
        %v2449 = vpop.f32.mrb[0].mxu0
        %v2450 = vadd.f32 0.0, %v2449
        %v2451 = vpop.f32.mrb[0].mxu0
        %2452 = vdwg.mxu0
        %v2454 = vsel %vm562, %v2305, 0
        %v2457 = vsel %vm562, %v2306, 0
        %v2460 = vsel %vm562, %v2307, 0
        %v2463 = vsel %vm562, %v2308, 0
        %v2466 = vsel %vm562, %v2309, 0
        %v2469 = vsel %vm562, %v2310, 0
        %v2472 = vsel %vm562, %v2311, 0
        %v2475 = vsel %vm562, %v2312, 0
        %2477 = vmatprep.subr.mxu0 0.0
        %2478 = vmatpush1.msra.mxu0 %v2313
        %2479 = vmatprep.subr.mxu0 0.0
        %2480 = vmatpush1.msra.mxu0 0.0
        %2481 = vmatprep.subr.mxu0 0.0
        %2482 = vmatpush1.msra.mxu0 0.0
        %2483 = vmatprep.subr.mxu0 0.0
        %2484 = vmatpush1.msra.mxu0 0.0
        %2485 = vmatprep.subr.mxu0 0.0
        %2486 = vmatpush1.msra.mxu0 0.0
        %2487 = vmatprep.subr.mxu0 0.0
        %2488 = vmatpush1.msra.mxu0 0.0
        %2489 = vmatprep.subr.mxu0 0.0
        %2490 = vmatpush1.msra.mxu0 0.0
        %2491 = vmatprep.subr.mxu0 0.0
        %2492 = vmatpush1.msra.mxu0 0.0
        %2493 = vmatprep.subr.mxu0 0.0
        %2494 = vmatpush1.msra.mxu0 0.0
        %2495 = vmatprep.subr.mxu0 0.0
        %2496 = vmatpush1.msra.mxu0 0.0
        %2497 = vmatprep.subr.mxu0 0.0
        %2498 = vmatpush1.msra.mxu0 0.0
        %2499 = vmatprep.subr.mxu0 0.0
        %2500 = vmatpush1.msra.mxu0 0.0
        %2501 = vmatprep.subr.mxu0 0.0
        %2502 = vmatpush1.msra.mxu0 0.0
        %2503 = vmatprep.subr.mxu0 0.0
        %2504 = vmatpush1.msra.mxu0 0.0
        %2505 = vmatprep.subr.mxu0 0.0
        %2506 = vmatpush1.msra.mxu0 0.0
        %2507 = vmatprep.subr.mxu0 0.0
        %2508 = vmatpush1.msra.mxu0 0.0
        %2509 = vmatprep.subr.mxu0 0.0
        %2510 = vmatpush1.msra.mxu0 0.0
        %2511 = vmatprep.subr.mxu0 0.0
        %2512 = vmatpush1.msra.mxu0 0.0
        %2513 = vmatprep.subr.mxu0 0.0
        %2514 = vmatpush1.msra.mxu0 0.0
        %2515 = vmatprep.subr.mxu0 0.0
        %2516 = vmatpush1.msra.mxu0 0.0
        %2517 = vmatprep.subr.mxu0 0.0
        %2518 = vmatpush1.msra.mxu0 0.0
        %2519 = vmatprep.subr.mxu0 0.0
        %2520 = vmatpush1.msra.mxu0 0.0
        %2521 = vmatprep.subr.mxu0 0.0
        %2522 = vmatpush1.msra.mxu0 0.0
        %2523 = vmatprep.subr.mxu0 0.0
        %2524 = vmatpush1.msra.mxu0 0.0
        %2525 = vmatprep.subr.mxu0 0.0
        %2526 = vmatpush1.msra.mxu0 0.0
        %2527 = vmatprep.subr.mxu0 0.0
        %2528 = vmatpush1.msra.mxu0 0.0
        %2529 = vmatprep.subr.mxu0 0.0
        %2530 = vmatpush1.msra.mxu0 0.0
        %2531 = vmatprep.subr.mxu0 0.0
        %2532 = vmatpush1.msra.mxu0 0.0
        %2533 = vmatprep.subr.mxu0 0.0
        %2534 = vmatpush1.msra.mxu0 0.0
        %2535 = vmatprep.subr.mxu0 0.0
        %2536 = vmatpush1.msra.mxu0 0.0
        %2537 = vmatprep.subr.mxu0 0.0
        %2538 = vmatpush1.msra.mxu0 0.0
        %2539 = vmatprep.subr.mxu0 0.0
        %2540 = vmatpush1.msra.mxu0 0.0
        %2541 = vmatprep.mubr.f32.mxu0 0.0
        %2542 = vmatmul.mubr.f32.gmra.mrb[0].mxu0 %v2454
        %v2543 = vpop.f32.mrb[0].mxu0
        %v2544 = vadd.f32 %v2415, %v2543
        %v2545 = vpop.f32.mrb[0].mxu0
        %2546 = vmatprep.mubr.f32.mxu0 0.0
        %2547 = vmatmul.mubr.f32.gmra.mrb[0].mxu0 %v2457
        %v2548 = vpop.f32.mrb[0].mxu0
        %v2549 = vadd.f32 %v2420, %v2548
        %v2550 = vpop.f32.mrb[0].mxu0
        %2551 = vmatprep.mubr.f32.mxu0 0.0
        %2552 = vmatmul.mubr.f32.gmra.mrb[0].mxu0 %v2460
        %v2553 = vpop.f32.mrb[0].mxu0
        %v2554 = vadd.f32 %v2425, %v2553
        %v2555 = vpop.f32.mrb[0].mxu0
        %2556 = vmatprep.mubr.f32.mxu0 0.0
        %2557 = vmatmul.mubr.f32.gmra.mrb[0].mxu0 %v2463
        %v2558 = vpop.f32.mrb[0].mxu0
        %v2559 = vadd.f32 %v2430, %v2558
        %v2560 = vpop.f32.mrb[0].mxu0
        %2561 = vmatprep.mubr.f32.mxu0 0.0
        %2562 = vmatmul.mubr.f32.gmra.mrb[0].mxu0 %v2466
        %v2563 = vpop.f32.mrb[0].mxu0
        %v2564 = vadd.f32 %v2435, %v2563
        %v2565 = vpop.f32.mrb[0].mxu0
        %2566 = vmatprep.mubr.f32.mxu0 0.0
        %2567 = vmatmul.mubr.f32.gmra.mrb[0].mxu0 %v2469
        %v2568 = vpop.f32.mrb[0].mxu0
        %v2569 = vadd.f32 %v2440, %v2568
        %v2570 = vpop.f32.mrb[0].mxu0
        %2571 = vmatprep.mubr.f32.mxu0 0.0
        %2572 = vmatmul.mubr.f32.gmra.mrb[0].mxu0 %v2472
        %v2573 = vpop.f32.mrb[0].mxu0
        %v2574 = vadd.f32 %v2445, %v2573
        %v2575 = vpop.f32.mrb[0].mxu0
        %2576 = vmatprep.mubr.f32.mxu0 0.0
        %2577 = vmatmul.mubr.f32.gmra.mrb[0].mxu0 %v2475
        %v2578 = vpop.f32.mrb[0].mxu0
        %v2579 = vadd.f32 %v2450, %v2578
        %v2580 = vpop.f32.mrb[0].mxu0
        %2581 = vdwg.mxu0
        %v2582 = vld [vmem:[#allocation3 + $0x2] sm:$0xff]
        %v2583 = vld [vmem:[#allocation3 + $0x12] sm:$0xff]
        %v2584 = vld [vmem:[#allocation3 + $0x22] sm:$0xff]
        %v2585 = vld [vmem:[#allocation3 + $0x32] sm:$0xff]
        %v2586 = vld [vmem:[#allocation3 + $0x42] sm:$0xff]
        %v2587 = vld [vmem:[#allocation3 + $0x52] sm:$0xff]
        %v2588 = vld [vmem:[#allocation3 + $0x62] sm:$0xff]
        %v2589 = vld [vmem:[#allocation3 + $0x72] sm:$0xff]
        %s2590 = scalar_lea.vmem [#allocation15], 16
        %v2591 = vld [vmem:[%s2590] sm:$0xff]
        %v2593 = vsel %vm562, %v2582, 0
        %v2596 = vsel %vm562, %v2583, 0
        %v2599 = vsel %vm562, %v2584, 0
        %v2602 = vsel %vm562, %v2585, 0
        %v2605 = vsel %vm562, %v2586, 0
        %v2608 = vsel %vm562, %v2587, 0
        %v2611 = vsel %vm562, %v2588, 0
        %v2614 = vsel %vm562, %v2589, 0
        %2616 = vmatprep.subr.mxu0 0.0
        %2617 = vmatpush1.msra.mxu0 %v2591
        %2618 = vmatprep.subr.mxu0 0.0
        %2619 = vmatpush1.msra.mxu0 0.0
        %2620 = vmatprep.subr.mxu0 0.0
        %2621 = vmatpush1.msra.mxu0 0.0
        %2622 = vmatprep.subr.mxu0 0.0
        %2623 = vmatpush1.msra.mxu0 0.0
        %2624 = vmatprep.subr.mxu0 0.0
        %2625 = vmatpush1.msra.mxu0 0.0
        %2626 = vmatprep.subr.mxu0 0.0
        %2627 = vmatpush1.msra.mxu0 0.0
        %2628 = vmatprep.subr.mxu0 0.0
        %2629 = vmatpush1.msra.mxu0 0.0
        %2630 = vmatprep.subr.mxu0 0.0
        %2631 = vmatpush1.msra.mxu0 0.0
        %2632 = vmatprep.subr.mxu0 0.0
        %2633 = vmatpush1.msra.mxu0 0.0
        %2634 = vmatprep.subr.mxu0 0.0
        %2635 = vmatpush1.msra.mxu0 0.0
        %2636 = vmatprep.subr.mxu0 0.0
        %2637 = vmatpush1.msra.mxu0 0.0
        %2638 = vmatprep.subr.mxu0 0.0
        %2639 = vmatpush1.msra.mxu0 0.0
        %2640 = vmatprep.subr.mxu0 0.0
        %2641 = vmatpush1.msra.mxu0 0.0
        %2642 = vmatprep.subr.mxu0 0.0
        %2643 = vmatpush1.msra.mxu0 0.0
        %2644 = vmatprep.subr.mxu0 0.0
        %2645 = vmatpush1.msra.mxu0 0.0
        %2646 = vmatprep.subr.mxu0 0.0
        %2647 = vmatpush1.msra.mxu0 0.0
        %2648 = vmatprep.subr.mxu0 0.0
        %2649 = vmatpush1.msra.mxu0 0.0
        %2650 = vmatprep.subr.mxu0 0.0
        %2651 = vmatpush1.msra.mxu0 0.0
        %2652 = vmatprep.subr.mxu0 0.0
        %2653 = vmatpush1.msra.mxu0 0.0
        %2654 = vmatprep.subr.mxu0 0.0
        %2655 = vmatpush1.msra.mxu0 0.0
        %2656 = vmatprep.subr.mxu0 0.0
        %2657 = vmatpush1.msra.mxu0 0.0
        %2658 = vmatprep.subr.mxu0 0.0
        %2659 = vmatpush1.msra.mxu0 0.0
        %2660 = vmatprep.subr.mxu0 0.0
        %2661 = vmatpush1.msra.mxu0 0.0
        %2662 = vmatprep.subr.mxu0 0.0
        %2663 = vmatpush1.msra.mxu0 0.0
        %2664 = vmatprep.subr.mxu0 0.0
        %2665 = vmatpush1.msra.mxu0 0.0
        %2666 = vmatprep.subr.mxu0 0.0
        %2667 = vmatpush1.msra.mxu0 0.0
        %2668 = vmatprep.subr.mxu0 0.0
        %2669 = vmatpush1.msra.mxu0 0.0
        %2670 = vmatprep.subr.mxu0 0.0
        %2671 = vmatpush1.msra.mxu0 0.0
        %2672 = vmatprep.subr.mxu0 0.0
        %2673 = vmatpush1.msra.mxu0 0.0
        %2674 = vmatprep.subr.mxu0 0.0
        %2675 = vmatpush1.msra.mxu0 0.0
        %2676 = vmatprep.subr.mxu0 0.0
        %2677 = vmatpush1.msra.mxu0 0.0
        %2678 = vmatprep.subr.mxu0 0.0
        %2679 = vmatpush1.msra.mxu0 0.0
        %2680 = vmatprep.mubr.f32.mxu0 0.0
        %2681 = vmatmul.mubr.f32.gmra.mrb[0].mxu0 %v2593
        %v2682 = vpop.f32.mrb[0].mxu0
        %v2683 = vadd.f32 0.0, %v2682
        %v2684 = vpop.f32.mrb[0].mxu0
        %2685 = vmatprep.mubr.f32.mxu0 0.0
        %2686 = vmatmul.mubr.f32.gmra.mrb[0].mxu0 %v2596
        %v2687 = vpop.f32.mrb[0].mxu0
        %v2688 = vadd.f32 0.0, %v2687
        %v2689 = vpop.f32.mrb[0].mxu0
        %2690 = vmatprep.mubr.f32.mxu0 0.0
        %2691 = vmatmul.mubr.f32.gmra.mrb[0].mxu0 %v2599
        %v2692 = vpop.f32.mrb[0].mxu0
        %v2693 = vadd.f32 0.0, %v2692
        %v2694 = vpop.f32.mrb[0].mxu0
        %2695 = vmatprep.mubr.f32.mxu0 0.0
        %2696 = vmatmul.mubr.f32.gmra.mrb[0].mxu0 %v2602
        %v2697 = vpop.f32.mrb[0].mxu0
        %v2698 = vadd.f32 0.0, %v2697
        %v2699 = vpop.f32.mrb[0].mxu0
        %2700 = vmatprep.mubr.f32.mxu0 0.0
        %2701 = vmatmul.mubr.f32.gmra.mrb[0].mxu0 %v2605
        %v2702 = vpop.f32.mrb[0].mxu0
        %v2703 = vadd.f32 0.0, %v2702
        %v2704 = vpop.f32.mrb[0].mxu0
        %2705 = vmatprep.mubr.f32.mxu0 0.0
        %2706 = vmatmul.mubr.f32.gmra.mrb[0].mxu0 %v2608
        %v2707 = vpop.f32.mrb[0].mxu0
        %v2708 = vadd.f32 0.0, %v2707
        %v2709 = vpop.f32.mrb[0].mxu0
        %2710 = vmatprep.mubr.f32.mxu0 0.0
        %2711 = vmatmul.mubr.f32.gmra.mrb[0].mxu0 %v2611
        %v2712 = vpop.f32.mrb[0].mxu0
        %v2713 = vadd.f32 0.0, %v2712
        %v2714 = vpop.f32.mrb[0].mxu0
        %2715 = vmatprep.mubr.f32.mxu0 0.0
        %2716 = vmatmul.mubr.f32.gmra.mrb[0].mxu0 %v2614
        %v2717 = vpop.f32.mrb[0].mxu0
        %v2718 = vadd.f32 0.0, %v2717
        %v2719 = vpop.f32.mrb[0].mxu0
        %2720 = vdwg.mxu0
        %v2721 = vadd.f32 %v2544, %v2683
        %v2722 = vadd.f32 %v2549, %v2688
        %v2723 = vadd.f32 %v2554, %v2693
        %v2724 = vadd.f32 %v2559, %v2698
        %v2725 = vadd.f32 %v2564, %v2703
        %v2726 = vadd.f32 %v2569, %v2708
        %v2727 = vadd.f32 %v2574, %v2713
        %v2728 = vadd.f32 %v2579, %v2718
        %v2729 = vld [vmem:[%s2296] sm:$0xff]
        %v2730 = vld [vmem:[%s2296 + $0x10] sm:$0xff]
        %v2731 = vld [vmem:[%s2296 + $0x20] sm:$0xff]
        %v2732 = vld [vmem:[%s2296 + $0x30] sm:$0xff]
        %v2733 = vld [vmem:[%s2296 + $0x40] sm:$0xff]
        %v2734 = vld [vmem:[%s2296 + $0x50] sm:$0xff]
        %v2735 = vld [vmem:[%s2296 + $0x60] sm:$0xff]
        %v2736 = vld [vmem:[%s2296 + $0x70] sm:$0xff]
        %s2737 = scalar_lea.vmem [#allocation15], 24
        %v2738 = vld [vmem:[%s2737] sm:$0xff]
        %v2740 = vsel %vm562, %v2729, 0
        %v2743 = vsel %vm562, %v2730, 0
        %v2746 = vsel %vm562, %v2731, 0
        %v2749 = vsel %vm562, %v2732, 0
        %v2752 = vsel %vm562, %v2733, 0
        %v2755 = vsel %vm562, %v2734, 0
        %v2758 = vsel %vm562, %v2735, 0
        %v2761 = vsel %vm562, %v2736, 0
        %2763 = vmatprep.subr.mxu0 0.0
        %2764 = vmatpush1.msra.mxu0 %v2738
        %2765 = vmatprep.subr.mxu0 0.0
        %2766 = vmatpush1.msra.mxu0 0.0
        %2767 = vmatprep.subr.mxu0 0.0
        %2768 = vmatpush1.msra.mxu0 0.0
        %2769 = vmatprep.subr.mxu0 0.0
        %2770 = vmatpush1.msra.mxu0 0.0
        %2771 = vmatprep.subr.mxu0 0.0
        %2772 = vmatpush1.msra.mxu0 0.0
        %2773 = vmatprep.subr.mxu0 0.0
        %2774 = vmatpush1.msra.mxu0 0.0
        %2775 = vmatprep.subr.mxu0 0.0
        %2776 = vmatpush1.msra.mxu0 0.0
        %2777 = vmatprep.subr.mxu0 0.0
        %2778 = vmatpush1.msra.mxu0 0.0
        %2779 = vmatprep.subr.mxu0 0.0
        %2780 = vmatpush1.msra.mxu0 0.0
        %2781 = vmatprep.subr.mxu0 0.0
        %2782 = vmatpush1.msra.mxu0 0.0
        %2783 = vmatprep.subr.mxu0 0.0
        %2784 = vmatpush1.msra.mxu0 0.0
        %2785 = vmatprep.subr.mxu0 0.0
        %2786 = vmatpush1.msra.mxu0 0.0
        %2787 = vmatprep.subr.mxu0 0.0
        %2788 = vmatpush1.msra.mxu0 0.0
        %2789 = vmatprep.subr.mxu0 0.0
        %2790 = vmatpush1.msra.mxu0 0.0
        %2791 = vmatprep.subr.mxu0 0.0
        %2792 = vmatpush1.msra.mxu0 0.0
        %2793 = vmatprep.subr.mxu0 0.0
        %2794 = vmatpush1.msra.mxu0 0.0
        %2795 = vmatprep.subr.mxu0 0.0
        %2796 = vmatpush1.msra.mxu0 0.0
        %2797 = vmatprep.subr.mxu0 0.0
        %2798 = vmatpush1.msra.mxu0 0.0
        %2799 = vmatprep.subr.mxu0 0.0
        %2800 = vmatpush1.msra.mxu0 0.0
        %2801 = vmatprep.subr.mxu0 0.0
        %2802 = vmatpush1.msra.mxu0 0.0
        %2803 = vmatprep.subr.mxu0 0.0
        %2804 = vmatpush1.msra.mxu0 0.0
        %2805 = vmatprep.subr.mxu0 0.0
        %2806 = vmatpush1.msra.mxu0 0.0
        %2807 = vmatprep.subr.mxu0 0.0
        %2808 = vmatpush1.msra.mxu0 0.0
        %2809 = vmatprep.subr.mxu0 0.0
        %2810 = vmatpush1.msra.mxu0 0.0
        %2811 = vmatprep.subr.mxu0 0.0
        %2812 = vmatpush1.msra.mxu0 0.0
        %2813 = vmatprep.subr.mxu0 0.0
        %2814 = vmatpush1.msra.mxu0 0.0
        %2815 = vmatprep.subr.mxu0 0.0
        %2816 = vmatpush1.msra.mxu0 0.0
        %2817 = vmatprep.subr.mxu0 0.0
        %2818 = vmatpush1.msra.mxu0 0.0
        %2819 = vmatprep.subr.mxu0 0.0
        %2820 = vmatpush1.msra.mxu0 0.0
        %2821 = vmatprep.subr.mxu0 0.0
        %2822 = vmatpush1.msra.mxu0 0.0
        %2823 = vmatprep.subr.mxu0 0.0
        %2824 = vmatpush1.msra.mxu0 0.0
        %2825 = vmatprep.subr.mxu0 0.0
        %2826 = vmatpush1.msra.mxu0 0.0
        %2827 = vmatprep.mubr.f32.mxu0 0.0
        %2828 = vmatmul.mubr.f32.gmra.mrb[0].mxu0 %v2740
        %v2829 = vpop.f32.mrb[0].mxu0
        %v2830 = vadd.f32 0.0, %v2829
        %v2831 = vpop.f32.mrb[0].mxu0
        %2832 = vmatprep.mubr.f32.mxu0 0.0
        %2833 = vmatmul.mubr.f32.gmra.mrb[0].mxu0 %v2743
        %v2834 = vpop.f32.mrb[0].mxu0
        %v2835 = vadd.f32 0.0, %v2834
        %v2836 = vpop.f32.mrb[0].mxu0
        %2837 = vmatprep.mubr.f32.mxu0 0.0
        %2838 = vmatmul.mubr.f32.gmra.mrb[0].mxu0 %v2746
        %v2839 = vpop.f32.mrb[0].mxu0
        %v2840 = vadd.f32 0.0, %v2839
        %v2841 = vpop.f32.mrb[0].mxu0
        %2842 = vmatprep.mubr.f32.mxu0 0.0
        %2843 = vmatmul.mubr.f32.gmra.mrb[0].mxu0 %v2749
        %v2844 = vpop.f32.mrb[0].mxu0
        %v2845 = vadd.f32 0.0, %v2844
        %v2846 = vpop.f32.mrb[0].mxu0
        %2847 = vmatprep.mubr.f32.mxu0 0.0
        %2848 = vmatmul.mubr.f32.gmra.mrb[0].mxu0 %v2752
        %v2849 = vpop.f32.mrb[0].mxu0
        %v2850 = vadd.f32 0.0, %v2849
        %v2851 = vpop.f32.mrb[0].mxu0
        %2852 = vmatprep.mubr.f32.mxu0 0.0
        %2853 = vmatmul.mubr.f32.gmra.mrb[0].mxu0 %v2755
        %v2854 = vpop.f32.mrb[0].mxu0
        %v2855 = vadd.f32 0.0, %v2854
        %v2856 = vpop.f32.mrb[0].mxu0
        %2857 = vmatprep.mubr.f32.mxu0 0.0
        %2858 = vmatmul.mubr.f32.gmra.mrb[0].mxu0 %v2758
        %v2859 = vpop.f32.mrb[0].mxu0
        %v2860 = vadd.f32 0.0, %v2859
        %v2861 = vpop.f32.mrb[0].mxu0
        %2862 = vmatprep.mubr.f32.mxu0 0.0
        %2863 = vmatmul.mubr.f32.gmra.mrb[0].mxu0 %v2761
        %v2864 = vpop.f32.mrb[0].mxu0
        %v2865 = vadd.f32 0.0, %v2864
        %v2866 = vpop.f32.mrb[0].mxu0
        %2867 = vdwg.mxu0
        %v2868 = vadd.f32 %v2721, %v2830
        %v2869 = vadd.f32 %v2722, %v2835
        %v2870 = vadd.f32 %v2723, %v2840
        %v2871 = vadd.f32 %v2724, %v2845
        %v2872 = vadd.f32 %v2725, %v2850
        %v2873 = vadd.f32 %v2726, %v2855
        %v2874 = vadd.f32 %v2727, %v2860
        %v2875 = vadd.f32 %v2728, %v2865
        %v2876 = vld [vmem:[%s2296 + $0x1] sm:$0xff]
        %v2877 = vld [vmem:[%s2296 + $0x11] sm:$0xff]
        %v2878 = vld [vmem:[%s2296 + $0x21] sm:$0xff]
        %v2879 = vld [vmem:[%s2296 + $0x31] sm:$0xff]
        %v2880 = vld [vmem:[%s2296 + $0x41] sm:$0xff]
        %v2881 = vld [vmem:[%s2296 + $0x51] sm:$0xff]
        %v2882 = vld [vmem:[%s2296 + $0x61] sm:$0xff]
        %v2883 = vld [vmem:[%s2296 + $0x71] sm:$0xff]
        %s2884 = scalar_lea.vmem [#allocation15], 32
        %v2885 = vld [vmem:[%s2884] sm:$0xff]
        %v2887 = vsel %vm562, %v2876, 0
        %v2890 = vsel %vm562, %v2877, 0
        %v2893 = vsel %vm562, %v2878, 0
        %v2896 = vsel %vm562, %v2879, 0
        %v2899 = vsel %vm562, %v2880, 0
        %v2902 = vsel %vm562, %v2881, 0
        %v2905 = vsel %vm562, %v2882, 0
        %v2908 = vsel %vm562, %v2883, 0
        %2910 = vmatprep.subr.mxu0 0.0
        %2911 = vmatpush1.msra.mxu0 %v2885
        %2912 = vmatprep.subr.mxu0 0.0
        %2913 = vmatpush1.msra.mxu0 0.0
        %2914 = vmatprep.subr.mxu0 0.0
        %2915 = vmatpush1.msra.mxu0 0.0
        %2916 = vmatprep.subr.mxu0 0.0
        %2917 = vmatpush1.msra.mxu0 0.0
        %2918 = vmatprep.subr.mxu0 0.0
        %2919 = vmatpush1.msra.mxu0 0.0
        %2920 = vmatprep.subr.mxu0 0.0
        %2921 = vmatpush1.msra.mxu0 0.0
        %2922 = vmatprep.subr.mxu0 0.0
        %2923 = vmatpush1.msra.mxu0 0.0
        %2924 = vmatprep.subr.mxu0 0.0
        %2925 = vmatpush1.msra.mxu0 0.0
        %2926 = vmatprep.subr.mxu0 0.0
        %2927 = vmatpush1.msra.mxu0 0.0
        %2928 = vmatprep.subr.mxu0 0.0
        %2929 = vmatpush1.msra.mxu0 0.0
        %2930 = vmatprep.subr.mxu0 0.0
        %2931 = vmatpush1.msra.mxu0 0.0
        %2932 = vmatprep.subr.mxu0 0.0
        %2933 = vmatpush1.msra.mxu0 0.0
        %2934 = vmatprep.subr.mxu0 0.0
        %2935 = vmatpush1.msra.mxu0 0.0
        %2936 = vmatprep.subr.mxu0 0.0
        %2937 = vmatpush1.msra.mxu0 0.0
        %2938 = vmatprep.subr.mxu0 0.0
        %2939 = vmatpush1.msra.mxu0 0.0
        %2940 = vmatprep.subr.mxu0 0.0
        %2941 = vmatpush1.msra.mxu0 0.0
        %2942 = vmatprep.subr.mxu0 0.0
        %2943 = vmatpush1.msra.mxu0 0.0
        %2944 = vmatprep.subr.mxu0 0.0
        %2945 = vmatpush1.msra.mxu0 0.0
        %2946 = vmatprep.subr.mxu0 0.0
        %2947 = vmatpush1.msra.mxu0 0.0
        %2948 = vmatprep.subr.mxu0 0.0
        %2949 = vmatpush1.msra.mxu0 0.0
        %2950 = vmatprep.subr.mxu0 0.0
        %2951 = vmatpush1.msra.mxu0 0.0
        %2952 = vmatprep.subr.mxu0 0.0
        %2953 = vmatpush1.msra.mxu0 0.0
        %2954 = vmatprep.subr.mxu0 0.0
        %2955 = vmatpush1.msra.mxu0 0.0
        %2956 = vmatprep.subr.mxu0 0.0
        %2957 = vmatpush1.msra.mxu0 0.0
        %2958 = vmatprep.subr.mxu0 0.0
        %2959 = vmatpush1.msra.mxu0 0.0
        %2960 = vmatprep.subr.mxu0 0.0
        %2961 = vmatpush1.msra.mxu0 0.0
        %2962 = vmatprep.subr.mxu0 0.0
        %2963 = vmatpush1.msra.mxu0 0.0
        %2964 = vmatprep.subr.mxu0 0.0
        %2965 = vmatpush1.msra.mxu0 0.0
        %2966 = vmatprep.subr.mxu0 0.0
        %2967 = vmatpush1.msra.mxu0 0.0
        %2968 = vmatprep.subr.mxu0 0.0
        %2969 = vmatpush1.msra.mxu0 0.0
        %2970 = vmatprep.subr.mxu0 0.0
        %2971 = vmatpush1.msra.mxu0 0.0
        %2972 = vmatprep.subr.mxu0 0.0
        %2973 = vmatpush1.msra.mxu0 0.0
        %2974 = vmatprep.mubr.f32.mxu0 0.0
        %2975 = vmatmul.mubr.f32.gmra.mrb[0].mxu0 %v2887
        %v2976 = vpop.f32.mrb[0].mxu0
        %v2977 = vadd.f32 0.0, %v2976
        %v2978 = vpop.f32.mrb[0].mxu0
        %2979 = vmatprep.mubr.f32.mxu0 0.0
        %2980 = vmatmul.mubr.f32.gmra.mrb[0].mxu0 %v2890
        %v2981 = vpop.f32.mrb[0].mxu0
        %v2982 = vadd.f32 0.0, %v2981
        %v2983 = vpop.f32.mrb[0].mxu0
        %2984 = vmatprep.mubr.f32.mxu0 0.0
        %2985 = vmatmul.mubr.f32.gmra.mrb[0].mxu0 %v2893
        %v2986 = vpop.f32.mrb[0].mxu0
        %v2987 = vadd.f32 0.0, %v2986
        %v2988 = vpop.f32.mrb[0].mxu0
        %2989 = vmatprep.mubr.f32.mxu0 0.0
        %2990 = vmatmul.mubr.f32.gmra.mrb[0].mxu0 %v2896
        %v2991 = vpop.f32.mrb[0].mxu0
        %v2992 = vadd.f32 0.0, %v2991
        %v2993 = vpop.f32.mrb[0].mxu0
        %2994 = vmatprep.mubr.f32.mxu0 0.0
        %2995 = vmatmul.mubr.f32.gmra.mrb[0].mxu0 %v2899
        %v2996 = vpop.f32.mrb[0].mxu0
        %v2997 = vadd.f32 0.0, %v2996
        %v2998 = vpop.f32.mrb[0].mxu0
        %2999 = vmatprep.mubr.f32.mxu0 0.0
        %3000 = vmatmul.mubr.f32.gmra.mrb[0].mxu0 %v2902
        %v3001 = vpop.f32.mrb[0].mxu0
        %v3002 = vadd.f32 0.0, %v3001
        %v3003 = vpop.f32.mrb[0].mxu0
        %3004 = vmatprep.mubr.f32.mxu0 0.0
        %3005 = vmatmul.mubr.f32.gmra.mrb[0].mxu0 %v2905
        %v3006 = vpop.f32.mrb[0].mxu0
        %v3007 = vadd.f32 0.0, %v3006
        %v3008 = vpop.f32.mrb[0].mxu0
        %3009 = vmatprep.mubr.f32.mxu0 0.0
        %3010 = vmatmul.mubr.f32.gmra.mrb[0].mxu0 %v2908
        %v3011 = vpop.f32.mrb[0].mxu0
        %v3012 = vadd.f32 0.0, %v3011
        %v3013 = vpop.f32.mrb[0].mxu0
        %3014 = vdwg.mxu0
        %v3015 = vadd.f32 %v2868, %v2977
        %v3016 = vadd.f32 %v2869, %v2982
        %v3017 = vadd.f32 %v2870, %v2987
        %v3018 = vadd.f32 %v2871, %v2992
        %v3019 = vadd.f32 %v2872, %v2997
        %v3020 = vadd.f32 %v2873, %v3002
        %v3021 = vadd.f32 %v2874, %v3007
        %v3022 = vadd.f32 %v2875, %v3012
        %v3023 = vld [vmem:[%s2296 + $0x2] sm:$0xff]
        %v3024 = vld [vmem:[%s2296 + $0x12] sm:$0xff]
        %v3025 = vld [vmem:[%s2296 + $0x22] sm:$0xff]
        %v3026 = vld [vmem:[%s2296 + $0x32] sm:$0xff]
        %v3027 = vld [vmem:[%s2296 + $0x42] sm:$0xff]
        %v3028 = vld [vmem:[%s2296 + $0x52] sm:$0xff]
        %v3029 = vld [vmem:[%s2296 + $0x62] sm:$0xff]
        %v3030 = vld [vmem:[%s2296 + $0x72] sm:$0xff]
        %s3031 = scalar_lea.vmem [#allocation15], 40
        %v3032 = vld [vmem:[%s3031] sm:$0xff]
        %v3034 = vsel %vm562, %v3023, 0
        %v3037 = vsel %vm562, %v3024, 0
        %v3040 = vsel %vm562, %v3025, 0
        %v3043 = vsel %vm562, %v3026, 0
        %v3046 = vsel %vm562, %v3027, 0
        %v3049 = vsel %vm562, %v3028, 0
        %v3052 = vsel %vm562, %v3029, 0
        %v3055 = vsel %vm562, %v3030, 0
        %3057 = vmatprep.subr.mxu0 0.0
        %3058 = vmatpush1.msra.mxu0 %v3032
        %3059 = vmatprep.subr.mxu0 0.0
        %3060 = vmatpush1.msra.mxu0 0.0
        %3061 = vmatprep.subr.mxu0 0.0
        %3062 = vmatpush1.msra.mxu0 0.0
        %3063 = vmatprep.subr.mxu0 0.0
        %3064 = vmatpush1.msra.mxu0 0.0
        %3065 = vmatprep.subr.mxu0 0.0
        %3066 = vmatpush1.msra.mxu0 0.0
        %3067 = vmatprep.subr.mxu0 0.0
        %3068 = vmatpush1.msra.mxu0 0.0
        %3069 = vmatprep.subr.mxu0 0.0
        %3070 = vmatpush1.msra.mxu0 0.0
        %3071 = vmatprep.subr.mxu0 0.0
        %3072 = vmatpush1.msra.mxu0 0.0
        %3073 = vmatprep.subr.mxu0 0.0
        %3074 = vmatpush1.msra.mxu0 0.0
        %3075 = vmatprep.subr.mxu0 0.0
        %3076 = vmatpush1.msra.mxu0 0.0
        %3077 = vmatprep.subr.mxu0 0.0
        %3078 = vmatpush1.msra.mxu0 0.0
        %3079 = vmatprep.subr.mxu0 0.0
        %3080 = vmatpush1.msra.mxu0 0.0
        %3081 = vmatprep.subr.mxu0 0.0
        %3082 = vmatpush1.msra.mxu0 0.0
        %3083 = vmatprep.subr.mxu0 0.0
        %3084 = vmatpush1.msra.mxu0 0.0
        %3085 = vmatprep.subr.mxu0 0.0
        %3086 = vmatpush1.msra.mxu0 0.0
        %3087 = vmatprep.subr.mxu0 0.0
        %3088 = vmatpush1.msra.mxu0 0.0
        %3089 = vmatprep.subr.mxu0 0.0
        %3090 = vmatpush1.msra.mxu0 0.0
        %3091 = vmatprep.subr.mxu0 0.0
        %3092 = vmatpush1.msra.mxu0 0.0
        %3093 = vmatprep.subr.mxu0 0.0
        %3094 = vmatpush1.msra.mxu0 0.0
        %3095 = vmatprep.subr.mxu0 0.0
        %3096 = vmatpush1.msra.mxu0 0.0
        %3097 = vmatprep.subr.mxu0 0.0
        %3098 = vmatpush1.msra.mxu0 0.0
        %3099 = vmatprep.subr.mxu0 0.0
        %3100 = vmatpush1.msra.mxu0 0.0
        %3101 = vmatprep.subr.mxu0 0.0
        %3102 = vmatpush1.msra.mxu0 0.0
        %3103 = vmatprep.subr.mxu0 0.0
        %3104 = vmatpush1.msra.mxu0 0.0
        %3105 = vmatprep.subr.mxu0 0.0
        %3106 = vmatpush1.msra.mxu0 0.0
        %3107 = vmatprep.subr.mxu0 0.0
        %3108 = vmatpush1.msra.mxu0 0.0
        %3109 = vmatprep.subr.mxu0 0.0
        %3110 = vmatpush1.msra.mxu0 0.0
        %3111 = vmatprep.subr.mxu0 0.0
        %3112 = vmatpush1.msra.mxu0 0.0
        %3113 = vmatprep.subr.mxu0 0.0
        %3114 = vmatpush1.msra.mxu0 0.0
        %3115 = vmatprep.subr.mxu0 0.0
        %3116 = vmatpush1.msra.mxu0 0.0
        %3117 = vmatprep.subr.mxu0 0.0
        %3118 = vmatpush1.msra.mxu0 0.0
        %3119 = vmatprep.subr.mxu0 0.0
        %3120 = vmatpush1.msra.mxu0 0.0
        %3121 = vmatprep.mubr.f32.mxu0 0.0
        %3122 = vmatmul.mubr.f32.gmra.mrb[0].mxu0 %v3034
        %v3123 = vpop.f32.mrb[0].mxu0
        %v3124 = vadd.f32 0.0, %v3123
        %v3125 = vpop.f32.mrb[0].mxu0
        %3126 = vmatprep.mubr.f32.mxu0 0.0
        %3127 = vmatmul.mubr.f32.gmra.mrb[0].mxu0 %v3037
        %v3128 = vpop.f32.mrb[0].mxu0
        %v3129 = vadd.f32 0.0, %v3128
        %v3130 = vpop.f32.mrb[0].mxu0
        %3131 = vmatprep.mubr.f32.mxu0 0.0
        %3132 = vmatmul.mubr.f32.gmra.mrb[0].mxu0 %v3040
        %v3133 = vpop.f32.mrb[0].mxu0
        %v3134 = vadd.f32 0.0, %v3133
        %v3135 = vpop.f32.mrb[0].mxu0
        %3136 = vmatprep.mubr.f32.mxu0 0.0
        %3137 = vmatmul.mubr.f32.gmra.mrb[0].mxu0 %v3043
        %v3138 = vpop.f32.mrb[0].mxu0
        %v3139 = vadd.f32 0.0, %v3138
        %v3140 = vpop.f32.mrb[0].mxu0
        %3141 = vmatprep.mubr.f32.mxu0 0.0
        %3142 = vmatmul.mubr.f32.gmra.mrb[0].mxu0 %v3046
        %v3143 = vpop.f32.mrb[0].mxu0
        %v3144 = vadd.f32 0.0, %v3143
        %v3145 = vpop.f32.mrb[0].mxu0
        %3146 = vmatprep.mubr.f32.mxu0 0.0
        %3147 = vmatmul.mubr.f32.gmra.mrb[0].mxu0 %v3049
        %v3148 = vpop.f32.mrb[0].mxu0
        %v3149 = vadd.f32 0.0, %v3148
        %v3150 = vpop.f32.mrb[0].mxu0
        %3151 = vmatprep.mubr.f32.mxu0 0.0
        %3152 = vmatmul.mubr.f32.gmra.mrb[0].mxu0 %v3052
        %v3153 = vpop.f32.mrb[0].mxu0
        %v3154 = vadd.f32 0.0, %v3153
        %v3155 = vpop.f32.mrb[0].mxu0
        %3156 = vmatprep.mubr.f32.mxu0 0.0
        %3157 = vmatmul.mubr.f32.gmra.mrb[0].mxu0 %v3055
        %v3158 = vpop.f32.mrb[0].mxu0
        %v3159 = vadd.f32 0.0, %v3158
        %v3160 = vpop.f32.mrb[0].mxu0
        %3161 = vdwg.mxu0
        %v3162 = vadd.f32 %v3015, %v3124
        %v3163 = vadd.f32 %v3016, %v3129
        %v3164 = vadd.f32 %v3017, %v3134
        %v3165 = vadd.f32 %v3018, %v3139
        %v3166 = vadd.f32 %v3019, %v3144
        %v3167 = vadd.f32 %v3020, %v3149
        %v3168 = vadd.f32 %v3021, %v3154
        %v3169 = vadd.f32 %v3022, %v3159
        %s3170 = scalar_lea.vmem [#allocation3], 32
        %v3171 = vld [vmem:[%s3170] sm:$0xff]
        %v3172 = vld [vmem:[%s3170 + $0x10] sm:$0xff]
        %v3173 = vld [vmem:[%s3170 + $0x20] sm:$0xff]
        %v3174 = vld [vmem:[%s3170 + $0x30] sm:$0xff]
        %v3175 = vld [vmem:[%s3170 + $0x40] sm:$0xff]
        %v3176 = vld [vmem:[%s3170 + $0x50] sm:$0xff]
        %v3177 = vld [vmem:[%s3170 + $0x60] sm:$0xff]
        %v3178 = vld [vmem:[%s3170 + $0x70] sm:$0xff]
        %s3179 = scalar_lea.vmem [#allocation15], 48
        %v3180 = vld [vmem:[%s3179] sm:$0xff]
        %v3182 = vsel %vm562, %v3171, 0
        %v3185 = vsel %vm562, %v3172, 0
        %v3188 = vsel %vm562, %v3173, 0
        %v3191 = vsel %vm562, %v3174, 0
        %v3194 = vsel %vm562, %v3175, 0
        %v3197 = vsel %vm562, %v3176, 0
        %v3200 = vsel %vm562, %v3177, 0
        %v3203 = vsel %vm562, %v3178, 0
        %3205 = vmatprep.subr.mxu0 0.0
        %3206 = vmatpush1.msra.mxu0 %v3180
        %3207 = vmatprep.subr.mxu0 0.0
        %3208 = vmatpush1.msra.mxu0 0.0
        %3209 = vmatprep.subr.mxu0 0.0
        %3210 = vmatpush1.msra.mxu0 0.0
        %3211 = vmatprep.subr.mxu0 0.0
        %3212 = vmatpush1.msra.mxu0 0.0
        %3213 = vmatprep.subr.mxu0 0.0
        %3214 = vmatpush1.msra.mxu0 0.0
        %3215 = vmatprep.subr.mxu0 0.0
        %3216 = vmatpush1.msra.mxu0 0.0
        %3217 = vmatprep.subr.mxu0 0.0
        %3218 = vmatpush1.msra.mxu0 0.0
        %3219 = vmatprep.subr.mxu0 0.0
        %3220 = vmatpush1.msra.mxu0 0.0
        %3221 = vmatprep.subr.mxu0 0.0
        %3222 = vmatpush1.msra.mxu0 0.0
        %3223 = vmatprep.subr.mxu0 0.0
        %3224 = vmatpush1.msra.mxu0 0.0
        %3225 = vmatprep.subr.mxu0 0.0
        %3226 = vmatpush1.msra.mxu0 0.0
        %3227 = vmatprep.subr.mxu0 0.0
        %3228 = vmatpush1.msra.mxu0 0.0
        %3229 = vmatprep.subr.mxu0 0.0
        %3230 = vmatpush1.msra.mxu0 0.0
        %3231 = vmatprep.subr.mxu0 0.0
        %3232 = vmatpush1.msra.mxu0 0.0
        %3233 = vmatprep.subr.mxu0 0.0
        %3234 = vmatpush1.msra.mxu0 0.0
        %3235 = vmatprep.subr.mxu0 0.0
        %3236 = vmatpush1.msra.mxu0 0.0
        %3237 = vmatprep.subr.mxu0 0.0
        %3238 = vmatpush1.msra.mxu0 0.0
        %3239 = vmatprep.subr.mxu0 0.0
        %3240 = vmatpush1.msra.mxu0 0.0
        %3241 = vmatprep.subr.mxu0 0.0
        %3242 = vmatpush1.msra.mxu0 0.0
        %3243 = vmatprep.subr.mxu0 0.0
        %3244 = vmatpush1.msra.mxu0 0.0
        %3245 = vmatprep.subr.mxu0 0.0
        %3246 = vmatpush1.msra.mxu0 0.0
        %3247 = vmatprep.subr.mxu0 0.0
        %3248 = vmatpush1.msra.mxu0 0.0
        %3249 = vmatprep.subr.mxu0 0.0
        %3250 = vmatpush1.msra.mxu0 0.0
        %3251 = vmatprep.subr.mxu0 0.0
        %3252 = vmatpush1.msra.mxu0 0.0
        %3253 = vmatprep.subr.mxu0 0.0
        %3254 = vmatpush1.msra.mxu0 0.0
        %3255 = vmatprep.subr.mxu0 0.0
        %3256 = vmatpush1.msra.mxu0 0.0
        %3257 = vmatprep.subr.mxu0 0.0
        %3258 = vmatpush1.msra.mxu0 0.0
        %3259 = vmatprep.subr.mxu0 0.0
        %3260 = vmatpush1.msra.mxu0 0.0
        %3261 = vmatprep.subr.mxu0 0.0
        %3262 = vmatpush1.msra.mxu0 0.0
        %3263 = vmatprep.subr.mxu0 0.0
        %3264 = vmatpush1.msra.mxu0 0.0
        %3265 = vmatprep.subr.mxu0 0.0
        %3266 = vmatpush1.msra.mxu0 0.0
        %3267 = vmatprep.subr.mxu0 0.0
        %3268 = vmatpush1.msra.mxu0 0.0
        %3269 = vmatprep.mubr.f32.mxu0 0.0
        %3270 = vmatmul.mubr.f32.gmra.mrb[0].mxu0 %v3182
        %v3271 = vpop.f32.mrb[0].mxu0
        %v3272 = vadd.f32 0.0, %v3271
        %v3273 = vpop.f32.mrb[0].mxu0
        %3274 = vmatprep.mubr.f32.mxu0 0.0
        %3275 = vmatmul.mubr.f32.gmra.mrb[0].mxu0 %v3185
        %v3276 = vpop.f32.mrb[0].mxu0
        %v3277 = vadd.f32 0.0, %v3276
        %v3278 = vpop.f32.mrb[0].mxu0
        %3279 = vmatprep.mubr.f32.mxu0 0.0
        %3280 = vmatmul.mubr.f32.gmra.mrb[0].mxu0 %v3188
        %v3281 = vpop.f32.mrb[0].mxu0
        %v3282 = vadd.f32 0.0, %v3281
        %v3283 = vpop.f32.mrb[0].mxu0
        %3284 = vmatprep.mubr.f32.mxu0 0.0
        %3285 = vmatmul.mubr.f32.gmra.mrb[0].mxu0 %v3191
        %v3286 = vpop.f32.mrb[0].mxu0
        %v3287 = vadd.f32 0.0, %v3286
        %v3288 = vpop.f32.mrb[0].mxu0
        %3289 = vmatprep.mubr.f32.mxu0 0.0
        %3290 = vmatmul.mubr.f32.gmra.mrb[0].mxu0 %v3194
        %v3291 = vpop.f32.mrb[0].mxu0
        %v3292 = vadd.f32 0.0, %v3291
        %v3293 = vpop.f32.mrb[0].mxu0
        %3294 = vmatprep.mubr.f32.mxu0 0.0
        %3295 = vmatmul.mubr.f32.gmra.mrb[0].mxu0 %v3197
        %v3296 = vpop.f32.mrb[0].mxu0
        %v3297 = vadd.f32 0.0, %v3296
        %v3298 = vpop.f32.mrb[0].mxu0
        %3299 = vmatprep.mubr.f32.mxu0 0.0
        %3300 = vmatmul.mubr.f32.gmra.mrb[0].mxu0 %v3200
        %v3301 = vpop.f32.mrb[0].mxu0
        %v3302 = vadd.f32 0.0, %v3301
        %v3303 = vpop.f32.mrb[0].mxu0
        %3304 = vmatprep.mubr.f32.mxu0 0.0
        %3305 = vmatmul.mubr.f32.gmra.mrb[0].mxu0 %v3203
        %v3306 = vpop.f32.mrb[0].mxu0
        %v3307 = vadd.f32 0.0, %v3306
        %v3308 = vpop.f32.mrb[0].mxu0
        %3309 = vdwg.mxu0
        %v3310 = vadd.f32 %v3162, %v3272
        %v3311 = vadd.f32 %v3163, %v3277
        %v3312 = vadd.f32 %v3164, %v3282
        %v3313 = vadd.f32 %v3165, %v3287
        %v3314 = vadd.f32 %v3166, %v3292
        %v3315 = vadd.f32 %v3167, %v3297
        %v3316 = vadd.f32 %v3168, %v3302
        %v3317 = vadd.f32 %v3169, %v3307
        %v3318 = vld [vmem:[%s3170 + $0x1] sm:$0xff]
        %v3319 = vld [vmem:[%s3170 + $0x11] sm:$0xff]
        %v3320 = vld [vmem:[%s3170 + $0x21] sm:$0xff]
        %v3321 = vld [vmem:[%s3170 + $0x31] sm:$0xff]
        %v3322 = vld [vmem:[%s3170 + $0x41] sm:$0xff]
        %v3323 = vld [vmem:[%s3170 + $0x51] sm:$0xff]
        %v3324 = vld [vmem:[%s3170 + $0x61] sm:$0xff]
        %v3325 = vld [vmem:[%s3170 + $0x71] sm:$0xff]
        %s3326 = scalar_lea.vmem [#allocation15], 56
        %v3327 = vld [vmem:[%s3326] sm:$0xff]
        %v3329 = vsel %vm562, %v3318, 0
        %v3332 = vsel %vm562, %v3319, 0
        %v3335 = vsel %vm562, %v3320, 0
        %v3338 = vsel %vm562, %v3321, 0
        %v3341 = vsel %vm562, %v3322, 0
        %v3344 = vsel %vm562, %v3323, 0
        %v3347 = vsel %vm562, %v3324, 0
        %v3350 = vsel %vm562, %v3325, 0
        %3352 = vmatprep.subr.mxu0 0.0
        %3353 = vmatpush1.msra.mxu0 %v3327
        %3354 = vmatprep.subr.mxu0 0.0
        %3355 = vmatpush1.msra.mxu0 0.0
        %3356 = vmatprep.subr.mxu0 0.0
        %3357 = vmatpush1.msra.mxu0 0.0
        %3358 = vmatprep.subr.mxu0 0.0
        %3359 = vmatpush1.msra.mxu0 0.0
        %3360 = vmatprep.subr.mxu0 0.0
        %3361 = vmatpush1.msra.mxu0 0.0
        %3362 = vmatprep.subr.mxu0 0.0
        %3363 = vmatpush1.msra.mxu0 0.0
        %3364 = vmatprep.subr.mxu0 0.0
        %3365 = vmatpush1.msra.mxu0 0.0
        %3366 = vmatprep.subr.mxu0 0.0
        %3367 = vmatpush1.msra.mxu0 0.0
        %3368 = vmatprep.subr.mxu0 0.0
        %3369 = vmatpush1.msra.mxu0 0.0
        %3370 = vmatprep.subr.mxu0 0.0
        %3371 = vmatpush1.msra.mxu0 0.0
        %3372 = vmatprep.subr.mxu0 0.0
        %3373 = vmatpush1.msra.mxu0 0.0
        %3374 = vmatprep.subr.mxu0 0.0
        %3375 = vmatpush1.msra.mxu0 0.0
        %3376 = vmatprep.subr.mxu0 0.0
        %3377 = vmatpush1.msra.mxu0 0.0
        %3378 = vmatprep.subr.mxu0 0.0
        %3379 = vmatpush1.msra.mxu0 0.0
        %3380 = vmatprep.subr.mxu0 0.0
        %3381 = vmatpush1.msra.mxu0 0.0
        %3382 = vmatprep.subr.mxu0 0.0
        %3383 = vmatpush1.msra.mxu0 0.0
        %3384 = vmatprep.subr.mxu0 0.0
        %3385 = vmatpush1.msra.mxu0 0.0
        %3386 = vmatprep.subr.mxu0 0.0
        %3387 = vmatpush1.msra.mxu0 0.0
        %3388 = vmatprep.subr.mxu0 0.0
        %3389 = vmatpush1.msra.mxu0 0.0
        %3390 = vmatprep.subr.mxu0 0.0
        %3391 = vmatpush1.msra.mxu0 0.0
        %3392 = vmatprep.subr.mxu0 0.0
        %3393 = vmatpush1.msra.mxu0 0.0
        %3394 = vmatprep.subr.mxu0 0.0
        %3395 = vmatpush1.msra.mxu0 0.0
        %3396 = vmatprep.subr.mxu0 0.0
        %3397 = vmatpush1.msra.mxu0 0.0
        %3398 = vmatprep.subr.mxu0 0.0
        %3399 = vmatpush1.msra.mxu0 0.0
        %3400 = vmatprep.subr.mxu0 0.0
        %3401 = vmatpush1.msra.mxu0 0.0
        %3402 = vmatprep.subr.mxu0 0.0
        %3403 = vmatpush1.msra.mxu0 0.0
        %3404 = vmatprep.subr.mxu0 0.0
        %3405 = vmatpush1.msra.mxu0 0.0
        %3406 = vmatprep.subr.mxu0 0.0
        %3407 = vmatpush1.msra.mxu0 0.0
        %3408 = vmatprep.subr.mxu0 0.0
        %3409 = vmatpush1.msra.mxu0 0.0
        %3410 = vmatprep.subr.mxu0 0.0
        %3411 = vmatpush1.msra.mxu0 0.0
        %3412 = vmatprep.subr.mxu0 0.0
        %3413 = vmatpush1.msra.mxu0 0.0
        %3414 = vmatprep.subr.mxu0 0.0
        %3415 = vmatpush1.msra.mxu0 0.0
        %3416 = vmatprep.mubr.f32.mxu0 0.0
        %3417 = vmatmul.mubr.f32.gmra.mrb[0].mxu0 %v3329
        %v3418 = vpop.f32.mrb[0].mxu0
        %v3419 = vadd.f32 0.0, %v3418
        %v3420 = vpop.f32.mrb[0].mxu0
        %3421 = vmatprep.mubr.f32.mxu0 0.0
        %3422 = vmatmul.mubr.f32.gmra.mrb[0].mxu0 %v3332
        %v3423 = vpop.f32.mrb[0].mxu0
        %v3424 = vadd.f32 0.0, %v3423
        %v3425 = vpop.f32.mrb[0].mxu0
        %3426 = vmatprep.mubr.f32.mxu0 0.0
        %3427 = vmatmul.mubr.f32.gmra.mrb[0].mxu0 %v3335
        %v3428 = vpop.f32.mrb[0].mxu0
        %v3429 = vadd.f32 0.0, %v3428
        %v3430 = vpop.f32.mrb[0].mxu0
        %3431 = vmatprep.mubr.f32.mxu0 0.0
        %3432 = vmatmul.mubr.f32.gmra.mrb[0].mxu0 %v3338
        %v3433 = vpop.f32.mrb[0].mxu0
        %v3434 = vadd.f32 0.0, %v3433
        %v3435 = vpop.f32.mrb[0].mxu0
        %3436 = vmatprep.mubr.f32.mxu0 0.0
        %3437 = vmatmul.mubr.f32.gmra.mrb[0].mxu0 %v3341
        %v3438 = vpop.f32.mrb[0].mxu0
        %v3439 = vadd.f32 0.0, %v3438
        %v3440 = vpop.f32.mrb[0].mxu0
        %3441 = vmatprep.mubr.f32.mxu0 0.0
        %3442 = vmatmul.mubr.f32.gmra.mrb[0].mxu0 %v3344
        %v3443 = vpop.f32.mrb[0].mxu0
        %v3444 = vadd.f32 0.0, %v3443
        %v3445 = vpop.f32.mrb[0].mxu0
        %3446 = vmatprep.mubr.f32.mxu0 0.0
        %3447 = vmatmul.mubr.f32.gmra.mrb[0].mxu0 %v3347
        %v3448 = vpop.f32.mrb[0].mxu0
        %v3449 = vadd.f32 0.0, %v3448
        %v3450 = vpop.f32.mrb[0].mxu0
        %3451 = vmatprep.mubr.f32.mxu0 0.0
        %3452 = vmatmul.mubr.f32.gmra.mrb[0].mxu0 %v3350
        %v3453 = vpop.f32.mrb[0].mxu0
        %v3454 = vadd.f32 0.0, %v3453
        %v3455 = vpop.f32.mrb[0].mxu0
        %3456 = vdwg.mxu0
        %v3457 = vadd.f32 %v3310, %v3419
        %v3458 = vadd.f32 %v3311, %v3424
        %v3459 = vadd.f32 %v3312, %v3429
        %v3460 = vadd.f32 %v3313, %v3434
        %v3461 = vadd.f32 %v3314, %v3439
        %v3462 = vadd.f32 %v3315, %v3444
        %v3463 = vadd.f32 %v3316, %v3449
        %v3464 = vadd.f32 %v3317, %v3454
        %v3465 = vld [vmem:[%s3170 + $0x2] sm:$0xff]
        %v3466 = vld [vmem:[%s3170 + $0x12] sm:$0xff]
        %v3467 = vld [vmem:[%s3170 + $0x22] sm:$0xff]
        %v3468 = vld [vmem:[%s3170 + $0x32] sm:$0xff]
        %v3469 = vld [vmem:[%s3170 + $0x42] sm:$0xff]
        %v3470 = vld [vmem:[%s3170 + $0x52] sm:$0xff]
        %v3471 = vld [vmem:[%s3170 + $0x62] sm:$0xff]
        %v3472 = vld [vmem:[%s3170 + $0x72] sm:$0xff]
        %s3473 = scalar_lea.vmem [#allocation15], 64
        %v3474 = vld [vmem:[%s3473] sm:$0xff]
        %v3476 = vsel %vm562, %v3465, 0
        %v3479 = vsel %vm562, %v3466, 0
        %v3482 = vsel %vm562, %v3467, 0
        %v3485 = vsel %vm562, %v3468, 0
        %v3488 = vsel %vm562, %v3469, 0
        %v3491 = vsel %vm562, %v3470, 0
        %v3494 = vsel %vm562, %v3471, 0
        %v3497 = vsel %vm562, %v3472, 0
        %3499 = vmatprep.subr.mxu0 0.0
        %3500 = vmatpush1.msra.mxu0 %v3474
        %3501 = vmatprep.subr.mxu0 0.0
        %3502 = vmatpush1.msra.mxu0 0.0
        %3503 = vmatprep.subr.mxu0 0.0
        %3504 = vmatpush1.msra.mxu0 0.0
        %3505 = vmatprep.subr.mxu0 0.0
        %3506 = vmatpush1.msra.mxu0 0.0
        %3507 = vmatprep.subr.mxu0 0.0
        %3508 = vmatpush1.msra.mxu0 0.0
        %3509 = vmatprep.subr.mxu0 0.0
        %3510 = vmatpush1.msra.mxu0 0.0
        %3511 = vmatprep.subr.mxu0 0.0
        %3512 = vmatpush1.msra.mxu0 0.0
        %3513 = vmatprep.subr.mxu0 0.0
        %3514 = vmatpush1.msra.mxu0 0.0
        %3515 = vmatprep.subr.mxu0 0.0
        %3516 = vmatpush1.msra.mxu0 0.0
        %3517 = vmatprep.subr.mxu0 0.0
        %3518 = vmatpush1.msra.mxu0 0.0
        %3519 = vmatprep.subr.mxu0 0.0
        %3520 = vmatpush1.msra.mxu0 0.0
        %3521 = vmatprep.subr.mxu0 0.0
        %3522 = vmatpush1.msra.mxu0 0.0
        %3523 = vmatprep.subr.mxu0 0.0
        %3524 = vmatpush1.msra.mxu0 0.0
        %3525 = vmatprep.subr.mxu0 0.0
        %3526 = vmatpush1.msra.mxu0 0.0
        %3527 = vmatprep.subr.mxu0 0.0
        %3528 = vmatpush1.msra.mxu0 0.0
        %3529 = vmatprep.subr.mxu0 0.0
        %3530 = vmatpush1.msra.mxu0 0.0
        %3531 = vmatprep.subr.mxu0 0.0
        %3532 = vmatpush1.msra.mxu0 0.0
        %3533 = vmatprep.subr.mxu0 0.0
        %3534 = vmatpush1.msra.mxu0 0.0
        %3535 = vmatprep.subr.mxu0 0.0
        %3536 = vmatpush1.msra.mxu0 0.0
        %3537 = vmatprep.subr.mxu0 0.0
        %3538 = vmatpush1.msra.mxu0 0.0
        %3539 = vmatprep.subr.mxu0 0.0
        %3540 = vmatpush1.msra.mxu0 0.0
        %3541 = vmatprep.subr.mxu0 0.0
        %3542 = vmatpush1.msra.mxu0 0.0
        %3543 = vmatprep.subr.mxu0 0.0
        %3544 = vmatpush1.msra.mxu0 0.0
        %3545 = vmatprep.subr.mxu0 0.0
        %3546 = vmatpush1.msra.mxu0 0.0
        %3547 = vmatprep.subr.mxu0 0.0
        %3548 = vmatpush1.msra.mxu0 0.0
        %3549 = vmatprep.subr.mxu0 0.0
        %3550 = vmatpush1.msra.mxu0 0.0
        %3551 = vmatprep.subr.mxu0 0.0
        %3552 = vmatpush1.msra.mxu0 0.0
        %3553 = vmatprep.subr.mxu0 0.0
        %3554 = vmatpush1.msra.mxu0 0.0
        %3555 = vmatprep.subr.mxu0 0.0
        %3556 = vmatpush1.msra.mxu0 0.0
        %3557 = vmatprep.subr.mxu0 0.0
        %3558 = vmatpush1.msra.mxu0 0.0
        %3559 = vmatprep.subr.mxu0 0.0
        %3560 = vmatpush1.msra.mxu0 0.0
        %3561 = vmatprep.subr.mxu0 0.0
        %3562 = vmatpush1.msra.mxu0 0.0
        %3563 = vmatprep.mubr.f32.mxu0 0.0
        %3564 = vmatmul.mubr.f32.gmra.mrb[0].mxu0 %v3476
        %v3565 = vpop.f32.mrb[0].mxu0
        %v3566 = vadd.f32 0.0, %v3565
        %v3567 = vpop.f32.mrb[0].mxu0
        %3568 = vmatprep.mubr.f32.mxu0 0.0
        %3569 = vmatmul.mubr.f32.gmra.mrb[0].mxu0 %v3479
        %v3570 = vpop.f32.mrb[0].mxu0
        %v3571 = vadd.f32 0.0, %v3570
        %v3572 = vpop.f32.mrb[0].mxu0
        %3573 = vmatprep.mubr.f32.mxu0 0.0
        %3574 = vmatmul.mubr.f32.gmra.mrb[0].mxu0 %v3482
        %v3575 = vpop.f32.mrb[0].mxu0
        %v3576 = vadd.f32 0.0, %v3575
        %v3577 = vpop.f32.mrb[0].mxu0
        %3578 = vmatprep.mubr.f32.mxu0 0.0
        %3579 = vmatmul.mubr.f32.gmra.mrb[0].mxu0 %v3485
        %v3580 = vpop.f32.mrb[0].mxu0
        %v3581 = vadd.f32 0.0, %v3580
        %v3582 = vpop.f32.mrb[0].mxu0
        %3583 = vmatprep.mubr.f32.mxu0 0.0
        %3584 = vmatmul.mubr.f32.gmra.mrb[0].mxu0 %v3488
        %v3585 = vpop.f32.mrb[0].mxu0
        %v3586 = vadd.f32 0.0, %v3585
        %v3587 = vpop.f32.mrb[0].mxu0
        %3588 = vmatprep.mubr.f32.mxu0 0.0
        %3589 = vmatmul.mubr.f32.gmra.mrb[0].mxu0 %v3491
        %v3590 = vpop.f32.mrb[0].mxu0
        %v3591 = vadd.f32 0.0, %v3590
        %v3592 = vpop.f32.mrb[0].mxu0
        %3593 = vmatprep.mubr.f32.mxu0 0.0
        %3594 = vmatmul.mubr.f32.gmra.mrb[0].mxu0 %v3494
        %v3595 = vpop.f32.mrb[0].mxu0
        %v3596 = vadd.f32 0.0, %v3595
        %v3597 = vpop.f32.mrb[0].mxu0
        %3598 = vmatprep.mubr.f32.mxu0 0.0
        %3599 = vmatmul.mubr.f32.gmra.mrb[0].mxu0 %v3497
        %v3600 = vpop.f32.mrb[0].mxu0
        %v3601 = vadd.f32 0.0, %v3600
        %v3602 = vpop.f32.mrb[0].mxu0
        %3603 = vdwg.mxu0
        %v3604 = vadd.f32 %v3457, %v3566
        %v3605 = vadd.f32 %v3458, %v3571
        %v3606 = vadd.f32 %v3459, %v3576
        %v3607 = vadd.f32 %v3460, %v3581
        %v3608 = vadd.f32 %v3461, %v3586
        %v3609 = vadd.f32 %v3462, %v3591
        %v3610 = vadd.f32 %v3463, %v3596
        %v3611 = vadd.f32 %v3464, %v3601
        %v3612 = vld [vmem:[#allocation16] sm:$0x1]
        %v3614 = vlaneseq
        %v3615 = vshrl.u32 %v3614, 7
        %v3616 = vsub.s32 0, %v3615
        %v3617 = vrot.slane %v3612, %v3616
        %v3619 = vadd.f32 %v3604, %v3617
        %v3620 = vadd.f32 %v3605, %v3617
        %v3621 = vadd.f32 %v3606, %v3617
        %v3622 = vadd.f32 %v3607, %v3617
        %v3623 = vadd.f32 %v3608, %v3617
        %v3624 = vadd.f32 %v3609, %v3617
        %v3625 = vadd.f32 %v3610, %v3617
        %v3626 = vadd.f32 %v3611, %v3617
        %v3627 = vld [vmem:[#allocation21] sm:$0xff]
        %v3628 = vld [vmem:[#allocation18] sm:$0x1]
        %v3629 = vld [vmem:[#allocation19] sm:$0x1]
        %v3630 = vsel %vm562, %v3619, 0.0
        %v3631 = vsel %vm562, %v3620, 0.0
        %v3632 = vadd.f32 %v3630, %v3631
        %v3633 = vsel %vm562, %v3621, 0.0
        %v3634 = vadd.f32 %v3632, %v3633
        %v3635 = vsel %vm562, %v3622, 0.0
        %v3636 = vadd.f32 %v3634, %v3635
        %v3637 = vsel %vm562, %v3623, 0.0
        %v3638 = vadd.f32 %v3636, %v3637
        %v3639 = vsel %vm562, %v3624, 0.0
        %v3640 = vadd.f32 %v3638, %v3639
        %v3641 = vsel %vm562, %v3625, 0.0
        %v3642 = vadd.f32 %v3640, %v3641
        %v3643 = vsel %vm562, %v3626, 0.0
        %v3644 = vadd.f32 %v3642, %v3643
        %v3645 = vrot.slane %v3644, 4
        %v3646 = vadd.f32 %v3644, %v3645
        %v3647 = vrot.slane %v3646, 2
        %v3648 = vadd.f32 %v3646, %v3647
        %v3649 = vrot.slane %v3648, 1
        %v3650 = vadd.f32 %v3648, %v3649
        %v3651 = vmul.f32 %v3619, %v3619
        %v3652 = vmul.f32 %v3620, %v3620
        %v3653 = vmul.f32 %v3621, %v3621
        %v3654 = vmul.f32 %v3622, %v3622
        %v3655 = vmul.f32 %v3623, %v3623
        %v3656 = vmul.f32 %v3624, %v3624
        %v3657 = vmul.f32 %v3625, %v3625
        %v3658 = vmul.f32 %v3626, %v3626
        %v3659 = vsel %vm562, %v3651, 0.0
        %v3660 = vsel %vm562, %v3652, 0.0
        %v3661 = vadd.f32 %v3659, %v3660
        %v3662 = vsel %vm562, %v3653, 0.0
        %v3663 = vadd.f32 %v3661, %v3662
        %v3664 = vsel %vm562, %v3654, 0.0
        %v3665 = vadd.f32 %v3663, %v3664
        %v3666 = vsel %vm562, %v3655, 0.0
        %v3667 = vadd.f32 %v3665, %v3666
        %v3668 = vsel %vm562, %v3656, 0.0
        %v3669 = vadd.f32 %v3667, %v3668
        %v3670 = vsel %vm562, %v3657, 0.0
        %v3671 = vadd.f32 %v3669, %v3670
        %v3672 = vsel %vm562, %v3658, 0.0
        %v3673 = vadd.f32 %v3671, %v3672
        %v3674 = vrot.slane %v3673, 4
        %v3675 = vadd.f32 %v3673, %v3674
        %v3676 = vrot.slane %v3675, 2
        %v3677 = vadd.f32 %v3675, %v3676
        %v3678 = vrot.slane %v3677, 1
        %v3679 = vadd.f32 %v3677, %v3678
        %v3681 = vsel %vm562, %v3650, 0
        %3683 = vmatprep.subr.mxu0 0.0
        %3684 = vmatpush1.msra.mxu0 %v3627
        %3685 = vmatprep.subr.mxu0 0.0
        %3686 = vmatpush1.msra.mxu0 0.0
        %3687 = vmatprep.subr.mxu0 0.0
        %3688 = vmatpush1.msra.mxu0 0.0
        %3689 = vmatprep.subr.mxu0 0.0
        %3690 = vmatpush1.msra.mxu0 0.0
        %3691 = vmatprep.subr.mxu0 0.0
        %3692 = vmatpush1.msra.mxu0 0.0
        %3693 = vmatprep.subr.mxu0 0.0
        %3694 = vmatpush1.msra.mxu0 0.0
        %3695 = vmatprep.subr.mxu0 0.0
        %3696 = vmatpush1.msra.mxu0 0.0
        %3697 = vmatprep.subr.mxu0 0.0
        %3698 = vmatpush1.msra.mxu0 0.0
        %3699 = vmatprep.subr.mxu0 0.0
        %3700 = vmatpush1.msra.mxu0 0.0
        %3701 = vmatprep.subr.mxu0 0.0
        %3702 = vmatpush1.msra.mxu0 0.0
        %3703 = vmatprep.subr.mxu0 0.0
        %3704 = vmatpush1.msra.mxu0 0.0
        %3705 = vmatprep.subr.mxu0 0.0
        %3706 = vmatpush1.msra.mxu0 0.0
        %3707 = vmatprep.subr.mxu0 0.0
        %3708 = vmatpush1.msra.mxu0 0.0
        %3709 = vmatprep.subr.mxu0 0.0
        %3710 = vmatpush1.msra.mxu0 0.0
        %3711 = vmatprep.subr.mxu0 0.0
        %3712 = vmatpush1.msra.mxu0 0.0
        %3713 = vmatprep.subr.mxu0 0.0
        %3714 = vmatpush1.msra.mxu0 0.0
        %3715 = vmatprep.subr.mxu0 0.0
        %3716 = vmatpush1.msra.mxu0 0.0
        %3717 = vmatprep.subr.mxu0 0.0
        %3718 = vmatpush1.msra.mxu0 0.0
        %3719 = vmatprep.subr.mxu0 0.0
        %3720 = vmatpush1.msra.mxu0 0.0
        %3721 = vmatprep.subr.mxu0 0.0
        %3722 = vmatpush1.msra.mxu0 0.0
        %3723 = vmatprep.subr.mxu0 0.0
        %3724 = vmatpush1.msra.mxu0 0.0
        %3725 = vmatprep.subr.mxu0 0.0
        %3726 = vmatpush1.msra.mxu0 0.0
        %3727 = vmatprep.subr.mxu0 0.0
        %3728 = vmatpush1.msra.mxu0 0.0
        %3729 = vmatprep.subr.mxu0 0.0
        %3730 = vmatpush1.msra.mxu0 0.0
        %3731 = vmatprep.subr.mxu0 0.0
        %3732 = vmatpush1.msra.mxu0 0.0
        %3733 = vmatprep.subr.mxu0 0.0
        %3734 = vmatpush1.msra.mxu0 0.0
        %3735 = vmatprep.subr.mxu0 0.0
        %3736 = vmatpush1.msra.mxu0 0.0
        %3737 = vmatprep.subr.mxu0 0.0
        %3738 = vmatpush1.msra.mxu0 0.0
        %3739 = vmatprep.subr.mxu0 0.0
        %3740 = vmatpush1.msra.mxu0 0.0
        %3741 = vmatprep.subr.mxu0 0.0
        %3742 = vmatpush1.msra.mxu0 0.0
        %3743 = vmatprep.subr.mxu0 0.0
        %3744 = vmatpush1.msra.mxu0 0.0
        %3745 = vmatprep.subr.mxu0 0.0
        %3746 = vmatpush1.msra.mxu0 0.0
        %3747 = vmatprep.mubr.f32.mxu0 0.0
        %3748 = vmatmul.mubr.f32.gmra.mrb[0].mxu0 %v3681
        %v3749 = vpop.f32.mrb[0].mxu0
        %v3750 = vadd.f32 0.0, %v3749
        %v3751 = vpop.f32.mrb[0].mxu0
        %3752 = vdwg.mxu0
        %v3754 = vsel %vm562, %v3679, 0
        %3756 = vmatprep.subr.mxu0 0.0
        %3757 = vmatpush1.msra.mxu0 %v3627
        %3758 = vmatprep.subr.mxu0 0.0
        %3759 = vmatpush1.msra.mxu0 0.0
        %3760 = vmatprep.subr.mxu0 0.0
        %3761 = vmatpush1.msra.mxu0 0.0
        %3762 = vmatprep.subr.mxu0 0.0
        %3763 = vmatpush1.msra.mxu0 0.0
        %3764 = vmatprep.subr.mxu0 0.0
        %3765 = vmatpush1.msra.mxu0 0.0
        %3766 = vmatprep.subr.mxu0 0.0
        %3767 = vmatpush1.msra.mxu0 0.0
        %3768 = vmatprep.subr.mxu0 0.0
        %3769 = vmatpush1.msra.mxu0 0.0
        %3770 = vmatprep.subr.mxu0 0.0
        %3771 = vmatpush1.msra.mxu0 0.0
        %3772 = vmatprep.subr.mxu0 0.0
        %3773 = vmatpush1.msra.mxu0 0.0
        %3774 = vmatprep.subr.mxu0 0.0
        %3775 = vmatpush1.msra.mxu0 0.0
        %3776 = vmatprep.subr.mxu0 0.0
        %3777 = vmatpush1.msra.mxu0 0.0
        %3778 = vmatprep.subr.mxu0 0.0
        %3779 = vmatpush1.msra.mxu0 0.0
        %3780 = vmatprep.subr.mxu0 0.0
        %3781 = vmatpush1.msra.mxu0 0.0
        %3782 = vmatprep.subr.mxu0 0.0
        %3783 = vmatpush1.msra.mxu0 0.0
        %3784 = vmatprep.subr.mxu0 0.0
        %3785 = vmatpush1.msra.mxu0 0.0
        %3786 = vmatprep.subr.mxu0 0.0
        %3787 = vmatpush1.msra.mxu0 0.0
        %3788 = vmatprep.subr.mxu0 0.0
        %3789 = vmatpush1.msra.mxu0 0.0
        %3790 = vmatprep.subr.mxu0 0.0
        %3791 = vmatpush1.msra.mxu0 0.0
        %3792 = vmatprep.subr.mxu0 0.0
        %3793 = vmatpush1.msra.mxu0 0.0
        %3794 = vmatprep.subr.mxu0 0.0
        %3795 = vmatpush1.msra.mxu0 0.0
        %3796 = vmatprep.subr.mxu0 0.0
        %3797 = vmatpush1.msra.mxu0 0.0
        %3798 = vmatprep.subr.mxu0 0.0
        %3799 = vmatpush1.msra.mxu0 0.0
        %3800 = vmatprep.subr.mxu0 0.0
        %3801 = vmatpush1.msra.mxu0 0.0
        %3802 = vmatprep.subr.mxu0 0.0
        %3803 = vmatpush1.msra.mxu0 0.0
        %3804 = vmatprep.subr.mxu0 0.0
        %3805 = vmatpush1.msra.mxu0 0.0
        %3806 = vmatprep.subr.mxu0 0.0
        %3807 = vmatpush1.msra.mxu0 0.0
        %3808 = vmatprep.subr.mxu0 0.0
        %3809 = vmatpush1.msra.mxu0 0.0
        %3810 = vmatprep.subr.mxu0 0.0
        %3811 = vmatpush1.msra.mxu0 0.0
        %3812 = vmatprep.subr.mxu0 0.0
        %3813 = vmatpush1.msra.mxu0 0.0
        %3814 = vmatprep.subr.mxu0 0.0
        %3815 = vmatpush1.msra.mxu0 0.0
        %3816 = vmatprep.subr.mxu0 0.0
        %3817 = vmatpush1.msra.mxu0 0.0
        %3818 = vmatprep.subr.mxu0 0.0
        %3819 = vmatpush1.msra.mxu0 0.0
        %3820 = vmatprep.mubr.f32.mxu0 0.0
        %3821 = vmatmul.mubr.f32.gmra.mrb[0].mxu0 %v3754
        %v3822 = vpop.f32.mrb[0].mxu0
        %v3823 = vadd.f32 0.0, %v3822
        %v3824 = vpop.f32.mrb[0].mxu0
        %3825 = vdwg.mxu0
        %v3826 = vmul.f32 %v3750, 0.0078125
        %v3827 = vmul.f32 %v3823, 0.0078125
        %v3828 = vmul.f32 %v3826, %v3826
        %v3829 = vsub.f32 %v3827, %v3828
        %v3830 = vmax.f32 %v3829, 0.0
        %v3831 = vadd.f32 %v3830, 1e-05
        %v3832 = vrsqrt.pop %v3831
        %v3833 = vmul.f32 %v3832, %v3628
        %v3834 = vmul.f32 %v3826, %v3833
        %v3835 = vsub.f32 %v3629, %v3834
        %v3836 = vlaneseq
        %v3837 = vshrl.u32 %v3836, 7
        %v3838 = vsub.s32 0, %v3837
        %v3839 = vrot.slane %v3833, %v3838
        %v3840 = vmul.f32 %v3619, %v3839
        %v3841 = vmul.f32 %v3620, %v3839
        %v3842 = vmul.f32 %v3621, %v3839
        %v3843 = vmul.f32 %v3622, %v3839
        %v3844 = vmul.f32 %v3623, %v3839
        %v3845 = vmul.f32 %v3624, %v3839
        %v3846 = vmul.f32 %v3625, %v3839
        %v3847 = vmul.f32 %v3626, %v3839
        %v3849 = vlaneseq
        %v3850 = vshrl.u32 %v3849, 7
        %v3851 = vsub.s32 0, %v3850
        %v3852 = vrot.slane %v3835, %v3851
        %v3854 = vadd.f32 %v3840, %v3852
        %v3855 = vadd.f32 %v3841, %v3852
        %v3856 = vadd.f32 %v3842, %v3852
        %v3857 = vadd.f32 %v3843, %v3852
        %v3858 = vadd.f32 %v3844, %v3852
        %v3859 = vadd.f32 %v3845, %v3852
        %v3860 = vadd.f32 %v3846, %v3852
        %v3861 = vadd.f32 %v3847, %v3852
        %v3862 = vmax.f32 %v3854, 0.0
        %v3863 = vmax.f32 %v3855, 0.0
        %v3864 = vmax.f32 %v3856, 0.0
        %v3865 = vmax.f32 %v3857, 0.0
        %v3866 = vmax.f32 %v3858, 0.0
        %v3867 = vmax.f32 %v3859, 0.0
        %v3868 = vmax.f32 %v3860, 0.0
        %v3869 = vmax.f32 %v3861, 0.0
        %3870 = vst.msk [vmem:[%s533] sm:$0xff] %vm562, %v3862
        %3871 = vst.msk [vmem:[%s533 + $0x8] sm:$0xff] %vm562, %v3863
        %3872 = vst.msk [vmem:[%s533 + $0x10] sm:$0xff] %vm562, %v3864
        %3873 = vst.msk [vmem:[%s533 + $0x18] sm:$0xff] %vm562, %v3865
        %3874 = vst.msk [vmem:[%s533 + $0x20] sm:$0xff] %vm562, %v3866
        %3875 = vst.msk [vmem:[%s533 + $0x28] sm:$0xff] %vm562, %v3867
        %3876 = vst.msk [vmem:[%s533 + $0x30] sm:$0xff] %vm562, %v3868
        %3877 = vst.msk [vmem:[%s533 + $0x38] sm:$0xff] %vm562, %v3869
        %s3878 = sand.u32 %s277, 1
        %s3879 = scalar_lea.sflag [#allocation6], %s3878
        %s3880 = sand.u32 %s277, 1
        %s3881 = smul.addr %s3880, 64
        %s3882 = scalar_lea.vmem [#allocation22], %s3881
        // Predicated region
        $region109: #{tpu_custom_call.1} parent=63 // pred_check
          %p3883 = pneg %p287
        $region110: #{tpu_custom_call.1} parent=63 // pred_check_branch
          %3885 = sbr.rel (%p3883) target = $region112
        $region111: #{tpu_custom_call.1} parent=63 // pred_region
          %s3887 = ssub.s32 1024, 1024
          %3888 = vsyncadd %s3879, %s3887
          %s3889 = smul.addr %s33, 8
          %s3890 = smul.addr %s3889, 128
          %s3891 = scalar_lea.hbm %s11, %s3890
          %s3892 = sshll.u32 %s3882, 4
          %s3893 = int_to_ptr.vmem [resolvable:$true] %s3892
          %3898 = dma.vmem_to_hbm [thread:$0]  %s3893, 1024, %s3891, %s3879, 128, 128, 8
        $region112: #{tpu_custom_call.1} parent=63 // pred_fallthru
          _
      $region64: #{tpu_custom_call.1} parent=5 // pred_fallthru
        _
      %p3899 = scmp.le.s32.totalorder 2, %s28
      // Predicated region
      $region113: #{tpu_custom_call.1} parent=5 // pred_check
        %p3900 = pneg %p3899
      $region114: #{tpu_custom_call.1} parent=5 // pred_check_branch
        %3902 = sbr.rel (%p3900) target = $region116
      $region115: #{tpu_custom_call.1} parent=5 // pred_region
        %s3903 = ssub.s32 %s28, 2
        // Predicated region
        $region117: #{tpu_custom_call.1} parent=115 // pred_check
          %p3904 = pneg %p293
        $region118: #{tpu_custom_call.1} parent=115 // pred_check_branch
          %3906 = sbr.rel (%p3904) target = $region120
        $region119: #{tpu_custom_call.1} parent=115 // pred_region
          %s3907 = sand.u32 %s278, 1
          %s3908 = scalar_lea.sflag [#allocation6], %s3907
          %s3909 = sand.u32 %s278, 1
          %s3910 = smul.addr %s3909, 64
          %s3911 = scalar_lea.vmem [#allocation22], %s3910
          %3912 = dma.done %s3908, 1024
        $region120: #{tpu_custom_call.1} parent=115 // pred_fallthru
          _
      $region116: #{tpu_custom_call.1} parent=5 // pred_fallthru
        _
    $region6: #{tpu_custom_call.1} parent=1 // loop_footer
      %s32 = sadd.s32 1, %s28
    $region7: #{tpu_custom_call.1} parent=1 // loop_footer_branch
      %27 = sbr.rel target = $region3
    $region8: #{tpu_custom_call.1} parent=1 // loop_exit
      _
    %3913 = vsyncpa [#allocation5], 1
    %s3914 = scalar_lea.sflag [#allocation5], 1
    %3915 = vsyncpa %s3914, 1
    %3916 = vsyncpa [#allocation8], 1
    %3917 = vsyncpa [#allocation11], 1
    %3918 = vsyncpa [#allocation14], 1
    %3919 = vsyncpa [#allocation17], 1
    %3920 = vsyncpa [#allocation20], 1
    %3921 = vsyncpa [#allocation6], 1
    %s3922 = scalar_lea.sflag [#allocation6], 1
    %3923 = vsyncpa %s3922, 1

</llo_original>
